<compile_context>
chip_gen: v7x
topology: tpu7x:2x2x1
jax: 0.10.0
libtpu: 0.0.40
codegen_flags: <defaults>
</compile_context>

<pallas_src>
import functools

import jax
import jax.numpy as jnp
from jax import lax
from jax.experimental import pallas as pl
from jax.experimental.pallas import tpu as pltpu

LN_EPS = 1e-5     # torch.nn.LayerNorm default eps
COS_EPS = 1e-8    # F.cosine_similarity default eps
LANE = 128


def _round_up(v, m):
    return ((v + m - 1) // m) * m


def _pad_to(a, shape):
    pads = [(0, t - s) for s, t in zip(a.shape, shape)]
    return jnp.pad(a, pads)


# ----------------------------------------------------------------------------
# Fused kernel: the entire EGCNGuard forward (eval path).
# ----------------------------------------------------------------------------
def _egcnguard_kernel(x_ref, adj_ref, lnw_ref, lnb_ref,
                      w0_ref, b0_ref, w1_ref, b1_ref, o_ref,
                      *, n_valid, nfeat, nhid, threshold):
    n_pad = adj_ref.shape[0]
    f_pad = x_ref.shape[1]
    h_pad = w0_ref.shape[1]

    # Index grids / masks hoisted once; reused by all three att_coef calls.
    row_ids = lax.broadcasted_iota(jnp.int32, (n_pad, n_pad), 0)
    col_ids = lax.broadcasted_iota(jnp.int32, (n_pad, n_pad), 1)
    diag = row_ids == col_ids
    # Self-loops are added only for the real (non-padding) nodes; padding
    # rows/cols stay exactly zero so they never contaminate valid rows.
    diag_valid = jnp.logical_and(diag, row_ids < n_valid)

    # ---- LayerNorm over the first `nfeat` valid feature columns ------------
    x = x_ref[...].astype(jnp.float32)
    fmask = lax.broadcasted_iota(jnp.int32, (n_pad, f_pad), 1) < nfeat
    xm = jnp.where(fmask, x, 0.0)
    mean = jnp.sum(xm, axis=-1, keepdims=True) / float(nfeat)
    xc = jnp.where(fmask, x - mean, 0.0)
    var = jnp.sum(xc * xc, axis=-1, keepdims=True) / float(nfeat)  # biased var
    inv = lax.rsqrt(var + LN_EPS)
    y = xc * inv * lnw_ref[...] + lnb_ref[...]        # lnw/lnb zero-padded
    rmask = lax.broadcasted_iota(jnp.int32, (n_pad, 1), 0) < n_valid
    y = jnp.where(rmask, y, 0.0)                      # zero padded rows

    # Weights / biases loaded once; they stay in VMEM for the whole forward.
    w0 = w0_ref[...].astype(jnp.float32)
    b0 = b0_ref[...].astype(jnp.float32)
    w1 = w1_ref[...].astype(jnp.float32)
    b1 = b1_ref[...].astype(jnp.float32)

    # ---- att_coef: dense re-implementation of EGCNGuard.att_coef -----------
    # Implements the clean `has_self_loop == 0` branch (input adjacency has no
    # self-loops, as for an undirected simple graph).
    # TODO(synk): the reference's partial-self-loop branch assigns
    # sims[row==col] = deg_inv_sqrt_new with an edge-order/node-order mismatch
    # (a bug in the original); that scrambled ordering has no dense equivalent
    # and is not reproduced here.
    def att_coef(feat, a_prev):
        nrm = jnp.sqrt(jnp.sum(feat * feat, axis=-1, keepdims=True))
        xn = feat / jnp.maximum(nrm, COS_EPS)
        # Gram matrix of the normalized features == pairwise cosine sims.
        sims = lax.dot_general(xn, xn, (((1,), (1,)), ((), ())),
                               preferred_element_type=jnp.float32)  # Xn @ Xn.T
        edge = a_prev > 0.0
        # mask = (sims >= threshold) | (row == col), applied to existing edges
        kept = jnp.logical_and(edge, jnp.logical_or(diag, sims >= threshold))
        kept_off = jnp.logical_and(kept, jnp.logical_not(diag))
        sims_off = jnp.where(kept_off, sims, 0.0)     # self-loop sims -> 0

        # deg_inv_sqrt arranged along rows (N,1) and along cols (1,N).
        # The reference indexes the SAME row-degree vector by `row` and `col`;
        # for a symmetric adjacency (undirected graph, preserved across
        # att_coef iterations) the column-sum equals the transposed row-sum,
        # which avoids an explicit (N,1)->(1,N) transpose / K=1 MXU broadcast.
        # TODO(synk): a directed (asymmetric) input adjacency would need the
        # transposed row-degree here instead of the column-sum.
        deg_r = jnp.sum(sims_off, axis=1, keepdims=True)
        dis_r = jnp.where(deg_r > 0.0, lax.rsqrt(deg_r), 0.0)
        deg_c = jnp.sum(sims_off, axis=0, keepdims=True)
        dis_c = jnp.where(deg_c > 0.0, lax.rsqrt(deg_c), 0.0)
        sims_norm = dis_r * sims_off * dis_c

        # deg_new = scatter_add(ones, col) + 1 ; self-loop value = 1/deg_new
        deg_new = jnp.sum(kept.astype(jnp.float32), axis=0, keepdims=True) + 1.0
        deg_inv_new = 1.0 / deg_new

        # Single (N,N) exponential: diag gets exp(deg_inv_new), kept edges get
        # exp(sims_norm), everything else stays exactly 0.
        e = jnp.exp(jnp.where(diag_valid, deg_inv_new, sims_norm))
        return jnp.where(jnp.logical_or(kept_off, diag_valid), e, 0.0)

    # ---- GCNConv (normalize=True, add_self_loops=False, bias=True) ---------
    #   h = x @ W ; A_n = D^-1/2 A D^-1/2 (row degrees) ; out = A_n @ h + b
    # computed as dinv * (A @ (dinv * h)) to avoid any transpose.
    def gcn_conv(a, feat, w, b, apply_relu):
        h = jnp.dot(feat, w, preferred_element_type=jnp.float32)
        deg = jnp.sum(a, axis=1, keepdims=True)
        dinv = jnp.where(deg > 0.0, lax.rsqrt(deg), 0.0)
        agg = jnp.dot(a, h * dinv, preferred_element_type=jnp.float32)
        out = agg * dinv + b
        if apply_relu:
            out = jnp.maximum(out, 0.0)
        return out

    a = adj_ref[...].astype(jnp.float32)

    # i = 0 : convs[0]   (dropout is a no-op in eval mode)
    a = att_coef(y, a)
    y = gcn_conv(a, y, w0, b0, True)
    # i = 1 : convs[1]
    a = att_coef(y, a)
    y = gcn_conv(a, y, w1, b1, True)
    # final step: `conv` is still convs[1] (reference-code behavior)
    a = att_coef(y, a)
    y = gcn_conv(a, y, w1, b1, False)

    # ---- log_softmax over the first `nhid` valid columns --------------------
    cmask = lax.broadcasted_iota(jnp.int32, (n_pad, h_pad), 1) < nhid
    m = jnp.max(jnp.where(cmask, y, -jnp.inf), axis=-1, keepdims=True)
    s = y - m
    lse = jnp.log(jnp.sum(jnp.where(cmask, jnp.exp(s), 0.0),
                          axis=-1, keepdims=True))
    o_ref[...] = jnp.where(cmask, s - lse, 0.0).astype(o_ref.dtype)


# ----------------------------------------------------------------------------
# Wrapper: pad to lane-dense shapes, run one fused pallas_call, slice back.
# ----------------------------------------------------------------------------
def egcnguard_forward(x, adj, params, threshold=0.1):
    n, nfeat = x.shape
    nhid = params["W0"].shape[1]
    # params["W2"], params["b2"] exist (convs[-1]) but the reference forward
    # never uses them (it reuses the loop variable `conv` == convs[-2]).

    n_pad = _round_up(n, LANE)
    f_pad = _round_up(nfeat, LANE)
    h_pad = _round_up(nhid, LANE)

    xp = _pad_to(x.astype(jnp.float32), (n_pad, f_pad))
    ap = _pad_to(adj.astype(jnp.float32), (n_pad, n_pad))
    lnw = _pad_to(params["ln_w"].astype(jnp.float32), (1, f_pad))
    lnb = _pad_to(params["ln_b"].astype(jnp.float32), (1, f_pad))
    w0 = _pad_to(params["W0"].astype(jnp.float32), (f_pad, h_pad))
    b0 = _pad_to(params["b0"].astype(jnp.float32), (1, h_pad))
    w1 = _pad_to(params["W1"].astype(jnp.float32), (h_pad, h_pad))
    b1 = _pad_to(params["b1"].astype(jnp.float32), (1, h_pad))

    vmem = pl.BlockSpec(memory_space=pltpu.MemorySpace.VMEM)
    out_pad = pl.pallas_call(
        functools.partial(_egcnguard_kernel,
                          n_valid=int(n), nfeat=int(nfeat), nhid=int(nhid),
                          threshold=float(threshold)),
        out_shape=jax.ShapeDtypeStruct((n_pad, h_pad), jnp.float32),
        in_specs=[vmem] * 8,
        out_specs=vmem,
        compiler_params=pltpu.CompilerParams(
            vmem_limit_bytes=32 * 1024 * 1024),
    )(xp, ap, lnw, lnb, w0, b0, w1, b1)

    return out_pad[:n, :nhid]


# ----------------------------------------------------------------------------
if __name__ == "__main__":
    N, nfeat, nhid, nclass = 64, 32, 32, 4
    threshold = 0.1

    key = jax.random.PRNGKey(0)
    kx, ka, k0, k1, k2 = jax.random.split(key, 5)

    # Node features.
    x = jax.random.normal(kx, (N, nfeat), dtype=jnp.float32)

    # Symmetric dense adjacency, no self-loops (has_self_loop == 0 branch).
    r = jax.random.uniform(ka, (N, N))
    upper = jnp.triu(r < 0.15, k=1)
    adj = jnp.logical_or(upper, upper.T).astype(jnp.float32)

    def glorot(k, fi, fo):
        lim = (6.0 / (fi + fo)) ** 0.5
        return jax.random.uniform(k, (fi, fo), jnp.float32, -lim, lim)

    params = {
        # LayerNorm(nfeat): default init (ones / zeros), stored as (1, F).
        "ln_w": jnp.ones((1, nfeat), jnp.float32),
        "ln_b": jnp.zeros((1, nfeat), jnp.float32),
        # GCNConv weights (glorot) and biases (zeros), as in reset_parameters.
        "W0": glorot(k0, nfeat, nhid), "b0": jnp.zeros((1, nhid), jnp.float32),
        "W1": glorot(k1, nhid, nhid),  "b1": jnp.zeros((1, nhid), jnp.float32),
        "W2": glorot(k2, nhid, nclass), "b2": jnp.zeros((1, nclass), jnp.float32),
    }

    out = egcnguard_forward(x, adj, params, threshold=threshold)
    out = jax.block_until_ready(out)

    assert out.shape == (N, nhid)                    # nhid, due to reference-code bug
    assert bool(jnp.all(jnp.isfinite(out)))
    # rows of log_softmax must sum (in prob space) to 1
    assert bool(jnp.allclose(jnp.sum(jnp.exp(out), axis=-1), 1.0, atol=1e-4))

    print("KERNEL_OK")
</pallas_src>

<mosaic_0001>
module attributes {stable_mosaic.version = 11 : i64} {
  func.func @_egcnguard_kernel(%arg0: memref<128x128xf32, #tpu.memory_space<vmem>>, %arg1: memref<128x128xf32, #tpu.memory_space<vmem>>, %arg2: memref<1x128xf32, #tpu.memory_space<vmem>>, %arg3: memref<1x128xf32, #tpu.memory_space<vmem>>, %arg4: memref<128x128xf32, #tpu.memory_space<vmem>>, %arg5: memref<1x128xf32, #tpu.memory_space<vmem>>, %arg6: memref<128x128xf32, #tpu.memory_space<vmem>>, %arg7: memref<1x128xf32, #tpu.memory_space<vmem>>, %arg8: memref<128x128xf32, #tpu.memory_space<vmem>>) attributes {dimension_semantics = [], scalar_prefetch = 0 : i64, scratch_operands = 0 : i64, tpu.core_type = #tpu.core_type<tc>} {
    %0 = tpu.iota {dimensions = array<i32: 0>} : vector<128x128xi32>
    %1 = tpu.iota {dimensions = array<i32: 1>} : vector<128x128xi32>
    %2 = arith.cmpi eq, %0, %1 : vector<128x128xi32>
    %c64_i32 = arith.constant 64 : i32
    %3 = vector.broadcast %c64_i32 : i32 to vector<128x128xi32>
    %4 = arith.cmpi slt, %0, %3 : vector<128x128xi32>
    %5 = arith.andi %2, %4 : vector<128x128xi1>
    %c0 = arith.constant 0 : index
    %c0_0 = arith.constant 0 : index
    %6 = vector.load %arg0[%c0, %c0_0] : memref<128x128xf32, #tpu.memory_space<vmem>>, vector<128x128xf32>
    %7 = tpu.iota {dimensions = array<i32: 1>} : vector<128x128xi32>
    %c32_i32 = arith.constant 32 : i32
    %8 = vector.broadcast %c32_i32 : i32 to vector<128x128xi32>
    %9 = arith.cmpi slt, %7, %8 : vector<128x128xi32>
    %cst = arith.constant 0.000000e+00 : f32
    %10 = vector.broadcast %cst : f32 to vector<128x128xf32>
    %11 = arith.select %9, %6, %10 : vector<128x128xi1>, vector<128x128xf32>
    %cst_1 = arith.constant dense<0.000000e+00> : vector<128xf32>
    %12 = vector.multi_reduction <add>, %11, %cst_1 [1] : vector<128x128xf32> to vector<128xf32>
    %13 = vector.shape_cast %12 : vector<128xf32> to vector<128x1xf32>
    %cst_2 = arith.constant 3.200000e+01 : f32
    %14 = vector.broadcast %cst_2 : f32 to vector<128x1xf32>
    %15 = arith.divf %13, %14 : vector<128x1xf32>
    %16 = vector.broadcast %15 : vector<128x1xf32> to vector<128x128xf32>
    %17 = arith.subf %6, %16 : vector<128x128xf32>
    %cst_3 = arith.constant 0.000000e+00 : f32
    %18 = vector.broadcast %cst_3 : f32 to vector<128x128xf32>
    %19 = arith.select %9, %17, %18 : vector<128x128xi1>, vector<128x128xf32>
    %20 = arith.mulf %19, %19 : vector<128x128xf32>
    %cst_4 = arith.constant dense<0.000000e+00> : vector<128xf32>
    %21 = vector.multi_reduction <add>, %20, %cst_4 [1] : vector<128x128xf32> to vector<128xf32>
    %22 = vector.shape_cast %21 : vector<128xf32> to vector<128x1xf32>
    %cst_5 = arith.constant 3.200000e+01 : f32
    %23 = vector.broadcast %cst_5 : f32 to vector<128x1xf32>
    %24 = arith.divf %22, %23 : vector<128x1xf32>
    %cst_6 = arith.constant 9.99999974E-6 : f32
    %25 = vector.broadcast %cst_6 : f32 to vector<128x1xf32>
    %26 = arith.addf %24, %25 : vector<128x1xf32>
    %27 = math.rsqrt %26 : vector<128x1xf32>
    %28 = vector.broadcast %27 : vector<128x1xf32> to vector<128x128xf32>
    %29 = arith.mulf %19, %28 : vector<128x128xf32>
    %c0_7 = arith.constant 0 : index
    %c0_8 = arith.constant 0 : index
    %30 = vector.load %arg2[%c0_7, %c0_8] : memref<1x128xf32, #tpu.memory_space<vmem>>, vector<1x128xf32>
    %31 = vector.broadcast %30 : vector<1x128xf32> to vector<128x128xf32>
    %32 = arith.mulf %29, %31 : vector<128x128xf32>
    %c0_9 = arith.constant 0 : index
    %c0_10 = arith.constant 0 : index
    %33 = vector.load %arg3[%c0_9, %c0_10] : memref<1x128xf32, #tpu.memory_space<vmem>>, vector<1x128xf32>
    %34 = vector.broadcast %33 : vector<1x128xf32> to vector<128x128xf32>
    %35 = arith.addf %32, %34 : vector<128x128xf32>
    %36 = tpu.iota {dimensions = array<i32: 0>} : vector<128x1xi32>
    %c64_i32_11 = arith.constant 64 : i32
    %37 = vector.broadcast %c64_i32_11 : i32 to vector<128x1xi32>
    %38 = arith.cmpi slt, %36, %37 : vector<128x1xi32>
    %cst_12 = arith.constant 0.000000e+00 : f32
    %39 = vector.shape_cast %38 : vector<128x1xi1> to vector<128x1xi1>
    %40 = vector.broadcast %39 : vector<128x1xi1> to vector<128x128xi1>
    %41 = vector.broadcast %cst_12 : f32 to vector<128x128xf32>
    %42 = arith.select %40, %35, %41 : vector<128x128xi1>, vector<128x128xf32>
    %c0_13 = arith.constant 0 : index
    %c0_14 = arith.constant 0 : index
    %43 = vector.load %arg4[%c0_13, %c0_14] : memref<128x128xf32, #tpu.memory_space<vmem>>, vector<128x128xf32>
    %c0_15 = arith.constant 0 : index
    %c0_16 = arith.constant 0 : index
    %44 = vector.load %arg5[%c0_15, %c0_16] : memref<1x128xf32, #tpu.memory_space<vmem>>, vector<1x128xf32>
    %c0_17 = arith.constant 0 : index
    %c0_18 = arith.constant 0 : index
    %45 = vector.load %arg6[%c0_17, %c0_18] : memref<128x128xf32, #tpu.memory_space<vmem>>, vector<128x128xf32>
    %c0_19 = arith.constant 0 : index
    %c0_20 = arith.constant 0 : index
    %46 = vector.load %arg7[%c0_19, %c0_20] : memref<1x128xf32, #tpu.memory_space<vmem>>, vector<1x128xf32>
    %c0_21 = arith.constant 0 : index
    %c0_22 = arith.constant 0 : index
    %47 = vector.load %arg1[%c0_21, %c0_22] : memref<128x128xf32, #tpu.memory_space<vmem>>, vector<128x128xf32>
    %48 = arith.mulf %42, %42 : vector<128x128xf32>
    %cst_23 = arith.constant dense<0.000000e+00> : vector<128xf32>
    %49 = vector.multi_reduction <add>, %48, %cst_23 [1] : vector<128x128xf32> to vector<128xf32>
    %50 = vector.shape_cast %49 : vector<128xf32> to vector<128x1xf32>
    %51 = math.sqrt %50 : vector<128x1xf32>
    %cst_24 = arith.constant 9.99999993E-9 : f32
    %52 = vector.broadcast %cst_24 : f32 to vector<128x1xf32>
    %53 = arith.maximumf %51, %52 : vector<128x1xf32>
    %54 = vector.broadcast %53 : vector<128x1xf32> to vector<128x128xf32>
    %55 = arith.divf %42, %54 : vector<128x128xf32>
    %cst_25 = arith.constant dense<0.000000e+00> : vector<128x128xf32>
    %56 = tpu.matmul %55, %55, %cst_25 {dimension_numbers = #tpu.dot_dimension_numbers<[1], [1], [0], [0], [0, 0, 1, 0], [], []>} : vector<128x128xf32>, vector<128x128xf32>, vector<128x128xf32> -> vector<128x128xf32>
    %cst_26 = arith.constant 0.000000e+00 : f32
    %57 = vector.broadcast %cst_26 : f32 to vector<128x128xf32>
    %58 = arith.cmpf ogt, %47, %57 : vector<128x128xf32>
    %cst_27 = arith.constant 1.000000e-01 : f32
    %59 = vector.broadcast %cst_27 : f32 to vector<128x128xf32>
    %60 = arith.cmpf oge, %56, %59 : vector<128x128xf32>
    %61 = arith.ori %2, %60 : vector<128x128xi1>
    %62 = arith.andi %58, %61 : vector<128x128xi1>
    %cst_28 = arith.constant dense<true> : vector<128x128xi1>
    %63 = arith.xori %2, %cst_28 : vector<128x128xi1>
    %64 = arith.andi %62, %63 : vector<128x128xi1>
    %cst_29 = arith.constant 0.000000e+00 : f32
    %65 = vector.broadcast %cst_29 : f32 to vector<128x128xf32>
    %66 = arith.select %64, %56, %65 : vector<128x128xi1>, vector<128x128xf32>
    %cst_30 = arith.constant dense<0.000000e+00> : vector<128xf32>
    %67 = vector.multi_reduction <add>, %66, %cst_30 [1] : vector<128x128xf32> to vector<128xf32>
    %68 = vector.shape_cast %67 : vector<128xf32> to vector<128x1xf32>
    %cst_31 = arith.constant 0.000000e+00 : f32
    %69 = vector.broadcast %cst_31 : f32 to vector<128x1xf32>
    %70 = arith.cmpf ogt, %68, %69 : vector<128x1xf32>
    %71 = math.rsqrt %68 : vector<128x1xf32>
    %cst_32 = arith.constant 0.000000e+00 : f32
    %72 = vector.broadcast %cst_32 : f32 to vector<128x1xf32>
    %73 = arith.select %70, %71, %72 : vector<128x1xi1>, vector<128x1xf32>
    %cst_33 = arith.constant dense<0.000000e+00> : vector<128xf32>
    %74 = vector.multi_reduction <add>, %66, %cst_33 [0] : vector<128x128xf32> to vector<128xf32>
    %75 = vector.shape_cast %74 : vector<128xf32> to vector<1x128xf32>
    %cst_34 = arith.constant 0.000000e+00 : f32
    %76 = vector.broadcast %cst_34 : f32 to vector<1x128xf32>
    %77 = arith.cmpf ogt, %75, %76 : vector<1x128xf32>
    %78 = math.rsqrt %75 : vector<1x128xf32>
    %cst_35 = arith.constant 0.000000e+00 : f32
    %79 = vector.broadcast %cst_35 : f32 to vector<1x128xf32>
    %80 = arith.select %77, %78, %79 : vector<1x128xi1>, vector<1x128xf32>
    %81 = vector.broadcast %73 : vector<128x1xf32> to vector<128x128xf32>
    %82 = arith.mulf %81, %66 : vector<128x128xf32>
    %83 = vector.broadcast %80 : vector<1x128xf32> to vector<128x128xf32>
    %84 = arith.mulf %82, %83 : vector<128x128xf32>
    %85 = arith.extui %62 : vector<128x128xi1> to vector<128x128xi32>
    %86 = arith.sitofp %85 : vector<128x128xi32> to vector<128x128xf32>
    %cst_36 = arith.constant dense<0.000000e+00> : vector<128xf32>
    %87 = vector.multi_reduction <add>, %86, %cst_36 [0] : vector<128x128xf32> to vector<128xf32>
    %88 = vector.shape_cast %87 : vector<128xf32> to vector<1x128xf32>
    %cst_37 = arith.constant 1.000000e+00 : f32
    %89 = vector.broadcast %cst_37 : f32 to vector<1x128xf32>
    %90 = arith.addf %88, %89 : vector<1x128xf32>
    %cst_38 = arith.constant 1.000000e+00 : f32
    %91 = vector.broadcast %cst_38 : f32 to vector<1x128xf32>
    %92 = arith.divf %91, %90 : vector<1x128xf32>
    %93 = vector.shape_cast %92 : vector<1x128xf32> to vector<1x128xf32>
    %94 = vector.broadcast %93 : vector<1x128xf32> to vector<128x128xf32>
    %95 = arith.select %5, %94, %84 : vector<128x128xi1>, vector<128x128xf32>
    %96 = math.exp %95 : vector<128x128xf32>
    %97 = arith.ori %64, %5 : vector<128x128xi1>
    %cst_39 = arith.constant 0.000000e+00 : f32
    %98 = vector.broadcast %cst_39 : f32 to vector<128x128xf32>
    %99 = arith.select %97, %96, %98 : vector<128x128xi1>, vector<128x128xf32>
    %cst_40 = arith.constant dense<0.000000e+00> : vector<128x128xf32>
    %100 = tpu.matmul %42, %43, %cst_40 {dimension_numbers = #tpu.dot_dimension_numbers<[1], [0], [0], [1], [0, 0, 1, 1], [], []>} : vector<128x128xf32>, vector<128x128xf32>, vector<128x128xf32> -> vector<128x128xf32>
    %cst_41 = arith.constant dense<0.000000e+00> : vector<128xf32>
    %101 = vector.multi_reduction <add>, %99, %cst_41 [1] : vector<128x128xf32> to vector<128xf32>
    %102 = vector.shape_cast %101 : vector<128xf32> to vector<128x1xf32>
    %cst_42 = arith.constant 0.000000e+00 : f32
    %103 = vector.broadcast %cst_42 : f32 to vector<128x1xf32>
    %104 = arith.cmpf ogt, %102, %103 : vector<128x1xf32>
    %105 = math.rsqrt %102 : vector<128x1xf32>
    %cst_43 = arith.constant 0.000000e+00 : f32
    %106 = vector.broadcast %cst_43 : f32 to vector<128x1xf32>
    %107 = arith.select %104, %105, %106 : vector<128x1xi1>, vector<128x1xf32>
    %108 = vector.broadcast %107 : vector<128x1xf32> to vector<128x128xf32>
    %109 = arith.mulf %100, %108 : vector<128x128xf32>
    %cst_44 = arith.constant dense<0.000000e+00> : vector<128x128xf32>
    %110 = tpu.matmul %99, %109, %cst_44 {dimension_numbers = #tpu.dot_dimension_numbers<[1], [0], [0], [1], [0, 0, 1, 1], [], []>} : vector<128x128xf32>, vector<128x128xf32>, vector<128x128xf32> -> vector<128x128xf32>
    %111 = vector.broadcast %107 : vector<128x1xf32> to vector<128x128xf32>
    %112 = arith.mulf %110, %111 : vector<128x128xf32>
    %113 = vector.broadcast %44 : vector<1x128xf32> to vector<128x128xf32>
    %114 = arith.addf %112, %113 : vector<128x128xf32>
    %cst_45 = arith.constant 0.000000e+00 : f32
    %115 = vector.broadcast %cst_45 : f32 to vector<128x128xf32>
    %116 = arith.maximumf %114, %115 : vector<128x128xf32>
    %117 = arith.mulf %116, %116 : vector<128x128xf32>
    %cst_46 = arith.constant dense<0.000000e+00> : vector<128xf32>
    %118 = vector.multi_reduction <add>, %117, %cst_46 [1] : vector<128x128xf32> to vector<128xf32>
    %119 = vector.shape_cast %118 : vector<128xf32> to vector<128x1xf32>
    %120 = math.sqrt %119 : vector<128x1xf32>
    %cst_47 = arith.constant 9.99999993E-9 : f32
    %121 = vector.broadcast %cst_47 : f32 to vector<128x1xf32>
    %122 = arith.maximumf %120, %121 : vector<128x1xf32>
    %123 = vector.broadcast %122 : vector<128x1xf32> to vector<128x128xf32>
    %124 = arith.divf %116, %123 : vector<128x128xf32>
    %cst_48 = arith.constant dense<0.000000e+00> : vector<128x128xf32>
    %125 = tpu.matmul %124, %124, %cst_48 {dimension_numbers = #tpu.dot_dimension_numbers<[1], [1], [0], [0], [0, 0, 1, 0], [], []>} : vector<128x128xf32>, vector<128x128xf32>, vector<128x128xf32> -> vector<128x128xf32>
    %cst_49 = arith.constant 0.000000e+00 : f32
    %126 = vector.broadcast %cst_49 : f32 to vector<128x128xf32>
    %127 = arith.cmpf ogt, %99, %126 : vector<128x128xf32>
    %cst_50 = arith.constant 1.000000e-01 : f32
    %128 = vector.broadcast %cst_50 : f32 to vector<128x128xf32>
    %129 = arith.cmpf oge, %125, %128 : vector<128x128xf32>
    %130 = arith.ori %2, %129 : vector<128x128xi1>
    %131 = arith.andi %127, %130 : vector<128x128xi1>
    %cst_51 = arith.constant dense<true> : vector<128x128xi1>
    %132 = arith.xori %2, %cst_51 : vector<128x128xi1>
    %133 = arith.andi %131, %132 : vector<128x128xi1>
    %cst_52 = arith.constant 0.000000e+00 : f32
    %134 = vector.broadcast %cst_52 : f32 to vector<128x128xf32>
    %135 = arith.select %133, %125, %134 : vector<128x128xi1>, vector<128x128xf32>
    %cst_53 = arith.constant dense<0.000000e+00> : vector<128xf32>
    %136 = vector.multi_reduction <add>, %135, %cst_53 [1] : vector<128x128xf32> to vector<128xf32>
    %137 = vector.shape_cast %136 : vector<128xf32> to vector<128x1xf32>
    %cst_54 = arith.constant 0.000000e+00 : f32
    %138 = vector.broadcast %cst_54 : f32 to vector<128x1xf32>
    %139 = arith.cmpf ogt, %137, %138 : vector<128x1xf32>
    %140 = math.rsqrt %137 : vector<128x1xf32>
    %cst_55 = arith.constant 0.000000e+00 : f32
    %141 = vector.broadcast %cst_55 : f32 to vector<128x1xf32>
    %142 = arith.select %139, %140, %141 : vector<128x1xi1>, vector<128x1xf32>
    %cst_56 = arith.constant dense<0.000000e+00> : vector<128xf32>
    %143 = vector.multi_reduction <add>, %135, %cst_56 [0] : vector<128x128xf32> to vector<128xf32>
    %144 = vector.shape_cast %143 : vector<128xf32> to vector<1x128xf32>
    %cst_57 = arith.constant 0.000000e+00 : f32
    %145 = vector.broadcast %cst_57 : f32 to vector<1x128xf32>
    %146 = arith.cmpf ogt, %144, %145 : vector<1x128xf32>
    %147 = math.rsqrt %144 : vector<1x128xf32>
    %cst_58 = arith.constant 0.000000e+00 : f32
    %148 = vector.broadcast %cst_58 : f32 to vector<1x128xf32>
    %149 = arith.select %146, %147, %148 : vector<1x128xi1>, vector<1x128xf32>
    %150 = vector.broadcast %142 : vector<128x1xf32> to vector<128x128xf32>
    %151 = arith.mulf %150, %135 : vector<128x128xf32>
    %152 = vector.broadcast %149 : vector<1x128xf32> to vector<128x128xf32>
    %153 = arith.mulf %151, %152 : vector<128x128xf32>
    %154 = arith.extui %131 : vector<128x128xi1> to vector<128x128xi32>
    %155 = arith.sitofp %154 : vector<128x128xi32> to vector<128x128xf32>
    %cst_59 = arith.constant dense<0.000000e+00> : vector<128xf32>
    %156 = vector.multi_reduction <add>, %155, %cst_59 [0] : vector<128x128xf32> to vector<128xf32>
    %157 = vector.shape_cast %156 : vector<128xf32> to vector<1x128xf32>
    %cst_60 = arith.constant 1.000000e+00 : f32
    %158 = vector.broadcast %cst_60 : f32 to vector<1x128xf32>
    %159 = arith.addf %157, %158 : vector<1x128xf32>
    %cst_61 = arith.constant 1.000000e+00 : f32
    %160 = vector.broadcast %cst_61 : f32 to vector<1x128xf32>
    %161 = arith.divf %160, %159 : vector<1x128xf32>
    %162 = vector.shape_cast %161 : vector<1x128xf32> to vector<1x128xf32>
    %163 = vector.broadcast %162 : vector<1x128xf32> to vector<128x128xf32>
    %164 = arith.select %5, %163, %153 : vector<128x128xi1>, vector<128x128xf32>
    %165 = math.exp %164 : vector<128x128xf32>
    %166 = arith.ori %133, %5 : vector<128x128xi1>
    %cst_62 = arith.constant 0.000000e+00 : f32
    %167 = vector.broadcast %cst_62 : f32 to vector<128x128xf32>
    %168 = arith.select %166, %165, %167 : vector<128x128xi1>, vector<128x128xf32>
    %cst_63 = arith.constant dense<0.000000e+00> : vector<128x128xf32>
    %169 = tpu.matmul %116, %45, %cst_63 {dimension_numbers = #tpu.dot_dimension_numbers<[1], [0], [0], [1], [0, 0, 1, 1], [], []>} : vector<128x128xf32>, vector<128x128xf32>, vector<128x128xf32> -> vector<128x128xf32>
    %cst_64 = arith.constant dense<0.000000e+00> : vector<128xf32>
    %170 = vector.multi_reduction <add>, %168, %cst_64 [1] : vector<128x128xf32> to vector<128xf32>
    %171 = vector.shape_cast %170 : vector<128xf32> to vector<128x1xf32>
    %cst_65 = arith.constant 0.000000e+00 : f32
    %172 = vector.broadcast %cst_65 : f32 to vector<128x1xf32>
    %173 = arith.cmpf ogt, %171, %172 : vector<128x1xf32>
    %174 = math.rsqrt %171 : vector<128x1xf32>
    %cst_66 = arith.constant 0.000000e+00 : f32
    %175 = vector.broadcast %cst_66 : f32 to vector<128x1xf32>
    %176 = arith.select %173, %174, %175 : vector<128x1xi1>, vector<128x1xf32>
    %177 = vector.broadcast %176 : vector<128x1xf32> to vector<128x128xf32>
    %178 = arith.mulf %169, %177 : vector<128x128xf32>
    %cst_67 = arith.constant dense<0.000000e+00> : vector<128x128xf32>
    %179 = tpu.matmul %168, %178, %cst_67 {dimension_numbers = #tpu.dot_dimension_numbers<[1], [0], [0], [1], [0, 0, 1, 1], [], []>} : vector<128x128xf32>, vector<128x128xf32>, vector<128x128xf32> -> vector<128x128xf32>
    %180 = vector.broadcast %176 : vector<128x1xf32> to vector<128x128xf32>
    %181 = arith.mulf %179, %180 : vector<128x128xf32>
    %182 = vector.broadcast %46 : vector<1x128xf32> to vector<128x128xf32>
    %183 = arith.addf %181, %182 : vector<128x128xf32>
    %cst_68 = arith.constant 0.000000e+00 : f32
    %184 = vector.broadcast %cst_68 : f32 to vector<128x128xf32>
    %185 = arith.maximumf %183, %184 : vector<128x128xf32>
    %186 = arith.mulf %185, %185 : vector<128x128xf32>
    %cst_69 = arith.constant dense<0.000000e+00> : vector<128xf32>
    %187 = vector.multi_reduction <add>, %186, %cst_69 [1] : vector<128x128xf32> to vector<128xf32>
    %188 = vector.shape_cast %187 : vector<128xf32> to vector<128x1xf32>
    %189 = math.sqrt %188 : vector<128x1xf32>
    %cst_70 = arith.constant 9.99999993E-9 : f32
    %190 = vector.broadcast %cst_70 : f32 to vector<128x1xf32>
    %191 = arith.maximumf %189, %190 : vector<128x1xf32>
    %192 = vector.broadcast %191 : vector<128x1xf32> to vector<128x128xf32>
    %193 = arith.divf %185, %192 : vector<128x128xf32>
    %cst_71 = arith.constant dense<0.000000e+00> : vector<128x128xf32>
    %194 = tpu.matmul %193, %193, %cst_71 {dimension_numbers = #tpu.dot_dimension_numbers<[1], [1], [0], [0], [0, 0, 1, 0], [], []>} : vector<128x128xf32>, vector<128x128xf32>, vector<128x128xf32> -> vector<128x128xf32>
    %cst_72 = arith.constant 0.000000e+00 : f32
    %195 = vector.broadcast %cst_72 : f32 to vector<128x128xf32>
    %196 = arith.cmpf ogt, %168, %195 : vector<128x128xf32>
    %cst_73 = arith.constant 1.000000e-01 : f32
    %197 = vector.broadcast %cst_73 : f32 to vector<128x128xf32>
    %198 = arith.cmpf oge, %194, %197 : vector<128x128xf32>
    %199 = arith.ori %2, %198 : vector<128x128xi1>
    %200 = arith.andi %196, %199 : vector<128x128xi1>
    %cst_74 = arith.constant dense<true> : vector<128x128xi1>
    %201 = arith.xori %2, %cst_74 : vector<128x128xi1>
    %202 = arith.andi %200, %201 : vector<128x128xi1>
    %cst_75 = arith.constant 0.000000e+00 : f32
    %203 = vector.broadcast %cst_75 : f32 to vector<128x128xf32>
    %204 = arith.select %202, %194, %203 : vector<128x128xi1>, vector<128x128xf32>
    %cst_76 = arith.constant dense<0.000000e+00> : vector<128xf32>
    %205 = vector.multi_reduction <add>, %204, %cst_76 [1] : vector<128x128xf32> to vector<128xf32>
    %206 = vector.shape_cast %205 : vector<128xf32> to vector<128x1xf32>
    %cst_77 = arith.constant 0.000000e+00 : f32
    %207 = vector.broadcast %cst_77 : f32 to vector<128x1xf32>
    %208 = arith.cmpf ogt, %206, %207 : vector<128x1xf32>
    %209 = math.rsqrt %206 : vector<128x1xf32>
    %cst_78 = arith.constant 0.000000e+00 : f32
    %210 = vector.broadcast %cst_78 : f32 to vector<128x1xf32>
    %211 = arith.select %208, %209, %210 : vector<128x1xi1>, vector<128x1xf32>
    %cst_79 = arith.constant dense<0.000000e+00> : vector<128xf32>
    %212 = vector.multi_reduction <add>, %204, %cst_79 [0] : vector<128x128xf32> to vector<128xf32>
    %213 = vector.shape_cast %212 : vector<128xf32> to vector<1x128xf32>
    %cst_80 = arith.constant 0.000000e+00 : f32
    %214 = vector.broadcast %cst_80 : f32 to vector<1x128xf32>
    %215 = arith.cmpf ogt, %213, %214 : vector<1x128xf32>
    %216 = math.rsqrt %213 : vector<1x128xf32>
    %cst_81 = arith.constant 0.000000e+00 : f32
    %217 = vector.broadcast %cst_81 : f32 to vector<1x128xf32>
    %218 = arith.select %215, %216, %217 : vector<1x128xi1>, vector<1x128xf32>
    %219 = vector.broadcast %211 : vector<128x1xf32> to vector<128x128xf32>
    %220 = arith.mulf %219, %204 : vector<128x128xf32>
    %221 = vector.broadcast %218 : vector<1x128xf32> to vector<128x128xf32>
    %222 = arith.mulf %220, %221 : vector<128x128xf32>
    %223 = arith.extui %200 : vector<128x128xi1> to vector<128x128xi32>
    %224 = arith.sitofp %223 : vector<128x128xi32> to vector<128x128xf32>
    %cst_82 = arith.constant dense<0.000000e+00> : vector<128xf32>
    %225 = vector.multi_reduction <add>, %224, %cst_82 [0] : vector<128x128xf32> to vector<128xf32>
    %226 = vector.shape_cast %225 : vector<128xf32> to vector<1x128xf32>
    %cst_83 = arith.constant 1.000000e+00 : f32
    %227 = vector.broadcast %cst_83 : f32 to vector<1x128xf32>
    %228 = arith.addf %226, %227 : vector<1x128xf32>
    %cst_84 = arith.constant 1.000000e+00 : f32
    %229 = vector.broadcast %cst_84 : f32 to vector<1x128xf32>
    %230 = arith.divf %229, %228 : vector<1x128xf32>
    %231 = vector.shape_cast %230 : vector<1x128xf32> to vector<1x128xf32>
    %232 = vector.broadcast %231 : vector<1x128xf32> to vector<128x128xf32>
    %233 = arith.select %5, %232, %222 : vector<128x128xi1>, vector<128x128xf32>
    %234 = math.exp %233 : vector<128x128xf32>
    %235 = arith.ori %202, %5 : vector<128x128xi1>
    %cst_85 = arith.constant 0.000000e+00 : f32
    %236 = vector.broadcast %cst_85 : f32 to vector<128x128xf32>
    %237 = arith.select %235, %234, %236 : vector<128x128xi1>, vector<128x128xf32>
    %cst_86 = arith.constant dense<0.000000e+00> : vector<128x128xf32>
    %238 = tpu.matmul %185, %45, %cst_86 {dimension_numbers = #tpu.dot_dimension_numbers<[1], [0], [0], [1], [0, 0, 1, 1], [], []>} : vector<128x128xf32>, vector<128x128xf32>, vector<128x128xf32> -> vector<128x128xf32>
    %cst_87 = arith.constant dense<0.000000e+00> : vector<128xf32>
    %239 = vector.multi_reduction <add>, %237, %cst_87 [1] : vector<128x128xf32> to vector<128xf32>
    %240 = vector.shape_cast %239 : vector<128xf32> to vector<128x1xf32>
    %cst_88 = arith.constant 0.000000e+00 : f32
    %241 = vector.broadcast %cst_88 : f32 to vector<128x1xf32>
    %242 = arith.cmpf ogt, %240, %241 : vector<128x1xf32>
    %243 = math.rsqrt %240 : vector<128x1xf32>
    %cst_89 = arith.constant 0.000000e+00 : f32
    %244 = vector.broadcast %cst_89 : f32 to vector<128x1xf32>
    %245 = arith.select %242, %243, %244 : vector<128x1xi1>, vector<128x1xf32>
    %246 = vector.broadcast %245 : vector<128x1xf32> to vector<128x128xf32>
    %247 = arith.mulf %238, %246 : vector<128x128xf32>
    %cst_90 = arith.constant dense<0.000000e+00> : vector<128x128xf32>
    %248 = tpu.matmul %237, %247, %cst_90 {dimension_numbers = #tpu.dot_dimension_numbers<[1], [0], [0], [1], [0, 0, 1, 1], [], []>} : vector<128x128xf32>, vector<128x128xf32>, vector<128x128xf32> -> vector<128x128xf32>
    %249 = vector.broadcast %245 : vector<128x1xf32> to vector<128x128xf32>
    %250 = arith.mulf %248, %249 : vector<128x128xf32>
    %251 = vector.broadcast %46 : vector<1x128xf32> to vector<128x128xf32>
    %252 = arith.addf %250, %251 : vector<128x128xf32>
    %253 = tpu.iota {dimensions = array<i32: 1>} : vector<128x128xi32>
    %c32_i32_91 = arith.constant 32 : i32
    %254 = vector.broadcast %c32_i32_91 : i32 to vector<128x128xi32>
    %255 = arith.cmpi slt, %253, %254 : vector<128x128xi32>
    %cst_92 = arith.constant 0xFF800000 : f32
    %256 = vector.broadcast %cst_92 : f32 to vector<128x128xf32>
    %257 = arith.select %255, %252, %256 : vector<128x128xi1>, vector<128x128xf32>
    %cst_93 = arith.constant dense<0xFF800000> : vector<128xf32>
    %258 = vector.multi_reduction <maximumf>, %257, %cst_93 [1] : vector<128x128xf32> to vector<128xf32>
    %259 = vector.shape_cast %258 : vector<128xf32> to vector<128x1xf32>
    %260 = vector.broadcast %259 : vector<128x1xf32> to vector<128x128xf32>
    %261 = arith.subf %252, %260 : vector<128x128xf32>
    %262 = math.exp %261 : vector<128x128xf32>
    %cst_94 = arith.constant 0.000000e+00 : f32
    %263 = vector.broadcast %cst_94 : f32 to vector<128x128xf32>
    %264 = arith.select %255, %262, %263 : vector<128x128xi1>, vector<128x128xf32>
    %cst_95 = arith.constant dense<0.000000e+00> : vector<128xf32>
    %265 = vector.multi_reduction <add>, %264, %cst_95 [1] : vector<128x128xf32> to vector<128xf32>
    %266 = vector.shape_cast %265 : vector<128xf32> to vector<128x1xf32>
    %267 = math.log %266 : vector<128x1xf32>
    %268 = vector.broadcast %267 : vector<128x1xf32> to vector<128x128xf32>
    %269 = arith.subf %261, %268 : vector<128x128xf32>
    %cst_96 = arith.constant 0.000000e+00 : f32
    %270 = vector.broadcast %cst_96 : f32 to vector<128x128xf32>
    %271 = arith.select %255, %269, %270 : vector<128x128xi1>, vector<128x128xf32>
    %c0_97 = arith.constant 0 : index
    %c0_98 = arith.constant 0 : index
    %272 = vector.load %arg8[%c0_97, %c0_98] : memref<128x128xf32, #tpu.memory_space<vmem>>, vector<128x128xf32>
    tpu.vector_store %arg8[%c0_97, %c0_98], %271 {strides = array<i32>} : memref<128x128xf32, #tpu.memory_space<vmem>>, vector<128x128xf32>,
    return
  }
}

</mosaic_0001>

<llo_original>
// kernel: tpu_custom_call.1
$region0: #{tpu_custom_call.1}
  #allocation0 [shape = 'u32[]', space=smem, size = 0x4, offset = 0x4, fixed_abs, tag = 'smem constant byte address 0x4 - core index']
  #allocation1 [shape = 'u32[144,128]{1,0:T(1,128)}', space=vmem, size = 0x12000, scoped, tag = 'internal scratch']
  %s0 = inlined_call_operand.hbm [shape: f32[128,128], index: 0, kind: input, shape index: {}]
  %s1 = inlined_call_operand.hbm [shape: f32[128,128], index: 1, kind: input, shape index: {}]
  %s2 = inlined_call_operand.vmem [shape: f32[1,128], index: 2, kind: input, shape index: {}]
  %s3 = inlined_call_operand.vmem [shape: f32[1,128], index: 3, kind: input, shape index: {}]
  %s4 = inlined_call_operand.hbm [shape: f32[128,128], index: 4, kind: input, shape index: {}]
  %s5 = inlined_call_operand.vmem [shape: f32[1,128], index: 5, kind: input, shape index: {}]
  %s6 = inlined_call_operand.hbm [shape: f32[128,128], index: 6, kind: input, shape index: {}]
  %s7 = inlined_call_operand.vmem [shape: f32[1,128], index: 7, kind: input, shape index: {}]
  %s8 = inlined_call_operand.hbm [shape: f32[128,128], index: 8, kind: output, shape index: {}]
  %s9 = sld [smem:[#allocation0]]
  $region58: #{tpu_custom_call.1} parent=0
    _
  %s11 = ssub.s32 1, %s9
  %s12 = scalar_select 0, %s11, %s9
  $region1: #{tpu_custom_call.1} parent=0
    #allocation2 [shape = 'u8[65536]{0}', space=vmem, size = 0x10000, scoped, tag = 'input window, operand 0, single buffered']
    #allocation3 [shape = 's32[1]{0}', space=sflag, size = 0x4, scoped, tag = 'scoped memory for tpu_custom_call.1']
    #allocation4 [shape = 's32[1]{0}', space=sflag, size = 0x4, scoped, tag = 'scoped memory for tpu_custom_call.1']
    #allocation5 [shape = 'u8[65536]{0}', space=vmem, size = 0x10000, scoped, tag = 'input window, operand 1, single buffered']
    #allocation6 [shape = 's32[1]{0}', space=sflag, size = 0x4, scoped, tag = 'scoped memory for tpu_custom_call.1']
    #allocation7 [shape = 'u8[65536]{0}', space=vmem, size = 0x10000, scoped, tag = 'input window, operand 4, single buffered']
    #allocation8 [shape = 'u8[65536]{0}', space=vmem, size = 0x10000, scoped, tag = 'input window, operand 6, single buffered']
    #allocation9 [shape = 's32[1]{0}', space=sflag, size = 0x4, scoped, tag = 'scoped memory for tpu_custom_call.1']
    #allocation10 [shape = 'u8[65536]{0}', space=vmem, size = 0x10000, scoped, tag = 'output window, operand 0, single buffered']
    %13 = vsyncpa [#allocation3], 0
    %14 = vsyncpa [#allocation6], 0
    %15 = vsyncpa [#allocation9], 0
    %16 = vsyncpa [#allocation4], 0
    // Predicated region
    $region2: #{tpu_custom_call.1} parent=1 // pred_check
      _
    $region3: #{tpu_custom_call.1} parent=1 // pred_check_branch
      %18 = sbr.rel (0) target = $region5
    $region4: #{tpu_custom_call.1} parent=1 // pred_region
      %s20 = ssub.s32 2048, 2048
      %21 = vsyncadd [#allocation3], %s20
      %s22 = sshll.u32 [#allocation2], 4
      %s23 = int_to_ptr.vmem [resolvable:$true] %s22
      %28 = dma.hbm_to_vmem [thread:$0]  %s0, 2048, %s23, [#allocation3], 128, 128, 8
    $region5: #{tpu_custom_call.1} parent=1 // pred_fallthru
      _
    // Predicated region
    $region6: #{tpu_custom_call.1} parent=1 // pred_check
      _
    $region7: #{tpu_custom_call.1} parent=1 // pred_check_branch
      %30 = sbr.rel (0) target = $region9
    $region8: #{tpu_custom_call.1} parent=1 // pred_region
      %s32 = ssub.s32 2048, 2048
      %33 = vsyncadd [#allocation6], %s32
      %s34 = sshll.u32 [#allocation5], 4
      %s35 = int_to_ptr.vmem [resolvable:$true] %s34
      %40 = dma.hbm_to_vmem [thread:$0]  %s1, 2048, %s35, [#allocation6], 128, 128, 8
    $region9: #{tpu_custom_call.1} parent=1 // pred_fallthru
      _
    // Predicated region
    $region10: #{tpu_custom_call.1} parent=1 // pred_check
      _
    $region11: #{tpu_custom_call.1} parent=1 // pred_check_branch
      %42 = sbr.rel (0) target = $region13
    $region12: #{tpu_custom_call.1} parent=1 // pred_region
      _
    $region13: #{tpu_custom_call.1} parent=1 // pred_fallthru
      _
    // Predicated region
    $region14: #{tpu_custom_call.1} parent=1 // pred_check
      _
    $region15: #{tpu_custom_call.1} parent=1 // pred_check_branch
      %44 = sbr.rel (0) target = $region17
    $region16: #{tpu_custom_call.1} parent=1 // pred_region
      _
    $region17: #{tpu_custom_call.1} parent=1 // pred_fallthru
      _
    // Predicated region
    $region18: #{tpu_custom_call.1} parent=1 // pred_check
      _
    $region19: #{tpu_custom_call.1} parent=1 // pred_check_branch
      %46 = sbr.rel (0) target = $region21
    $region20: #{tpu_custom_call.1} parent=1 // pred_region
      %s48 = ssub.s32 2048, 2048
      %49 = vsyncadd [#allocation6], %s48
      %s50 = sshll.u32 [#allocation7], 4
      %s51 = int_to_ptr.vmem [resolvable:$true] %s50
      %56 = dma.hbm_to_vmem [thread:$0]  %s4, 2048, %s51, [#allocation6], 128, 128, 8
    $region21: #{tpu_custom_call.1} parent=1 // pred_fallthru
      _
    // Predicated region
    $region22: #{tpu_custom_call.1} parent=1 // pred_check
      _
    $region23: #{tpu_custom_call.1} parent=1 // pred_check_branch
      %58 = sbr.rel (0) target = $region25
    $region24: #{tpu_custom_call.1} parent=1 // pred_region
      _
    $region25: #{tpu_custom_call.1} parent=1 // pred_fallthru
      _
    // Predicated region
    $region26: #{tpu_custom_call.1} parent=1 // pred_check
      _
    $region27: #{tpu_custom_call.1} parent=1 // pred_check_branch
      %60 = sbr.rel (0) target = $region29
    $region28: #{tpu_custom_call.1} parent=1 // pred_region
      %s62 = ssub.s32 2048, 2048
      %63 = vsyncadd [#allocation9], %s62
      %s64 = sshll.u32 [#allocation8], 4
      %s65 = int_to_ptr.vmem [resolvable:$true] %s64
      %70 = dma.hbm_to_vmem [thread:$0]  %s6, 2048, %s65, [#allocation9], 128, 128, 8
    $region29: #{tpu_custom_call.1} parent=1 // pred_fallthru
      _
    // Predicated region
    $region30: #{tpu_custom_call.1} parent=1 // pred_check
      _
    $region31: #{tpu_custom_call.1} parent=1 // pred_check_branch
      %72 = sbr.rel (0) target = $region33
    $region32: #{tpu_custom_call.1} parent=1 // pred_region
      _
    $region33: #{tpu_custom_call.1} parent=1 // pred_fallthru
      _
    // Predicated region
    $region34: #{tpu_custom_call.1} parent=1 // pred_check
      _
    $region35: #{tpu_custom_call.1} parent=1 // pred_check_branch
      %74 = sbr.rel (0) target = $region37
    $region36: #{tpu_custom_call.1} parent=1 // pred_region
      %75 = dma.done [#allocation3], 2048
    $region37: #{tpu_custom_call.1} parent=1 // pred_fallthru
      _
    // Predicated region
    $region38: #{tpu_custom_call.1} parent=1 // pred_check
      _
    $region39: #{tpu_custom_call.1} parent=1 // pred_check_branch
      %77 = sbr.rel (0) target = $region41
    $region40: #{tpu_custom_call.1} parent=1 // pred_region
      %78 = dma.done [#allocation6], 2048
    $region41: #{tpu_custom_call.1} parent=1 // pred_fallthru
      _
    // Predicated region
    $region42: #{tpu_custom_call.1} parent=1 // pred_check
      _
    $region43: #{tpu_custom_call.1} parent=1 // pred_check_branch
      %80 = sbr.rel (0) target = $region45
    $region44: #{tpu_custom_call.1} parent=1 // pred_region
      %81 = dma.done [#allocation6], 2048
    $region45: #{tpu_custom_call.1} parent=1 // pred_fallthru
      _
    // Predicated region
    $region46: #{tpu_custom_call.1} parent=1 // pred_check
      _
    $region47: #{tpu_custom_call.1} parent=1 // pred_check_branch
      %83 = sbr.rel (0) target = $region49
    $region48: #{tpu_custom_call.1} parent=1 // pred_region
      %84 = dma.done [#allocation9], 2048
    $region49: #{tpu_custom_call.1} parent=1 // pred_fallthru
      _
    %v85 = vlaneseq
    %v86 = vshrl.u32 %v85, 7
    %v87 = vadd.s32 %v86, 8
    %v88 = vadd.s32 %v86, 16
    %v89 = vadd.s32 %v86, 24
    %v90 = vadd.s32 %v86, 32
    %v91 = vadd.s32 %v86, 40
    %v92 = vadd.s32 %v86, 48
    %v93 = vadd.s32 %v86, 56
    %v94 = vadd.s32 %v86, 64
    %v95 = vadd.s32 %v86, 72
    %v96 = vadd.s32 %v86, 80
    %v97 = vadd.s32 %v86, 88
    %v98 = vadd.s32 %v86, 96
    %v99 = vadd.s32 %v86, 104
    %v100 = vadd.s32 %v86, 112
    %v101 = vadd.s32 %v86, 120
    %v102 = vlaneseq
    %v103 = vand.u32 %v102, 127
    %vm104 = vcmp.eq.s32.totalorder %v86, %v103
    %vm105 = vcmp.eq.s32.totalorder %v87, %v103
    %vm106 = vcmp.eq.s32.totalorder %v88, %v103
    %vm107 = vcmp.eq.s32.totalorder %v89, %v103
    %vm108 = vcmp.eq.s32.totalorder %v90, %v103
    %vm109 = vcmp.eq.s32.totalorder %v91, %v103
    %vm110 = vcmp.eq.s32.totalorder %v92, %v103
    %vm111 = vcmp.eq.s32.totalorder %v93, %v103
    %vm112 = vcmp.eq.s32.totalorder %v94, %v103
    %vm113 = vcmp.eq.s32.totalorder %v95, %v103
    %vm114 = vcmp.eq.s32.totalorder %v96, %v103
    %vm115 = vcmp.eq.s32.totalorder %v97, %v103
    %vm116 = vcmp.eq.s32.totalorder %v98, %v103
    %vm117 = vcmp.eq.s32.totalorder %v99, %v103
    %vm118 = vcmp.eq.s32.totalorder %v100, %v103
    %vm119 = vcmp.eq.s32.totalorder %v101, %v103
    %vm120 = vcmp.lt.s32.totalorder %v86, 64
    %vm121 = vcmp.lt.s32.totalorder %v87, 64
    %vm122 = vcmp.lt.s32.totalorder %v88, 64
    %vm123 = vcmp.lt.s32.totalorder %v89, 64
    %vm124 = vcmp.lt.s32.totalorder %v90, 64
    %vm125 = vcmp.lt.s32.totalorder %v91, 64
    %vm126 = vcmp.lt.s32.totalorder %v92, 64
    %vm127 = vcmp.lt.s32.totalorder %v93, 64
    %vm128 = vcmp.lt.s32.totalorder %v94, 64
    %vm129 = vcmp.lt.s32.totalorder %v95, 64
    %vm130 = vcmp.lt.s32.totalorder %v96, 64
    %vm131 = vcmp.lt.s32.totalorder %v97, 64
    %vm132 = vcmp.lt.s32.totalorder %v98, 64
    %vm133 = vcmp.lt.s32.totalorder %v99, 64
    %vm134 = vcmp.lt.s32.totalorder %v100, 64
    %vm135 = vcmp.lt.s32.totalorder %v101, 64
    %vm136 = vmand %vm104, %vm120
    %vm137 = vmand %vm105, %vm121
    %vm138 = vmand %vm106, %vm122
    %vm139 = vmand %vm107, %vm123
    %vm140 = vmand %vm108, %vm124
    %vm141 = vmand %vm109, %vm125
    %vm142 = vmand %vm110, %vm126
    %vm143 = vmand %vm111, %vm127
    %vm144 = vmand %vm112, %vm128
    %vm145 = vmand %vm113, %vm129
    %vm146 = vmand %vm114, %vm130
    %vm147 = vmand %vm115, %vm131
    %vm148 = vmand %vm116, %vm132
    %vm149 = vmand %vm117, %vm133
    %vm150 = vmand %vm118, %vm134
    %vm151 = vmand %vm119, %vm135
    %v152 = vld [vmem:[#allocation2] sm:$0xff]
    %v153 = vld [vmem:[#allocation2 + $0x8] sm:$0xff]
    %v154 = vld [vmem:[#allocation2 + $0x10] sm:$0xff]
    %v155 = vld [vmem:[#allocation2 + $0x18] sm:$0xff]
    %v156 = vld [vmem:[#allocation2 + $0x20] sm:$0xff]
    %v157 = vld [vmem:[#allocation2 + $0x28] sm:$0xff]
    %v158 = vld [vmem:[#allocation2 + $0x30] sm:$0xff]
    %v159 = vld [vmem:[#allocation2 + $0x38] sm:$0xff]
    %v160 = vld [vmem:[#allocation2 + $0x40] sm:$0xff]
    %v161 = vld [vmem:[#allocation2 + $0x48] sm:$0xff]
    %v162 = vld [vmem:[#allocation2 + $0x50] sm:$0xff]
    %v163 = vld [vmem:[#allocation2 + $0x58] sm:$0xff]
    %v164 = vld [vmem:[#allocation2 + $0x60] sm:$0xff]
    %v165 = vld [vmem:[#allocation2 + $0x68] sm:$0xff]
    %v166 = vld [vmem:[#allocation2 + $0x70] sm:$0xff]
    %v167 = vld [vmem:[#allocation2 + $0x78] sm:$0xff]
    %vm168 = vcmp.lt.s32.totalorder %v103, 32
    %v169 = vsel %vm168, %v152, 0.0
    %v170 = vsel %vm168, %v153, 0.0
    %v171 = vsel %vm168, %v154, 0.0
    %v172 = vsel %vm168, %v155, 0.0
    %v173 = vsel %vm168, %v156, 0.0
    %v174 = vsel %vm168, %v157, 0.0
    %v175 = vsel %vm168, %v158, 0.0
    %v176 = vsel %vm168, %v159, 0.0
    %v177 = vsel %vm168, %v160, 0.0
    %v178 = vsel %vm168, %v161, 0.0
    %v179 = vsel %vm168, %v162, 0.0
    %v180 = vsel %vm168, %v163, 0.0
    %v181 = vsel %vm168, %v164, 0.0
    %v182 = vsel %vm168, %v165, 0.0
    %v183 = vsel %vm168, %v166, 0.0
    %v184 = vsel %vm168, %v167, 0.0
    %185 = vadd.xlane.f32.xlu0 %v169
    %v186 = vpop.xlane.xlu0 %185
    %187 = vadd.xlane.f32.xlu0 %v170
    %v188 = vpop.xlane.xlu0 %187
    %189 = vadd.xlane.f32.xlu0 %v171
    %v190 = vpop.xlane.xlu0 %189
    %191 = vadd.xlane.f32.xlu0 %v172
    %v192 = vpop.xlane.xlu0 %191
    %193 = vadd.xlane.f32.xlu0 %v173
    %v194 = vpop.xlane.xlu0 %193
    %195 = vadd.xlane.f32.xlu0 %v174
    %v196 = vpop.xlane.xlu0 %195
    %197 = vadd.xlane.f32.xlu0 %v175
    %v198 = vpop.xlane.xlu0 %197
    %199 = vadd.xlane.f32.xlu0 %v176
    %v200 = vpop.xlane.xlu0 %199
    %201 = vadd.xlane.f32.xlu0 %v177
    %v202 = vpop.xlane.xlu0 %201
    %203 = vadd.xlane.f32.xlu0 %v178
    %v204 = vpop.xlane.xlu0 %203
    %205 = vadd.xlane.f32.xlu0 %v179
    %v206 = vpop.xlane.xlu0 %205
    %207 = vadd.xlane.f32.xlu0 %v180
    %v208 = vpop.xlane.xlu0 %207
    %209 = vadd.xlane.f32.xlu0 %v181
    %v210 = vpop.xlane.xlu0 %209
    %211 = vadd.xlane.f32.xlu0 %v182
    %v212 = vpop.xlane.xlu0 %211
    %213 = vadd.xlane.f32.xlu0 %v183
    %v214 = vpop.xlane.xlu0 %213
    %215 = vadd.xlane.f32.xlu0 %v184
    %v216 = vpop.xlane.xlu0 %215
    %v217 = vrcp.pop 32.0
    %v218 = vmul.f32 %v186, %v217
    %v219 = vmul.f32 %v188, %v217
    %v220 = vmul.f32 %v190, %v217
    %v221 = vmul.f32 %v192, %v217
    %v222 = vmul.f32 %v194, %v217
    %v223 = vmul.f32 %v196, %v217
    %v224 = vmul.f32 %v198, %v217
    %v225 = vmul.f32 %v200, %v217
    %v226 = vmul.f32 %v202, %v217
    %v227 = vmul.f32 %v204, %v217
    %v228 = vmul.f32 %v206, %v217
    %v229 = vmul.f32 %v208, %v217
    %v230 = vmul.f32 %v210, %v217
    %v231 = vmul.f32 %v212, %v217
    %v232 = vmul.f32 %v214, %v217
    %v233 = vmul.f32 %v216, %v217
    %v234 = vsub.f32 %v152, %v218
    %v235 = vsub.f32 %v153, %v219
    %v236 = vsub.f32 %v154, %v220
    %v237 = vsub.f32 %v155, %v221
    %v238 = vsub.f32 %v156, %v222
    %v239 = vsub.f32 %v157, %v223
    %v240 = vsub.f32 %v158, %v224
    %v241 = vsub.f32 %v159, %v225
    %v242 = vsub.f32 %v160, %v226
    %v243 = vsub.f32 %v161, %v227
    %v244 = vsub.f32 %v162, %v228
    %v245 = vsub.f32 %v163, %v229
    %v246 = vsub.f32 %v164, %v230
    %v247 = vsub.f32 %v165, %v231
    %v248 = vsub.f32 %v166, %v232
    %v249 = vsub.f32 %v167, %v233
    %v250 = vsel %vm168, %v234, 0.0
    %v251 = vsel %vm168, %v235, 0.0
    %v252 = vsel %vm168, %v236, 0.0
    %v253 = vsel %vm168, %v237, 0.0
    %v254 = vsel %vm168, %v238, 0.0
    %v255 = vsel %vm168, %v239, 0.0
    %v256 = vsel %vm168, %v240, 0.0
    %v257 = vsel %vm168, %v241, 0.0
    %v258 = vsel %vm168, %v242, 0.0
    %v259 = vsel %vm168, %v243, 0.0
    %v260 = vsel %vm168, %v244, 0.0
    %v261 = vsel %vm168, %v245, 0.0
    %v262 = vsel %vm168, %v246, 0.0
    %v263 = vsel %vm168, %v247, 0.0
    %v264 = vsel %vm168, %v248, 0.0
    %v265 = vsel %vm168, %v249, 0.0
    %v266 = vmul.f32 %v250, %v250
    %v267 = vmul.f32 %v251, %v251
    %v268 = vmul.f32 %v252, %v252
    %v269 = vmul.f32 %v253, %v253
    %v270 = vmul.f32 %v254, %v254
    %v271 = vmul.f32 %v255, %v255
    %v272 = vmul.f32 %v256, %v256
    %v273 = vmul.f32 %v257, %v257
    %v274 = vmul.f32 %v258, %v258
    %v275 = vmul.f32 %v259, %v259
    %v276 = vmul.f32 %v260, %v260
    %v277 = vmul.f32 %v261, %v261
    %v278 = vmul.f32 %v262, %v262
    %v279 = vmul.f32 %v263, %v263
    %v280 = vmul.f32 %v264, %v264
    %v281 = vmul.f32 %v265, %v265
    %282 = vadd.xlane.f32.xlu0 %v266
    %v283 = vpop.xlane.xlu0 %282
    %284 = vadd.xlane.f32.xlu0 %v267
    %v285 = vpop.xlane.xlu0 %284
    %286 = vadd.xlane.f32.xlu0 %v268
    %v287 = vpop.xlane.xlu0 %286
    %288 = vadd.xlane.f32.xlu0 %v269
    %v289 = vpop.xlane.xlu0 %288
    %290 = vadd.xlane.f32.xlu0 %v270
    %v291 = vpop.xlane.xlu0 %290
    %292 = vadd.xlane.f32.xlu0 %v271
    %v293 = vpop.xlane.xlu0 %292
    %294 = vadd.xlane.f32.xlu0 %v272
    %v295 = vpop.xlane.xlu0 %294
    %296 = vadd.xlane.f32.xlu0 %v273
    %v297 = vpop.xlane.xlu0 %296
    %298 = vadd.xlane.f32.xlu0 %v274
    %v299 = vpop.xlane.xlu0 %298
    %300 = vadd.xlane.f32.xlu0 %v275
    %v301 = vpop.xlane.xlu0 %300
    %302 = vadd.xlane.f32.xlu0 %v276
    %v303 = vpop.xlane.xlu0 %302
    %304 = vadd.xlane.f32.xlu0 %v277
    %v305 = vpop.xlane.xlu0 %304
    %306 = vadd.xlane.f32.xlu0 %v278
    %v307 = vpop.xlane.xlu0 %306
    %308 = vadd.xlane.f32.xlu0 %v279
    %v309 = vpop.xlane.xlu0 %308
    %310 = vadd.xlane.f32.xlu0 %v280
    %v311 = vpop.xlane.xlu0 %310
    %312 = vadd.xlane.f32.xlu0 %v281
    %v313 = vpop.xlane.xlu0 %312
    %v314 = vmul.f32 %v283, %v217
    %v315 = vmul.f32 %v285, %v217
    %v316 = vmul.f32 %v287, %v217
    %v317 = vmul.f32 %v289, %v217
    %v318 = vmul.f32 %v291, %v217
    %v319 = vmul.f32 %v293, %v217
    %v320 = vmul.f32 %v295, %v217
    %v321 = vmul.f32 %v297, %v217
    %v322 = vmul.f32 %v299, %v217
    %v323 = vmul.f32 %v301, %v217
    %v324 = vmul.f32 %v303, %v217
    %v325 = vmul.f32 %v305, %v217
    %v326 = vmul.f32 %v307, %v217
    %v327 = vmul.f32 %v309, %v217
    %v328 = vmul.f32 %v311, %v217
    %v329 = vmul.f32 %v313, %v217
    %v330 = vadd.f32 %v314, 1e-05
    %v331 = vadd.f32 %v315, 1e-05
    %v332 = vadd.f32 %v316, 1e-05
    %v333 = vadd.f32 %v317, 1e-05
    %v334 = vadd.f32 %v318, 1e-05
    %v335 = vadd.f32 %v319, 1e-05
    %v336 = vadd.f32 %v320, 1e-05
    %v337 = vadd.f32 %v321, 1e-05
    %v338 = vadd.f32 %v322, 1e-05
    %v339 = vadd.f32 %v323, 1e-05
    %v340 = vadd.f32 %v324, 1e-05
    %v341 = vadd.f32 %v325, 1e-05
    %v342 = vadd.f32 %v326, 1e-05
    %v343 = vadd.f32 %v327, 1e-05
    %v344 = vadd.f32 %v328, 1e-05
    %v345 = vadd.f32 %v329, 1e-05
    %v346 = vrsqrt.pop %v330
    %v347 = vrsqrt.pop %v331
    %v348 = vrsqrt.pop %v332
    %v349 = vrsqrt.pop %v333
    %v350 = vrsqrt.pop %v334
    %v351 = vrsqrt.pop %v335
    %v352 = vrsqrt.pop %v336
    %v353 = vrsqrt.pop %v337
    %v354 = vrsqrt.pop %v338
    %v355 = vrsqrt.pop %v339
    %v356 = vrsqrt.pop %v340
    %v357 = vrsqrt.pop %v341
    %v358 = vrsqrt.pop %v342
    %v359 = vrsqrt.pop %v343
    %v360 = vrsqrt.pop %v344
    %v361 = vrsqrt.pop %v345
    %v362 = vmul.f32 %v250, %v346
    %v363 = vmul.f32 %v251, %v347
    %v364 = vmul.f32 %v252, %v348
    %v365 = vmul.f32 %v253, %v349
    %v366 = vmul.f32 %v254, %v350
    %v367 = vmul.f32 %v255, %v351
    %v368 = vmul.f32 %v256, %v352
    %v369 = vmul.f32 %v257, %v353
    %v370 = vmul.f32 %v258, %v354
    %v371 = vmul.f32 %v259, %v355
    %v372 = vmul.f32 %v260, %v356
    %v373 = vmul.f32 %v261, %v357
    %v374 = vmul.f32 %v262, %v358
    %v375 = vmul.f32 %v263, %v359
    %v376 = vmul.f32 %v264, %v360
    %v377 = vmul.f32 %v265, %v361
    %v378 = vld [vmem:[%s2] sm:$0x1]
    %v380 = vlaneseq
    %v381 = vshrl.u32 %v380, 7
    %v382 = vsub.s32 0, %v381
    %v383 = vrot.slane %v378, %v382
    %v385 = vmul.f32 %v362, %v383
    %v386 = vmul.f32 %v363, %v383
    %v387 = vmul.f32 %v364, %v383
    %v388 = vmul.f32 %v365, %v383
    %v389 = vmul.f32 %v366, %v383
    %v390 = vmul.f32 %v367, %v383
    %v391 = vmul.f32 %v368, %v383
    %v392 = vmul.f32 %v369, %v383
    %v393 = vmul.f32 %v370, %v383
    %v394 = vmul.f32 %v371, %v383
    %v395 = vmul.f32 %v372, %v383
    %v396 = vmul.f32 %v373, %v383
    %v397 = vmul.f32 %v374, %v383
    %v398 = vmul.f32 %v375, %v383
    %v399 = vmul.f32 %v376, %v383
    %v400 = vmul.f32 %v377, %v383
    %v401 = vld [vmem:[%s3] sm:$0x1]
    %v403 = vlaneseq
    %v404 = vshrl.u32 %v403, 7
    %v405 = vsub.s32 0, %v404
    %v406 = vrot.slane %v401, %v405
    %v408 = vadd.f32 %v385, %v406
    %v409 = vadd.f32 %v386, %v406
    %v410 = vadd.f32 %v387, %v406
    %v411 = vadd.f32 %v388, %v406
    %v412 = vadd.f32 %v389, %v406
    %v413 = vadd.f32 %v390, %v406
    %v414 = vadd.f32 %v391, %v406
    %v415 = vadd.f32 %v392, %v406
    %v416 = vadd.f32 %v393, %v406
    %v417 = vadd.f32 %v394, %v406
    %v418 = vadd.f32 %v395, %v406
    %v419 = vadd.f32 %v396, %v406
    %v420 = vadd.f32 %v397, %v406
    %v421 = vadd.f32 %v398, %v406
    %v422 = vadd.f32 %v399, %v406
    %v423 = vadd.f32 %v400, %v406
    %v424 = vsel %vm120, 1, 0
    %v425 = vsel %vm121, 1, 0
    %v426 = vsel %vm122, 1, 0
    %v427 = vsel %vm123, 1, 0
    %v428 = vsel %vm124, 1, 0
    %v429 = vsel %vm125, 1, 0
    %v430 = vsel %vm126, 1, 0
    %v431 = vsel %vm127, 1, 0
    %v432 = vsel %vm128, 1, 0
    %v433 = vsel %vm129, 1, 0
    %v434 = vsel %vm130, 1, 0
    %v435 = vsel %vm131, 1, 0
    %v436 = vsel %vm132, 1, 0
    %v437 = vsel %vm133, 1, 0
    %v438 = vsel %vm134, 1, 0
    %v439 = vsel %vm135, 1, 0
    %vm440 = vcmp.eq.s32.totalorder %v424, 1
    %vm441 = vcmp.eq.s32.totalorder %v425, 1
    %vm442 = vcmp.eq.s32.totalorder %v426, 1
    %vm443 = vcmp.eq.s32.totalorder %v427, 1
    %vm444 = vcmp.eq.s32.totalorder %v428, 1
    %vm445 = vcmp.eq.s32.totalorder %v429, 1
    %vm446 = vcmp.eq.s32.totalorder %v430, 1
    %vm447 = vcmp.eq.s32.totalorder %v431, 1
    %vm448 = vcmp.eq.s32.totalorder %v432, 1
    %vm449 = vcmp.eq.s32.totalorder %v433, 1
    %vm450 = vcmp.eq.s32.totalorder %v434, 1
    %vm451 = vcmp.eq.s32.totalorder %v435, 1
    %vm452 = vcmp.eq.s32.totalorder %v436, 1
    %vm453 = vcmp.eq.s32.totalorder %v437, 1
    %vm454 = vcmp.eq.s32.totalorder %v438, 1
    %vm455 = vcmp.eq.s32.totalorder %v439, 1
    %v456 = vsel %vm440, %v408, 0.0
    %v457 = vsel %vm441, %v409, 0.0
    %v458 = vsel %vm442, %v410, 0.0
    %v459 = vsel %vm443, %v411, 0.0
    %v460 = vsel %vm444, %v412, 0.0
    %v461 = vsel %vm445, %v413, 0.0
    %v462 = vsel %vm446, %v414, 0.0
    %v463 = vsel %vm447, %v415, 0.0
    %v464 = vsel %vm448, %v416, 0.0
    %v465 = vsel %vm449, %v417, 0.0
    %v466 = vsel %vm450, %v418, 0.0
    %v467 = vsel %vm451, %v419, 0.0
    %v468 = vsel %vm452, %v420, 0.0
    %v469 = vsel %vm453, %v421, 0.0
    %v470 = vsel %vm454, %v422, 0.0
    %v471 = vsel %vm455, %v423, 0.0
    %v472 = vld [vmem:[#allocation7] sm:$0xff]
    %v473 = vld [vmem:[#allocation7 + $0x8] sm:$0xff]
    %v474 = vld [vmem:[#allocation7 + $0x10] sm:$0xff]
    %v475 = vld [vmem:[#allocation7 + $0x18] sm:$0xff]
    %v476 = vld [vmem:[#allocation7 + $0x20] sm:$0xff]
    %v477 = vld [vmem:[#allocation7 + $0x28] sm:$0xff]
    %v478 = vld [vmem:[#allocation7 + $0x30] sm:$0xff]
    %v479 = vld [vmem:[#allocation7 + $0x38] sm:$0xff]
    %v480 = vld [vmem:[#allocation7 + $0x40] sm:$0xff]
    %v481 = vld [vmem:[#allocation7 + $0x48] sm:$0xff]
    %v482 = vld [vmem:[#allocation7 + $0x50] sm:$0xff]
    %v483 = vld [vmem:[#allocation7 + $0x58] sm:$0xff]
    %v484 = vld [vmem:[#allocation7 + $0x60] sm:$0xff]
    %v485 = vld [vmem:[#allocation7 + $0x68] sm:$0xff]
    %v486 = vld [vmem:[#allocation7 + $0x70] sm:$0xff]
    %v487 = vld [vmem:[#allocation7 + $0x78] sm:$0xff]
    %v488 = vld [vmem:[%s5] sm:$0x1]
    %v489 = vld [vmem:[#allocation8] sm:$0xff]
    %v490 = vld [vmem:[#allocation8 + $0x8] sm:$0xff]
    %v491 = vld [vmem:[#allocation8 + $0x10] sm:$0xff]
    %v492 = vld [vmem:[#allocation8 + $0x18] sm:$0xff]
    %v493 = vld [vmem:[#allocation8 + $0x20] sm:$0xff]
    %v494 = vld [vmem:[#allocation8 + $0x28] sm:$0xff]
    %v495 = vld [vmem:[#allocation8 + $0x30] sm:$0xff]
    %v496 = vld [vmem:[#allocation8 + $0x38] sm:$0xff]
    %v497 = vld [vmem:[#allocation8 + $0x40] sm:$0xff]
    %v498 = vld [vmem:[#allocation8 + $0x48] sm:$0xff]
    %v499 = vld [vmem:[#allocation8 + $0x50] sm:$0xff]
    %v500 = vld [vmem:[#allocation8 + $0x58] sm:$0xff]
    %v501 = vld [vmem:[#allocation8 + $0x60] sm:$0xff]
    %v502 = vld [vmem:[#allocation8 + $0x68] sm:$0xff]
    %v503 = vld [vmem:[#allocation8 + $0x70] sm:$0xff]
    %v504 = vld [vmem:[#allocation8 + $0x78] sm:$0xff]
    %v505 = vld [vmem:[%s7] sm:$0x1]
    %v506 = vld [vmem:[#allocation5] sm:$0xff]
    %v507 = vld [vmem:[#allocation5 + $0x8] sm:$0xff]
    %v508 = vld [vmem:[#allocation5 + $0x10] sm:$0xff]
    %v509 = vld [vmem:[#allocation5 + $0x18] sm:$0xff]
    %v510 = vld [vmem:[#allocation5 + $0x20] sm:$0xff]
    %v511 = vld [vmem:[#allocation5 + $0x28] sm:$0xff]
    %v512 = vld [vmem:[#allocation5 + $0x30] sm:$0xff]
    %v513 = vld [vmem:[#allocation5 + $0x38] sm:$0xff]
    %v514 = vld [vmem:[#allocation5 + $0x40] sm:$0xff]
    %v515 = vld [vmem:[#allocation5 + $0x48] sm:$0xff]
    %v516 = vld [vmem:[#allocation5 + $0x50] sm:$0xff]
    %v517 = vld [vmem:[#allocation5 + $0x58] sm:$0xff]
    %v518 = vld [vmem:[#allocation5 + $0x60] sm:$0xff]
    %v519 = vld [vmem:[#allocation5 + $0x68] sm:$0xff]
    %v520 = vld [vmem:[#allocation5 + $0x70] sm:$0xff]
    %v521 = vld [vmem:[#allocation5 + $0x78] sm:$0xff]
    %v522 = vmul.f32 %v456, %v456
    %v523 = vmul.f32 %v457, %v457
    %v524 = vmul.f32 %v458, %v458
    %v525 = vmul.f32 %v459, %v459
    %v526 = vmul.f32 %v460, %v460
    %v527 = vmul.f32 %v461, %v461
    %v528 = vmul.f32 %v462, %v462
    %v529 = vmul.f32 %v463, %v463
    %v530 = vmul.f32 %v464, %v464
    %v531 = vmul.f32 %v465, %v465
    %v532 = vmul.f32 %v466, %v466
    %v533 = vmul.f32 %v467, %v467
    %v534 = vmul.f32 %v468, %v468
    %v535 = vmul.f32 %v469, %v469
    %v536 = vmul.f32 %v470, %v470
    %v537 = vmul.f32 %v471, %v471
    %538 = vadd.xlane.f32.xlu0 %v522
    %v539 = vpop.xlane.xlu0 %538
    %540 = vadd.xlane.f32.xlu0 %v523
    %v541 = vpop.xlane.xlu0 %540
    %542 = vadd.xlane.f32.xlu0 %v524
    %v543 = vpop.xlane.xlu0 %542
    %544 = vadd.xlane.f32.xlu0 %v525
    %v545 = vpop.xlane.xlu0 %544
    %546 = vadd.xlane.f32.xlu0 %v526
    %v547 = vpop.xlane.xlu0 %546
    %548 = vadd.xlane.f32.xlu0 %v527
    %v549 = vpop.xlane.xlu0 %548
    %550 = vadd.xlane.f32.xlu0 %v528
    %v551 = vpop.xlane.xlu0 %550
    %552 = vadd.xlane.f32.xlu0 %v529
    %v553 = vpop.xlane.xlu0 %552
    %554 = vadd.xlane.f32.xlu0 %v530
    %v555 = vpop.xlane.xlu0 %554
    %556 = vadd.xlane.f32.xlu0 %v531
    %v557 = vpop.xlane.xlu0 %556
    %558 = vadd.xlane.f32.xlu0 %v532
    %v559 = vpop.xlane.xlu0 %558
    %560 = vadd.xlane.f32.xlu0 %v533
    %v561 = vpop.xlane.xlu0 %560
    %562 = vadd.xlane.f32.xlu0 %v534
    %v563 = vpop.xlane.xlu0 %562
    %564 = vadd.xlane.f32.xlu0 %v535
    %v565 = vpop.xlane.xlu0 %564
    %566 = vadd.xlane.f32.xlu0 %v536
    %v567 = vpop.xlane.xlu0 %566
    %568 = vadd.xlane.f32.xlu0 %v537
    %v569 = vpop.xlane.xlu0 %568
    %v570 = vrsqrt.pop %v539
    %v571 = vmul.f32 %v539, %v570
    %vm572 = vcmp.eq.f32.partialorder %v539, inf
    %v573 = vsel %vm572, %v539, %v571
    %vm574 = vcmp.eq.f32.partialorder %v539, 0.0
    %v575 = vand.u32 %v539, 2147483648
    %v576 = vsel %vm574, %v575, %v573
    %v577 = vrsqrt.pop %v541
    %v578 = vmul.f32 %v541, %v577
    %vm579 = vcmp.eq.f32.partialorder %v541, inf
    %v580 = vsel %vm579, %v541, %v578
    %vm581 = vcmp.eq.f32.partialorder %v541, 0.0
    %v582 = vand.u32 %v541, 2147483648
    %v583 = vsel %vm581, %v582, %v580
    %v584 = vrsqrt.pop %v543
    %v585 = vmul.f32 %v543, %v584
    %vm586 = vcmp.eq.f32.partialorder %v543, inf
    %v587 = vsel %vm586, %v543, %v585
    %vm588 = vcmp.eq.f32.partialorder %v543, 0.0
    %v589 = vand.u32 %v543, 2147483648
    %v590 = vsel %vm588, %v589, %v587
    %v591 = vrsqrt.pop %v545
    %v592 = vmul.f32 %v545, %v591
    %vm593 = vcmp.eq.f32.partialorder %v545, inf
    %v594 = vsel %vm593, %v545, %v592
    %vm595 = vcmp.eq.f32.partialorder %v545, 0.0
    %v596 = vand.u32 %v545, 2147483648
    %v597 = vsel %vm595, %v596, %v594
    %v598 = vrsqrt.pop %v547
    %v599 = vmul.f32 %v547, %v598
    %vm600 = vcmp.eq.f32.partialorder %v547, inf
    %v601 = vsel %vm600, %v547, %v599
    %vm602 = vcmp.eq.f32.partialorder %v547, 0.0
    %v603 = vand.u32 %v547, 2147483648
    %v604 = vsel %vm602, %v603, %v601
    %v605 = vrsqrt.pop %v549
    %v606 = vmul.f32 %v549, %v605
    %vm607 = vcmp.eq.f32.partialorder %v549, inf
    %v608 = vsel %vm607, %v549, %v606
    %vm609 = vcmp.eq.f32.partialorder %v549, 0.0
    %v610 = vand.u32 %v549, 2147483648
    %v611 = vsel %vm609, %v610, %v608
    %v612 = vrsqrt.pop %v551
    %v613 = vmul.f32 %v551, %v612
    %vm614 = vcmp.eq.f32.partialorder %v551, inf
    %v615 = vsel %vm614, %v551, %v613
    %vm616 = vcmp.eq.f32.partialorder %v551, 0.0
    %v617 = vand.u32 %v551, 2147483648
    %v618 = vsel %vm616, %v617, %v615
    %v619 = vrsqrt.pop %v553
    %v620 = vmul.f32 %v553, %v619
    %vm621 = vcmp.eq.f32.partialorder %v553, inf
    %v622 = vsel %vm621, %v553, %v620
    %vm623 = vcmp.eq.f32.partialorder %v553, 0.0
    %v624 = vand.u32 %v553, 2147483648
    %v625 = vsel %vm623, %v624, %v622
    %v626 = vrsqrt.pop %v555
    %v627 = vmul.f32 %v555, %v626
    %vm628 = vcmp.eq.f32.partialorder %v555, inf
    %v629 = vsel %vm628, %v555, %v627
    %vm630 = vcmp.eq.f32.partialorder %v555, 0.0
    %v631 = vand.u32 %v555, 2147483648
    %v632 = vsel %vm630, %v631, %v629
    %v633 = vrsqrt.pop %v557
    %v634 = vmul.f32 %v557, %v633
    %vm635 = vcmp.eq.f32.partialorder %v557, inf
    %v636 = vsel %vm635, %v557, %v634
    %vm637 = vcmp.eq.f32.partialorder %v557, 0.0
    %v638 = vand.u32 %v557, 2147483648
    %v639 = vsel %vm637, %v638, %v636
    %v640 = vrsqrt.pop %v559
    %v641 = vmul.f32 %v559, %v640
    %vm642 = vcmp.eq.f32.partialorder %v559, inf
    %v643 = vsel %vm642, %v559, %v641
    %vm644 = vcmp.eq.f32.partialorder %v559, 0.0
    %v645 = vand.u32 %v559, 2147483648
    %v646 = vsel %vm644, %v645, %v643
    %v647 = vrsqrt.pop %v561
    %v648 = vmul.f32 %v561, %v647
    %vm649 = vcmp.eq.f32.partialorder %v561, inf
    %v650 = vsel %vm649, %v561, %v648
    %vm651 = vcmp.eq.f32.partialorder %v561, 0.0
    %v652 = vand.u32 %v561, 2147483648
    %v653 = vsel %vm651, %v652, %v650
    %v654 = vrsqrt.pop %v563
    %v655 = vmul.f32 %v563, %v654
    %vm656 = vcmp.eq.f32.partialorder %v563, inf
    %v657 = vsel %vm656, %v563, %v655
    %vm658 = vcmp.eq.f32.partialorder %v563, 0.0
    %v659 = vand.u32 %v563, 2147483648
    %v660 = vsel %vm658, %v659, %v657
    %v661 = vrsqrt.pop %v565
    %v662 = vmul.f32 %v565, %v661
    %vm663 = vcmp.eq.f32.partialorder %v565, inf
    %v664 = vsel %vm663, %v565, %v662
    %vm665 = vcmp.eq.f32.partialorder %v565, 0.0
    %v666 = vand.u32 %v565, 2147483648
    %v667 = vsel %vm665, %v666, %v664
    %v668 = vrsqrt.pop %v567
    %v669 = vmul.f32 %v567, %v668
    %vm670 = vcmp.eq.f32.partialorder %v567, inf
    %v671 = vsel %vm670, %v567, %v669
    %vm672 = vcmp.eq.f32.partialorder %v567, 0.0
    %v673 = vand.u32 %v567, 2147483648
    %v674 = vsel %vm672, %v673, %v671
    %v675 = vrsqrt.pop %v569
    %v676 = vmul.f32 %v569, %v675
    %vm677 = vcmp.eq.f32.partialorder %v569, inf
    %v678 = vsel %vm677, %v569, %v676
    %vm679 = vcmp.eq.f32.partialorder %v569, 0.0
    %v680 = vand.u32 %v569, 2147483648
    %v681 = vsel %vm679, %v680, %v678
    %v682 = vmax.f32 %v576, 1e-08
    %v683 = vmax.f32 %v583, 1e-08
    %v684 = vmax.f32 %v590, 1e-08
    %v685 = vmax.f32 %v597, 1e-08
    %v686 = vmax.f32 %v604, 1e-08
    %v687 = vmax.f32 %v611, 1e-08
    %v688 = vmax.f32 %v618, 1e-08
    %v689 = vmax.f32 %v625, 1e-08
    %v690 = vmax.f32 %v632, 1e-08
    %v691 = vmax.f32 %v639, 1e-08
    %v692 = vmax.f32 %v646, 1e-08
    %v693 = vmax.f32 %v653, 1e-08
    %v694 = vmax.f32 %v660, 1e-08
    %v695 = vmax.f32 %v667, 1e-08
    %v696 = vmax.f32 %v674, 1e-08
    %v697 = vmax.f32 %v681, 1e-08
    %v698 = vrcp.pop %v682
    %v699 = vmul.f32 %v456, %v698
    %v700 = vrcp.pop %v683
    %v701 = vmul.f32 %v457, %v700
    %v702 = vrcp.pop %v684
    %v703 = vmul.f32 %v458, %v702
    %v704 = vrcp.pop %v685
    %v705 = vmul.f32 %v459, %v704
    %v706 = vrcp.pop %v686
    %v707 = vmul.f32 %v460, %v706
    %v708 = vrcp.pop %v687
    %v709 = vmul.f32 %v461, %v708
    %v710 = vrcp.pop %v688
    %v711 = vmul.f32 %v462, %v710
    %v712 = vrcp.pop %v689
    %v713 = vmul.f32 %v463, %v712
    %v714 = vrcp.pop %v690
    %v715 = vmul.f32 %v464, %v714
    %v716 = vrcp.pop %v691
    %v717 = vmul.f32 %v465, %v716
    %v718 = vrcp.pop %v692
    %v719 = vmul.f32 %v466, %v718
    %v720 = vrcp.pop %v693
    %v721 = vmul.f32 %v467, %v720
    %v722 = vrcp.pop %v694
    %v723 = vmul.f32 %v468, %v722
    %v724 = vrcp.pop %v695
    %v725 = vmul.f32 %v469, %v724
    %v726 = vrcp.pop %v696
    %v727 = vmul.f32 %v470, %v726
    %v728 = vrcp.pop %v697
    %v729 = vmul.f32 %v471, %v728
    %730 = vmatprep.subr.mxu0 0.0
    %731 = vmatpush1.xpose.msra.mxu0 %v699
    %732 = vmatprep.subr.mxu0 0.0
    %733 = vmatpush1.xpose.msra.mxu0 %v701
    %734 = vmatprep.subr.mxu0 0.0
    %735 = vmatpush1.xpose.msra.mxu0 %v703
    %736 = vmatprep.subr.mxu0 0.0
    %737 = vmatpush1.xpose.msra.mxu0 %v705
    %738 = vmatprep.subr.mxu0 0.0
    %739 = vmatpush1.xpose.msra.mxu0 %v707
    %740 = vmatprep.subr.mxu0 0.0
    %741 = vmatpush1.xpose.msra.mxu0 %v709
    %742 = vmatprep.subr.mxu0 0.0
    %743 = vmatpush1.xpose.msra.mxu0 %v711
    %744 = vmatprep.subr.mxu0 0.0
    %745 = vmatpush1.xpose.msra.mxu0 %v713
    %746 = vmatprep.subr.mxu0 0.0
    %747 = vmatpush1.xpose.msra.mxu0 %v715
    %748 = vmatprep.subr.mxu0 0.0
    %749 = vmatpush1.xpose.msra.mxu0 %v717
    %750 = vmatprep.subr.mxu0 0.0
    %751 = vmatpush1.xpose.msra.mxu0 %v719
    %752 = vmatprep.subr.mxu0 0.0
    %753 = vmatpush1.xpose.msra.mxu0 %v721
    %754 = vmatprep.subr.mxu0 0.0
    %755 = vmatpush1.xpose.msra.mxu0 %v723
    %756 = vmatprep.subr.mxu0 0.0
    %757 = vmatpush1.xpose.msra.mxu0 %v725
    %758 = vmatprep.subr.mxu0 0.0
    %759 = vmatpush1.xpose.msra.mxu0 %v727
    %760 = vmatprep.subr.mxu0 0.0
    %761 = vmatpush1.xpose.msra.mxu0 %v729
    %762 = vmatprep.subr.mxu0 0.0
    %763 = vmatpush1.xpose.msra.mxu0 0.0
    %764 = vmatprep.subr.mxu0 0.0
    %765 = vmatpush1.xpose.msra.mxu0 0.0
    %766 = vmatprep.subr.mxu0 0.0
    %767 = vmatpush1.xpose.msra.mxu0 0.0
    %768 = vmatprep.subr.mxu0 0.0
    %769 = vmatpush1.xpose.msra.mxu0 0.0
    %770 = vmatprep.subr.mxu0 0.0
    %771 = vmatpush1.xpose.msra.mxu0 0.0
    %772 = vmatprep.subr.mxu0 0.0
    %773 = vmatpush1.xpose.msra.mxu0 0.0
    %774 = vmatprep.subr.mxu0 0.0
    %775 = vmatpush1.xpose.msra.mxu0 0.0
    %776 = vmatprep.subr.mxu0 0.0
    %777 = vmatpush1.xpose.msra.mxu0 0.0
    %778 = vmatprep.subr.mxu0 0.0
    %779 = vmatpush1.xpose.msra.mxu0 0.0
    %780 = vmatprep.subr.mxu0 0.0
    %781 = vmatpush1.xpose.msra.mxu0 0.0
    %782 = vmatprep.subr.mxu0 0.0
    %783 = vmatpush1.xpose.msra.mxu0 0.0
    %784 = vmatprep.subr.mxu0 0.0
    %785 = vmatpush1.xpose.msra.mxu0 0.0
    %786 = vmatprep.subr.mxu0 0.0
    %787 = vmatpush1.xpose.msra.mxu0 0.0
    %788 = vmatprep.subr.mxu0 0.0
    %789 = vmatpush1.xpose.msra.mxu0 0.0
    %790 = vmatprep.subr.mxu0 0.0
    %791 = vmatpush1.xpose.msra.mxu0 0.0
    %792 = vmatprep.subr.mxu0 0.0
    %793 = vmatpush1.xpose.msra.mxu0 0.0
    %794 = vmatprep.mubr.f32.mxu0 0.0
    %795 = vmatmul.mubr.f32.gmra.mrb[0].mxu0 %v699
    %v796 = vpop.f32.mrb[0].mxu0
    %v797 = vadd.f32 0.0, %v796
    %v798 = vpop.f32.mrb[0].mxu0
    %799 = vmatprep.mubr.f32.mxu0 0.0
    %800 = vmatmul.mubr.f32.gmra.mrb[0].mxu0 %v701
    %v801 = vpop.f32.mrb[0].mxu0
    %v802 = vadd.f32 0.0, %v801
    %v803 = vpop.f32.mrb[0].mxu0
    %804 = vmatprep.mubr.f32.mxu0 0.0
    %805 = vmatmul.mubr.f32.gmra.mrb[0].mxu0 %v703
    %v806 = vpop.f32.mrb[0].mxu0
    %v807 = vadd.f32 0.0, %v806
    %v808 = vpop.f32.mrb[0].mxu0
    %809 = vmatprep.mubr.f32.mxu0 0.0
    %810 = vmatmul.mubr.f32.gmra.mrb[0].mxu0 %v705
    %v811 = vpop.f32.mrb[0].mxu0
    %v812 = vadd.f32 0.0, %v811
    %v813 = vpop.f32.mrb[0].mxu0
    %814 = vmatprep.mubr.f32.mxu0 0.0
    %815 = vmatmul.mubr.f32.gmra.mrb[0].mxu0 %v707
    %v816 = vpop.f32.mrb[0].mxu0
    %v817 = vadd.f32 0.0, %v816
    %v818 = vpop.f32.mrb[0].mxu0
    %819 = vmatprep.mubr.f32.mxu0 0.0
    %820 = vmatmul.mubr.f32.gmra.mrb[0].mxu0 %v709
    %v821 = vpop.f32.mrb[0].mxu0
    %v822 = vadd.f32 0.0, %v821
    %v823 = vpop.f32.mrb[0].mxu0
    %824 = vmatprep.mubr.f32.mxu0 0.0
    %825 = vmatmul.mubr.f32.gmra.mrb[0].mxu0 %v711
    %v826 = vpop.f32.mrb[0].mxu0
    %v827 = vadd.f32 0.0, %v826
    %v828 = vpop.f32.mrb[0].mxu0
    %829 = vmatprep.mubr.f32.mxu0 0.0
    %830 = vmatmul.mubr.f32.gmra.mrb[0].mxu0 %v713
    %v831 = vpop.f32.mrb[0].mxu0
    %v832 = vadd.f32 0.0, %v831
    %v833 = vpop.f32.mrb[0].mxu0
    %834 = vmatprep.mubr.f32.mxu0 0.0
    %835 = vmatmul.mubr.f32.gmra.mrb[0].mxu0 %v715
    %v836 = vpop.f32.mrb[0].mxu0
    %v837 = vadd.f32 0.0, %v836
    %v838 = vpop.f32.mrb[0].mxu0
    %839 = vmatprep.mubr.f32.mxu0 0.0
    %840 = vmatmul.mubr.f32.gmra.mrb[0].mxu0 %v717
    %v841 = vpop.f32.mrb[0].mxu0
    %v842 = vadd.f32 0.0, %v841
    %v843 = vpop.f32.mrb[0].mxu0
    %844 = vmatprep.mubr.f32.mxu0 0.0
    %845 = vmatmul.mubr.f32.gmra.mrb[0].mxu0 %v719
    %v846 = vpop.f32.mrb[0].mxu0
    %v847 = vadd.f32 0.0, %v846
    %v848 = vpop.f32.mrb[0].mxu0
    %849 = vmatprep.mubr.f32.mxu0 0.0
    %850 = vmatmul.mubr.f32.gmra.mrb[0].mxu0 %v721
    %v851 = vpop.f32.mrb[0].mxu0
    %v852 = vadd.f32 0.0, %v851
    %v853 = vpop.f32.mrb[0].mxu0
    %854 = vmatprep.mubr.f32.mxu0 0.0
    %855 = vmatmul.mubr.f32.gmra.mrb[0].mxu0 %v723
    %v856 = vpop.f32.mrb[0].mxu0
    %v857 = vadd.f32 0.0, %v856
    %v858 = vpop.f32.mrb[0].mxu0
    %859 = vmatprep.mubr.f32.mxu0 0.0
    %860 = vmatmul.mubr.f32.gmra.mrb[0].mxu0 %v725
    %v861 = vpop.f32.mrb[0].mxu0
    %v862 = vadd.f32 0.0, %v861
    %v863 = vpop.f32.mrb[0].mxu0
    %864 = vmatprep.mubr.f32.mxu0 0.0
    %865 = vmatmul.mubr.f32.gmra.mrb[0].mxu0 %v727
    %v866 = vpop.f32.mrb[0].mxu0
    %v867 = vadd.f32 0.0, %v866
    %v868 = vpop.f32.mrb[0].mxu0
    %869 = vmatprep.mubr.f32.mxu0 0.0
    %870 = vmatmul.mubr.f32.gmra.mrb[0].mxu0 %v729
    %v871 = vpop.f32.mrb[0].mxu0
    %v872 = vadd.f32 0.0, %v871
    %v873 = vpop.f32.mrb[0].mxu0
    %874 = vdwg.mxu0
    %vm875 = vcmp.gt.f32.partialorder %v506, 0.0
    %vm876 = vcmp.gt.f32.partialorder %v507, 0.0
    %vm877 = vcmp.gt.f32.partialorder %v508, 0.0
    %vm878 = vcmp.gt.f32.partialorder %v509, 0.0
    %vm879 = vcmp.gt.f32.partialorder %v510, 0.0
    %vm880 = vcmp.gt.f32.partialorder %v511, 0.0
    %vm881 = vcmp.gt.f32.partialorder %v512, 0.0
    %vm882 = vcmp.gt.f32.partialorder %v513, 0.0
    %vm883 = vcmp.gt.f32.partialorder %v514, 0.0
    %vm884 = vcmp.gt.f32.partialorder %v515, 0.0
    %vm885 = vcmp.gt.f32.partialorder %v516, 0.0
    %vm886 = vcmp.gt.f32.partialorder %v517, 0.0
    %vm887 = vcmp.gt.f32.partialorder %v518, 0.0
    %vm888 = vcmp.gt.f32.partialorder %v519, 0.0
    %vm889 = vcmp.gt.f32.partialorder %v520, 0.0
    %vm890 = vcmp.gt.f32.partialorder %v521, 0.0
    %vm891 = vcmp.ge.f32.partialorder %v797, 0.1
    %vm892 = vcmp.ge.f32.partialorder %v802, 0.1
    %vm893 = vcmp.ge.f32.partialorder %v807, 0.1
    %vm894 = vcmp.ge.f32.partialorder %v812, 0.1
    %vm895 = vcmp.ge.f32.partialorder %v817, 0.1
    %vm896 = vcmp.ge.f32.partialorder %v822, 0.1
    %vm897 = vcmp.ge.f32.partialorder %v827, 0.1
    %vm898 = vcmp.ge.f32.partialorder %v832, 0.1
    %vm899 = vcmp.ge.f32.partialorder %v837, 0.1
    %vm900 = vcmp.ge.f32.partialorder %v842, 0.1
    %vm901 = vcmp.ge.f32.partialorder %v847, 0.1
    %vm902 = vcmp.ge.f32.partialorder %v852, 0.1
    %vm903 = vcmp.ge.f32.partialorder %v857, 0.1
    %vm904 = vcmp.ge.f32.partialorder %v862, 0.1
    %vm905 = vcmp.ge.f32.partialorder %v867, 0.1
    %vm906 = vcmp.ge.f32.partialorder %v872, 0.1
    %vm907 = vmor %vm104, %vm891
    %vm908 = vmor %vm105, %vm892
    %vm909 = vmor %vm106, %vm893
    %vm910 = vmor %vm107, %vm894
    %vm911 = vmor %vm108, %vm895
    %vm912 = vmor %vm109, %vm896
    %vm913 = vmor %vm110, %vm897
    %vm914 = vmor %vm111, %vm898
    %vm915 = vmor %vm112, %vm899
    %vm916 = vmor %vm113, %vm900
    %vm917 = vmor %vm114, %vm901
    %vm918 = vmor %vm115, %vm902
    %vm919 = vmor %vm116, %vm903
    %vm920 = vmor %vm117, %vm904
    %vm921 = vmor %vm118, %vm905
    %vm922 = vmor %vm119, %vm906
    %vm923 = vmand %vm875, %vm907
    %vm924 = vmand %vm876, %vm908
    %vm925 = vmand %vm877, %vm909
    %vm926 = vmand %vm878, %vm910
    %vm927 = vmand %vm879, %vm911
    %vm928 = vmand %vm880, %vm912
    %vm929 = vmand %vm881, %vm913
    %vm930 = vmand %vm882, %vm914
    %vm931 = vmand %vm883, %vm915
    %vm932 = vmand %vm884, %vm916
    %vm933 = vmand %vm885, %vm917
    %vm934 = vmand %vm886, %vm918
    %vm935 = vmand %vm887, %vm919
    %vm936 = vmand %vm888, %vm920
    %vm937 = vmand %vm889, %vm921
    %vm938 = vmand %vm890, %vm922
    %vm939 = vmxor %vm104, 1
    %vm940 = vmxor %vm105, 1
    %vm941 = vmxor %vm106, 1
    %vm942 = vmxor %vm107, 1
    %vm943 = vmxor %vm108, 1
    %vm944 = vmxor %vm109, 1
    %vm945 = vmxor %vm110, 1
    %vm946 = vmxor %vm111, 1
    %vm947 = vmxor %vm112, 1
    %vm948 = vmxor %vm113, 1
    %vm949 = vmxor %vm114, 1
    %vm950 = vmxor %vm115, 1
    %vm951 = vmxor %vm116, 1
    %vm952 = vmxor %vm117, 1
    %vm953 = vmxor %vm118, 1
    %vm954 = vmxor %vm119, 1
    %vm955 = vmand %vm923, %vm939
    %vm956 = vmand %vm924, %vm940
    %vm957 = vmand %vm925, %vm941
    %vm958 = vmand %vm926, %vm942
    %vm959 = vmand %vm927, %vm943
    %vm960 = vmand %vm928, %vm944
    %vm961 = vmand %vm929, %vm945
    %vm962 = vmand %vm930, %vm946
    %vm963 = vmand %vm931, %vm947
    %vm964 = vmand %vm932, %vm948
    %vm965 = vmand %vm933, %vm949
    %vm966 = vmand %vm934, %vm950
    %vm967 = vmand %vm935, %vm951
    %vm968 = vmand %vm936, %vm952
    %vm969 = vmand %vm937, %vm953
    %vm970 = vmand %vm938, %vm954
    %v971 = vsel %vm955, %v797, 0.0
    %v972 = vsel %vm956, %v802, 0.0
    %v973 = vsel %vm957, %v807, 0.0
    %v974 = vsel %vm958, %v812, 0.0
    %v975 = vsel %vm959, %v817, 0.0
    %v976 = vsel %vm960, %v822, 0.0
    %v977 = vsel %vm961, %v827, 0.0
    %v978 = vsel %vm962, %v832, 0.0
    %v979 = vsel %vm963, %v837, 0.0
    %v980 = vsel %vm964, %v842, 0.0
    %v981 = vsel %vm965, %v847, 0.0
    %v982 = vsel %vm966, %v852, 0.0
    %v983 = vsel %vm967, %v857, 0.0
    %v984 = vsel %vm968, %v862, 0.0
    %v985 = vsel %vm969, %v867, 0.0
    %v986 = vsel %vm970, %v872, 0.0
    %987 = vadd.xlane.f32.xlu0 %v971
    %v988 = vpop.xlane.xlu0 %987
    %989 = vadd.xlane.f32.xlu0 %v972
    %v990 = vpop.xlane.xlu0 %989
    %991 = vadd.xlane.f32.xlu0 %v973
    %v992 = vpop.xlane.xlu0 %991
    %993 = vadd.xlane.f32.xlu0 %v974
    %v994 = vpop.xlane.xlu0 %993
    %995 = vadd.xlane.f32.xlu0 %v975
    %v996 = vpop.xlane.xlu0 %995
    %997 = vadd.xlane.f32.xlu0 %v976
    %v998 = vpop.xlane.xlu0 %997
    %999 = vadd.xlane.f32.xlu0 %v977
    %v1000 = vpop.xlane.xlu0 %999
    %1001 = vadd.xlane.f32.xlu0 %v978
    %v1002 = vpop.xlane.xlu0 %1001
    %1003 = vadd.xlane.f32.xlu0 %v979
    %v1004 = vpop.xlane.xlu0 %1003
    %1005 = vadd.xlane.f32.xlu0 %v980
    %v1006 = vpop.xlane.xlu0 %1005
    %1007 = vadd.xlane.f32.xlu0 %v981
    %v1008 = vpop.xlane.xlu0 %1007
    %1009 = vadd.xlane.f32.xlu0 %v982
    %v1010 = vpop.xlane.xlu0 %1009
    %1011 = vadd.xlane.f32.xlu0 %v983
    %v1012 = vpop.xlane.xlu0 %1011
    %1013 = vadd.xlane.f32.xlu0 %v984
    %v1014 = vpop.xlane.xlu0 %1013
    %1015 = vadd.xlane.f32.xlu0 %v985
    %v1016 = vpop.xlane.xlu0 %1015
    %1017 = vadd.xlane.f32.xlu0 %v986
    %v1018 = vpop.xlane.xlu0 %1017
    %vm1019 = vcmp.gt.f32.partialorder %v988, 0.0
    %vm1020 = vcmp.gt.f32.partialorder %v990, 0.0
    %vm1021 = vcmp.gt.f32.partialorder %v992, 0.0
    %vm1022 = vcmp.gt.f32.partialorder %v994, 0.0
    %vm1023 = vcmp.gt.f32.partialorder %v996, 0.0
    %vm1024 = vcmp.gt.f32.partialorder %v998, 0.0
    %vm1025 = vcmp.gt.f32.partialorder %v1000, 0.0
    %vm1026 = vcmp.gt.f32.partialorder %v1002, 0.0
    %vm1027 = vcmp.gt.f32.partialorder %v1004, 0.0
    %vm1028 = vcmp.gt.f32.partialorder %v1006, 0.0
    %vm1029 = vcmp.gt.f32.partialorder %v1008, 0.0
    %vm1030 = vcmp.gt.f32.partialorder %v1010, 0.0
    %vm1031 = vcmp.gt.f32.partialorder %v1012, 0.0
    %vm1032 = vcmp.gt.f32.partialorder %v1014, 0.0
    %vm1033 = vcmp.gt.f32.partialorder %v1016, 0.0
    %vm1034 = vcmp.gt.f32.partialorder %v1018, 0.0
    %v1035 = vrsqrt.pop %v988
    %v1036 = vrsqrt.pop %v990
    %v1037 = vrsqrt.pop %v992
    %v1038 = vrsqrt.pop %v994
    %v1039 = vrsqrt.pop %v996
    %v1040 = vrsqrt.pop %v998
    %v1041 = vrsqrt.pop %v1000
    %v1042 = vrsqrt.pop %v1002
    %v1043 = vrsqrt.pop %v1004
    %v1044 = vrsqrt.pop %v1006
    %v1045 = vrsqrt.pop %v1008
    %v1046 = vrsqrt.pop %v1010
    %v1047 = vrsqrt.pop %v1012
    %v1048 = vrsqrt.pop %v1014
    %v1049 = vrsqrt.pop %v1016
    %v1050 = vrsqrt.pop %v1018
    %v1051 = vsel %vm1019, %v1035, 0.0
    %v1052 = vsel %vm1020, %v1036, 0.0
    %v1053 = vsel %vm1021, %v1037, 0.0
    %v1054 = vsel %vm1022, %v1038, 0.0
    %v1055 = vsel %vm1023, %v1039, 0.0
    %v1056 = vsel %vm1024, %v1040, 0.0
    %v1057 = vsel %vm1025, %v1041, 0.0
    %v1058 = vsel %vm1026, %v1042, 0.0
    %v1059 = vsel %vm1027, %v1043, 0.0
    %v1060 = vsel %vm1028, %v1044, 0.0
    %v1061 = vsel %vm1029, %v1045, 0.0
    %v1062 = vsel %vm1030, %v1046, 0.0
    %v1063 = vsel %vm1031, %v1047, 0.0
    %v1064 = vsel %vm1032, %v1048, 0.0
    %v1065 = vsel %vm1033, %v1049, 0.0
    %v1066 = vsel %vm1034, %v1050, 0.0
    %v1067 = vadd.f32 %v971, %v972
    %v1068 = vadd.f32 %v1067, %v973
    %v1069 = vadd.f32 %v1068, %v974
    %v1070 = vadd.f32 %v1069, %v975
    %v1071 = vadd.f32 %v1070, %v976
    %v1072 = vadd.f32 %v1071, %v977
    %v1073 = vadd.f32 %v1072, %v978
    %v1074 = vadd.f32 %v1073, %v979
    %v1075 = vadd.f32 %v1074, %v980
    %v1076 = vadd.f32 %v1075, %v981
    %v1077 = vadd.f32 %v1076, %v982
    %v1078 = vadd.f32 %v1077, %v983
    %v1079 = vadd.f32 %v1078, %v984
    %v1080 = vadd.f32 %v1079, %v985
    %v1081 = vadd.f32 %v1080, %v986
    %v1082 = vrot.slane %v1081, 4
    %v1083 = vadd.f32 %v1081, %v1082
    %v1084 = vrot.slane %v1083, 2
    %v1085 = vadd.f32 %v1083, %v1084
    %v1086 = vrot.slane %v1085, 1
    %v1087 = vadd.f32 %v1085, %v1086
    %vm1088 = vcmp.gt.f32.partialorder %v1087, 0.0
    %v1089 = vrsqrt.pop %v1087
    %v1090 = vsel %vm1088, %v1089, 0.0
    %v1091 = vmul.f32 %v1051, %v971
    %v1092 = vmul.f32 %v1052, %v972
    %v1093 = vmul.f32 %v1053, %v973
    %v1094 = vmul.f32 %v1054, %v974
    %v1095 = vmul.f32 %v1055, %v975
    %v1096 = vmul.f32 %v1056, %v976
    %v1097 = vmul.f32 %v1057, %v977
    %v1098 = vmul.f32 %v1058, %v978
    %v1099 = vmul.f32 %v1059, %v979
    %v1100 = vmul.f32 %v1060, %v980
    %v1101 = vmul.f32 %v1061, %v981
    %v1102 = vmul.f32 %v1062, %v982
    %v1103 = vmul.f32 %v1063, %v983
    %v1104 = vmul.f32 %v1064, %v984
    %v1105 = vmul.f32 %v1065, %v985
    %v1106 = vmul.f32 %v1066, %v986
    %v1107 = vmul.f32 %v1091, %v1090
    %v1108 = vmul.f32 %v1092, %v1090
    %v1109 = vmul.f32 %v1093, %v1090
    %v1110 = vmul.f32 %v1094, %v1090
    %v1111 = vmul.f32 %v1095, %v1090
    %v1112 = vmul.f32 %v1096, %v1090
    %v1113 = vmul.f32 %v1097, %v1090
    %v1114 = vmul.f32 %v1098, %v1090
    %v1115 = vmul.f32 %v1099, %v1090
    %v1116 = vmul.f32 %v1100, %v1090
    %v1117 = vmul.f32 %v1101, %v1090
    %v1118 = vmul.f32 %v1102, %v1090
    %v1119 = vmul.f32 %v1103, %v1090
    %v1120 = vmul.f32 %v1104, %v1090
    %v1121 = vmul.f32 %v1105, %v1090
    %v1122 = vmul.f32 %v1106, %v1090
    %v1123 = vsel %vm923, 1, 0
    %v1124 = vsel %vm924, 1, 0
    %v1125 = vsel %vm925, 1, 0
    %v1126 = vsel %vm926, 1, 0
    %v1127 = vsel %vm927, 1, 0
    %v1128 = vsel %vm928, 1, 0
    %v1129 = vsel %vm929, 1, 0
    %v1130 = vsel %vm930, 1, 0
    %v1131 = vsel %vm931, 1, 0
    %v1132 = vsel %vm932, 1, 0
    %v1133 = vsel %vm933, 1, 0
    %v1134 = vsel %vm934, 1, 0
    %v1135 = vsel %vm935, 1, 0
    %v1136 = vsel %vm936, 1, 0
    %v1137 = vsel %vm937, 1, 0
    %v1138 = vsel %vm938, 1, 0
    %v1139 = vcvt.s32.f32 %v1123
    %v1140 = vcvt.s32.f32 %v1124
    %v1141 = vcvt.s32.f32 %v1125
    %v1142 = vcvt.s32.f32 %v1126
    %v1143 = vcvt.s32.f32 %v1127
    %v1144 = vcvt.s32.f32 %v1128
    %v1145 = vcvt.s32.f32 %v1129
    %v1146 = vcvt.s32.f32 %v1130
    %v1147 = vcvt.s32.f32 %v1131
    %v1148 = vcvt.s32.f32 %v1132
    %v1149 = vcvt.s32.f32 %v1133
    %v1150 = vcvt.s32.f32 %v1134
    %v1151 = vcvt.s32.f32 %v1135
    %v1152 = vcvt.s32.f32 %v1136
    %v1153 = vcvt.s32.f32 %v1137
    %v1154 = vcvt.s32.f32 %v1138
    %v1155 = vadd.f32 %v1139, %v1140
    %v1156 = vadd.f32 %v1155, %v1141
    %v1157 = vadd.f32 %v1156, %v1142
    %v1158 = vadd.f32 %v1157, %v1143
    %v1159 = vadd.f32 %v1158, %v1144
    %v1160 = vadd.f32 %v1159, %v1145
    %v1161 = vadd.f32 %v1160, %v1146
    %v1162 = vadd.f32 %v1161, %v1147
    %v1163 = vadd.f32 %v1162, %v1148
    %v1164 = vadd.f32 %v1163, %v1149
    %v1165 = vadd.f32 %v1164, %v1150
    %v1166 = vadd.f32 %v1165, %v1151
    %v1167 = vadd.f32 %v1166, %v1152
    %v1168 = vadd.f32 %v1167, %v1153
    %v1169 = vadd.f32 %v1168, %v1154
    %v1170 = vrot.slane %v1169, 4
    %v1171 = vadd.f32 %v1169, %v1170
    %v1172 = vrot.slane %v1171, 2
    %v1173 = vadd.f32 %v1171, %v1172
    %v1174 = vrot.slane %v1173, 1
    %v1175 = vadd.f32 %v1173, %v1174
    %v1176 = vadd.f32 %v1175, 1.0
    %v1177 = vrcp.pop %v1176
    %v1178 = vmul.f32 1.0, %v1177
    %v1179 = vsel %vm136, %v1178, %v1107
    %v1180 = vsel %vm137, %v1178, %v1108
    %v1181 = vsel %vm138, %v1178, %v1109
    %v1182 = vsel %vm139, %v1178, %v1110
    %v1183 = vsel %vm140, %v1178, %v1111
    %v1184 = vsel %vm141, %v1178, %v1112
    %v1185 = vsel %vm142, %v1178, %v1113
    %v1186 = vsel %vm143, %v1178, %v1114
    %v1187 = vsel %vm144, %v1178, %v1115
    %v1188 = vsel %vm145, %v1178, %v1116
    %v1189 = vsel %vm146, %v1178, %v1117
    %v1190 = vsel %vm147, %v1178, %v1118
    %v1191 = vsel %vm148, %v1178, %v1119
    %v1192 = vsel %vm149, %v1178, %v1120
    %v1193 = vsel %vm150, %v1178, %v1121
    %v1194 = vsel %vm151, %v1178, %v1122
    %v1195 = vmul.f32 %v1179, 1.442695
    %v1196 = vpow.pop %v1195
    %v1197 = vmul.f32 %v1180, 1.442695
    %v1198 = vpow.pop %v1197
    %v1199 = vmul.f32 %v1181, 1.442695
    %v1200 = vpow.pop %v1199
    %v1201 = vmul.f32 %v1182, 1.442695
    %v1202 = vpow.pop %v1201
    %v1203 = vmul.f32 %v1183, 1.442695
    %v1204 = vpow.pop %v1203
    %v1205 = vmul.f32 %v1184, 1.442695
    %v1206 = vpow.pop %v1205
    %v1207 = vmul.f32 %v1185, 1.442695
    %v1208 = vpow.pop %v1207
    %v1209 = vmul.f32 %v1186, 1.442695
    %v1210 = vpow.pop %v1209
    %v1211 = vmul.f32 %v1187, 1.442695
    %v1212 = vpow.pop %v1211
    %v1213 = vmul.f32 %v1188, 1.442695
    %v1214 = vpow.pop %v1213
    %v1215 = vmul.f32 %v1189, 1.442695
    %v1216 = vpow.pop %v1215
    %v1217 = vmul.f32 %v1190, 1.442695
    %v1218 = vpow.pop %v1217
    %v1219 = vmul.f32 %v1191, 1.442695
    %v1220 = vpow.pop %v1219
    %v1221 = vmul.f32 %v1192, 1.442695
    %v1222 = vpow.pop %v1221
    %v1223 = vmul.f32 %v1193, 1.442695
    %v1224 = vpow.pop %v1223
    %v1225 = vmul.f32 %v1194, 1.442695
    %v1226 = vpow.pop %v1225
    %vm1227 = vmor %vm955, %vm136
    %vm1228 = vmor %vm956, %vm137
    %vm1229 = vmor %vm957, %vm138
    %vm1230 = vmor %vm958, %vm139
    %vm1231 = vmor %vm959, %vm140
    %vm1232 = vmor %vm960, %vm141
    %vm1233 = vmor %vm961, %vm142
    %vm1234 = vmor %vm962, %vm143
    %vm1235 = vmor %vm963, %vm144
    %vm1236 = vmor %vm964, %vm145
    %vm1237 = vmor %vm965, %vm146
    %vm1238 = vmor %vm966, %vm147
    %vm1239 = vmor %vm967, %vm148
    %vm1240 = vmor %vm968, %vm149
    %vm1241 = vmor %vm969, %vm150
    %vm1242 = vmor %vm970, %vm151
    %v1243 = vsel %vm1227, %v1196, 0.0
    %v1244 = vsel %vm1228, %v1198, 0.0
    %v1245 = vsel %vm1229, %v1200, 0.0
    %v1246 = vsel %vm1230, %v1202, 0.0
    %v1247 = vsel %vm1231, %v1204, 0.0
    %v1248 = vsel %vm1232, %v1206, 0.0
    %v1249 = vsel %vm1233, %v1208, 0.0
    %v1250 = vsel %vm1234, %v1210, 0.0
    %v1251 = vsel %vm1235, %v1212, 0.0
    %v1252 = vsel %vm1236, %v1214, 0.0
    %v1253 = vsel %vm1237, %v1216, 0.0
    %v1254 = vsel %vm1238, %v1218, 0.0
    %v1255 = vsel %vm1239, %v1220, 0.0
    %v1256 = vsel %vm1240, %v1222, 0.0
    %v1257 = vsel %vm1241, %v1224, 0.0
    %v1258 = vsel %vm1242, %v1226, 0.0
    %1259 = vmatprep.subr.mxu0 0.0
    %1260 = vmatpush1.msra.mxu0 %v472
    %1261 = vmatprep.subr.mxu0 0.0
    %1262 = vmatpush1.msra.mxu0 %v473
    %1263 = vmatprep.subr.mxu0 0.0
    %1264 = vmatpush1.msra.mxu0 %v474
    %1265 = vmatprep.subr.mxu0 0.0
    %1266 = vmatpush1.msra.mxu0 %v475
    %1267 = vmatprep.subr.mxu0 0.0
    %1268 = vmatpush1.msra.mxu0 %v476
    %1269 = vmatprep.subr.mxu0 0.0
    %1270 = vmatpush1.msra.mxu0 %v477
    %1271 = vmatprep.subr.mxu0 0.0
    %1272 = vmatpush1.msra.mxu0 %v478
    %1273 = vmatprep.subr.mxu0 0.0
    %1274 = vmatpush1.msra.mxu0 %v479
    %1275 = vmatprep.subr.mxu0 0.0
    %1276 = vmatpush1.msra.mxu0 %v480
    %1277 = vmatprep.subr.mxu0 0.0
    %1278 = vmatpush1.msra.mxu0 %v481
    %1279 = vmatprep.subr.mxu0 0.0
    %1280 = vmatpush1.msra.mxu0 %v482
    %1281 = vmatprep.subr.mxu0 0.0
    %1282 = vmatpush1.msra.mxu0 %v483
    %1283 = vmatprep.subr.mxu0 0.0
    %1284 = vmatpush1.msra.mxu0 %v484
    %1285 = vmatprep.subr.mxu0 0.0
    %1286 = vmatpush1.msra.mxu0 %v485
    %1287 = vmatprep.subr.mxu0 0.0
    %1288 = vmatpush1.msra.mxu0 %v486
    %1289 = vmatprep.subr.mxu0 0.0
    %1290 = vmatpush1.msra.mxu0 %v487
    %1291 = vmatprep.subr.mxu0 0.0
    %1292 = vmatpush1.msra.mxu0 0.0
    %1293 = vmatprep.subr.mxu0 0.0
    %1294 = vmatpush1.msra.mxu0 0.0
    %1295 = vmatprep.subr.mxu0 0.0
    %1296 = vmatpush1.msra.mxu0 0.0
    %1297 = vmatprep.subr.mxu0 0.0
    %1298 = vmatpush1.msra.mxu0 0.0
    %1299 = vmatprep.subr.mxu0 0.0
    %1300 = vmatpush1.msra.mxu0 0.0
    %1301 = vmatprep.subr.mxu0 0.0
    %1302 = vmatpush1.msra.mxu0 0.0
    %1303 = vmatprep.subr.mxu0 0.0
    %1304 = vmatpush1.msra.mxu0 0.0
    %1305 = vmatprep.subr.mxu0 0.0
    %1306 = vmatpush1.msra.mxu0 0.0
    %1307 = vmatprep.subr.mxu0 0.0
    %1308 = vmatpush1.msra.mxu0 0.0
    %1309 = vmatprep.subr.mxu0 0.0
    %1310 = vmatpush1.msra.mxu0 0.0
    %1311 = vmatprep.subr.mxu0 0.0
    %1312 = vmatpush1.msra.mxu0 0.0
    %1313 = vmatprep.subr.mxu0 0.0
    %1314 = vmatpush1.msra.mxu0 0.0
    %1315 = vmatprep.subr.mxu0 0.0
    %1316 = vmatpush1.msra.mxu0 0.0
    %1317 = vmatprep.subr.mxu0 0.0
    %1318 = vmatpush1.msra.mxu0 0.0
    %1319 = vmatprep.subr.mxu0 0.0
    %1320 = vmatpush1.msra.mxu0 0.0
    %1321 = vmatprep.subr.mxu0 0.0
    %1322 = vmatpush1.msra.mxu0 0.0
    %1323 = vmatprep.mubr.f32.mxu0 0.0
    %1324 = vmatmul.mubr.f32.gmra.mrb[0].mxu0 %v456
    %v1325 = vpop.f32.mrb[0].mxu0
    %v1326 = vadd.f32 0.0, %v1325
    %v1327 = vpop.f32.mrb[0].mxu0
    %1328 = vmatprep.mubr.f32.mxu0 0.0
    %1329 = vmatmul.mubr.f32.gmra.mrb[0].mxu0 %v457
    %v1330 = vpop.f32.mrb[0].mxu0
    %v1331 = vadd.f32 0.0, %v1330
    %v1332 = vpop.f32.mrb[0].mxu0
    %1333 = vmatprep.mubr.f32.mxu0 0.0
    %1334 = vmatmul.mubr.f32.gmra.mrb[0].mxu0 %v458
    %v1335 = vpop.f32.mrb[0].mxu0
    %v1336 = vadd.f32 0.0, %v1335
    %v1337 = vpop.f32.mrb[0].mxu0
    %1338 = vmatprep.mubr.f32.mxu0 0.0
    %1339 = vmatmul.mubr.f32.gmra.mrb[0].mxu0 %v459
    %v1340 = vpop.f32.mrb[0].mxu0
    %v1341 = vadd.f32 0.0, %v1340
    %v1342 = vpop.f32.mrb[0].mxu0
    %1343 = vmatprep.mubr.f32.mxu0 0.0
    %1344 = vmatmul.mubr.f32.gmra.mrb[0].mxu0 %v460
    %v1345 = vpop.f32.mrb[0].mxu0
    %v1346 = vadd.f32 0.0, %v1345
    %v1347 = vpop.f32.mrb[0].mxu0
    %1348 = vmatprep.mubr.f32.mxu0 0.0
    %1349 = vmatmul.mubr.f32.gmra.mrb[0].mxu0 %v461
    %v1350 = vpop.f32.mrb[0].mxu0
    %v1351 = vadd.f32 0.0, %v1350
    %v1352 = vpop.f32.mrb[0].mxu0
    %1353 = vmatprep.mubr.f32.mxu0 0.0
    %1354 = vmatmul.mubr.f32.gmra.mrb[0].mxu0 %v462
    %v1355 = vpop.f32.mrb[0].mxu0
    %v1356 = vadd.f32 0.0, %v1355
    %v1357 = vpop.f32.mrb[0].mxu0
    %1358 = vmatprep.mubr.f32.mxu0 0.0
    %1359 = vmatmul.mubr.f32.gmra.mrb[0].mxu0 %v463
    %v1360 = vpop.f32.mrb[0].mxu0
    %v1361 = vadd.f32 0.0, %v1360
    %v1362 = vpop.f32.mrb[0].mxu0
    %1363 = vmatprep.mubr.f32.mxu0 0.0
    %1364 = vmatmul.mubr.f32.gmra.mrb[0].mxu0 %v464
    %v1365 = vpop.f32.mrb[0].mxu0
    %v1366 = vadd.f32 0.0, %v1365
    %v1367 = vpop.f32.mrb[0].mxu0
    %1368 = vmatprep.mubr.f32.mxu0 0.0
    %1369 = vmatmul.mubr.f32.gmra.mrb[0].mxu0 %v465
    %v1370 = vpop.f32.mrb[0].mxu0
    %v1371 = vadd.f32 0.0, %v1370
    %v1372 = vpop.f32.mrb[0].mxu0
    %1373 = vmatprep.mubr.f32.mxu0 0.0
    %1374 = vmatmul.mubr.f32.gmra.mrb[0].mxu0 %v466
    %v1375 = vpop.f32.mrb[0].mxu0
    %v1376 = vadd.f32 0.0, %v1375
    %v1377 = vpop.f32.mrb[0].mxu0
    %1378 = vmatprep.mubr.f32.mxu0 0.0
    %1379 = vmatmul.mubr.f32.gmra.mrb[0].mxu0 %v467
    %v1380 = vpop.f32.mrb[0].mxu0
    %v1381 = vadd.f32 0.0, %v1380
    %v1382 = vpop.f32.mrb[0].mxu0
    %1383 = vmatprep.mubr.f32.mxu0 0.0
    %1384 = vmatmul.mubr.f32.gmra.mrb[0].mxu0 %v468
    %v1385 = vpop.f32.mrb[0].mxu0
    %v1386 = vadd.f32 0.0, %v1385
    %v1387 = vpop.f32.mrb[0].mxu0
    %1388 = vmatprep.mubr.f32.mxu0 0.0
    %1389 = vmatmul.mubr.f32.gmra.mrb[0].mxu0 %v469
    %v1390 = vpop.f32.mrb[0].mxu0
    %v1391 = vadd.f32 0.0, %v1390
    %v1392 = vpop.f32.mrb[0].mxu0
    %1393 = vmatprep.mubr.f32.mxu0 0.0
    %1394 = vmatmul.mubr.f32.gmra.mrb[0].mxu0 %v470
    %v1395 = vpop.f32.mrb[0].mxu0
    %v1396 = vadd.f32 0.0, %v1395
    %v1397 = vpop.f32.mrb[0].mxu0
    %1398 = vmatprep.mubr.f32.mxu0 0.0
    %1399 = vmatmul.mubr.f32.gmra.mrb[0].mxu0 %v471
    %v1400 = vpop.f32.mrb[0].mxu0
    %v1401 = vadd.f32 0.0, %v1400
    %v1402 = vpop.f32.mrb[0].mxu0
    %1403 = vdwg.mxu0
    %1404 = vadd.xlane.f32.xlu0 %v1243
    %v1405 = vpop.xlane.xlu0 %1404
    %1406 = vadd.xlane.f32.xlu0 %v1244
    %v1407 = vpop.xlane.xlu0 %1406
    %1408 = vadd.xlane.f32.xlu0 %v1245
    %v1409 = vpop.xlane.xlu0 %1408
    %1410 = vadd.xlane.f32.xlu0 %v1246
    %v1411 = vpop.xlane.xlu0 %1410
    %1412 = vadd.xlane.f32.xlu0 %v1247
    %v1413 = vpop.xlane.xlu0 %1412
    %1414 = vadd.xlane.f32.xlu0 %v1248
    %v1415 = vpop.xlane.xlu0 %1414
    %1416 = vadd.xlane.f32.xlu0 %v1249
    %v1417 = vpop.xlane.xlu0 %1416
    %1418 = vadd.xlane.f32.xlu0 %v1250
    %v1419 = vpop.xlane.xlu0 %1418
    %1420 = vadd.xlane.f32.xlu0 %v1251
    %v1421 = vpop.xlane.xlu0 %1420
    %1422 = vadd.xlane.f32.xlu0 %v1252
    %v1423 = vpop.xlane.xlu0 %1422
    %1424 = vadd.xlane.f32.xlu0 %v1253
    %v1425 = vpop.xlane.xlu0 %1424
    %1426 = vadd.xlane.f32.xlu0 %v1254
    %v1427 = vpop.xlane.xlu0 %1426
    %1428 = vadd.xlane.f32.xlu0 %v1255
    %v1429 = vpop.xlane.xlu0 %1428
    %1430 = vadd.xlane.f32.xlu0 %v1256
    %v1431 = vpop.xlane.xlu0 %1430
    %1432 = vadd.xlane.f32.xlu0 %v1257
    %v1433 = vpop.xlane.xlu0 %1432
    %1434 = vadd.xlane.f32.xlu0 %v1258
    %v1435 = vpop.xlane.xlu0 %1434
    %vm1436 = vcmp.gt.f32.partialorder %v1405, 0.0
    %vm1437 = vcmp.gt.f32.partialorder %v1407, 0.0
    %vm1438 = vcmp.gt.f32.partialorder %v1409, 0.0
    %vm1439 = vcmp.gt.f32.partialorder %v1411, 0.0
    %vm1440 = vcmp.gt.f32.partialorder %v1413, 0.0
    %vm1441 = vcmp.gt.f32.partialorder %v1415, 0.0
    %vm1442 = vcmp.gt.f32.partialorder %v1417, 0.0
    %vm1443 = vcmp.gt.f32.partialorder %v1419, 0.0
    %vm1444 = vcmp.gt.f32.partialorder %v1421, 0.0
    %vm1445 = vcmp.gt.f32.partialorder %v1423, 0.0
    %vm1446 = vcmp.gt.f32.partialorder %v1425, 0.0
    %vm1447 = vcmp.gt.f32.partialorder %v1427, 0.0
    %vm1448 = vcmp.gt.f32.partialorder %v1429, 0.0
    %vm1449 = vcmp.gt.f32.partialorder %v1431, 0.0
    %vm1450 = vcmp.gt.f32.partialorder %v1433, 0.0
    %vm1451 = vcmp.gt.f32.partialorder %v1435, 0.0
    %v1452 = vrsqrt.pop %v1405
    %v1453 = vrsqrt.pop %v1407
    %v1454 = vrsqrt.pop %v1409
    %v1455 = vrsqrt.pop %v1411
    %v1456 = vrsqrt.pop %v1413
    %v1457 = vrsqrt.pop %v1415
    %v1458 = vrsqrt.pop %v1417
    %v1459 = vrsqrt.pop %v1419
    %v1460 = vrsqrt.pop %v1421
    %v1461 = vrsqrt.pop %v1423
    %v1462 = vrsqrt.pop %v1425
    %v1463 = vrsqrt.pop %v1427
    %v1464 = vrsqrt.pop %v1429
    %v1465 = vrsqrt.pop %v1431
    %v1466 = vrsqrt.pop %v1433
    %v1467 = vrsqrt.pop %v1435
    %v1468 = vsel %vm1436, %v1452, 0.0
    %v1469 = vsel %vm1437, %v1453, 0.0
    %v1470 = vsel %vm1438, %v1454, 0.0
    %v1471 = vsel %vm1439, %v1455, 0.0
    %v1472 = vsel %vm1440, %v1456, 0.0
    %v1473 = vsel %vm1441, %v1457, 0.0
    %v1474 = vsel %vm1442, %v1458, 0.0
    %v1475 = vsel %vm1443, %v1459, 0.0
    %v1476 = vsel %vm1444, %v1460, 0.0
    %v1477 = vsel %vm1445, %v1461, 0.0
    %v1478 = vsel %vm1446, %v1462, 0.0
    %v1479 = vsel %vm1447, %v1463, 0.0
    %v1480 = vsel %vm1448, %v1464, 0.0
    %v1481 = vsel %vm1449, %v1465, 0.0
    %v1482 = vsel %vm1450, %v1466, 0.0
    %v1483 = vsel %vm1451, %v1467, 0.0
    %v1484 = vmul.f32 %v1326, %v1468
    %v1485 = vmul.f32 %v1331, %v1469
    %v1486 = vmul.f32 %v1336, %v1470
    %v1487 = vmul.f32 %v1341, %v1471
    %v1488 = vmul.f32 %v1346, %v1472
    %v1489 = vmul.f32 %v1351, %v1473
    %v1490 = vmul.f32 %v1356, %v1474
    %v1491 = vmul.f32 %v1361, %v1475
    %v1492 = vmul.f32 %v1366, %v1476
    %v1493 = vmul.f32 %v1371, %v1477
    %v1494 = vmul.f32 %v1376, %v1478
    %v1495 = vmul.f32 %v1381, %v1479
    %v1496 = vmul.f32 %v1386, %v1480
    %v1497 = vmul.f32 %v1391, %v1481
    %v1498 = vmul.f32 %v1396, %v1482
    %v1499 = vmul.f32 %v1401, %v1483
    %1500 = vmatprep.subr.mxu0 0.0
    %1501 = vmatpush1.msra.mxu0 %v1484
    %1502 = vmatprep.subr.mxu0 0.0
    %1503 = vmatpush1.msra.mxu0 %v1485
    %1504 = vmatprep.subr.mxu0 0.0
    %1505 = vmatpush1.msra.mxu0 %v1486
    %1506 = vmatprep.subr.mxu0 0.0
    %1507 = vmatpush1.msra.mxu0 %v1487
    %1508 = vmatprep.subr.mxu0 0.0
    %1509 = vmatpush1.msra.mxu0 %v1488
    %1510 = vmatprep.subr.mxu0 0.0
    %1511 = vmatpush1.msra.mxu0 %v1489
    %1512 = vmatprep.subr.mxu0 0.0
    %1513 = vmatpush1.msra.mxu0 %v1490
    %1514 = vmatprep.subr.mxu0 0.0
    %1515 = vmatpush1.msra.mxu0 %v1491
    %1516 = vmatprep.subr.mxu0 0.0
    %1517 = vmatpush1.msra.mxu0 %v1492
    %1518 = vmatprep.subr.mxu0 0.0
    %1519 = vmatpush1.msra.mxu0 %v1493
    %1520 = vmatprep.subr.mxu0 0.0
    %1521 = vmatpush1.msra.mxu0 %v1494
    %1522 = vmatprep.subr.mxu0 0.0
    %1523 = vmatpush1.msra.mxu0 %v1495
    %1524 = vmatprep.subr.mxu0 0.0
    %1525 = vmatpush1.msra.mxu0 %v1496
    %1526 = vmatprep.subr.mxu0 0.0
    %1527 = vmatpush1.msra.mxu0 %v1497
    %1528 = vmatprep.subr.mxu0 0.0
    %1529 = vmatpush1.msra.mxu0 %v1498
    %1530 = vmatprep.subr.mxu0 0.0
    %1531 = vmatpush1.msra.mxu0 %v1499
    %1532 = vmatprep.subr.mxu0 0.0
    %1533 = vmatpush1.msra.mxu0 0.0
    %1534 = vmatprep.subr.mxu0 0.0
    %1535 = vmatpush1.msra.mxu0 0.0
    %1536 = vmatprep.subr.mxu0 0.0
    %1537 = vmatpush1.msra.mxu0 0.0
    %1538 = vmatprep.subr.mxu0 0.0
    %1539 = vmatpush1.msra.mxu0 0.0
    %1540 = vmatprep.subr.mxu0 0.0
    %1541 = vmatpush1.msra.mxu0 0.0
    %1542 = vmatprep.subr.mxu0 0.0
    %1543 = vmatpush1.msra.mxu0 0.0
    %1544 = vmatprep.subr.mxu0 0.0
    %1545 = vmatpush1.msra.mxu0 0.0
    %1546 = vmatprep.subr.mxu0 0.0
    %1547 = vmatpush1.msra.mxu0 0.0
    %1548 = vmatprep.subr.mxu0 0.0
    %1549 = vmatpush1.msra.mxu0 0.0
    %1550 = vmatprep.subr.mxu0 0.0
    %1551 = vmatpush1.msra.mxu0 0.0
    %1552 = vmatprep.subr.mxu0 0.0
    %1553 = vmatpush1.msra.mxu0 0.0
    %1554 = vmatprep.subr.mxu0 0.0
    %1555 = vmatpush1.msra.mxu0 0.0
    %1556 = vmatprep.subr.mxu0 0.0
    %1557 = vmatpush1.msra.mxu0 0.0
    %1558 = vmatprep.subr.mxu0 0.0
    %1559 = vmatpush1.msra.mxu0 0.0
    %1560 = vmatprep.subr.mxu0 0.0
    %1561 = vmatpush1.msra.mxu0 0.0
    %1562 = vmatprep.subr.mxu0 0.0
    %1563 = vmatpush1.msra.mxu0 0.0
    %1564 = vmatprep.mubr.f32.mxu0 0.0
    %1565 = vmatmul.mubr.f32.gmra.mrb[0].mxu0 %v1243
    %v1566 = vpop.f32.mrb[0].mxu0
    %v1567 = vadd.f32 0.0, %v1566
    %v1568 = vpop.f32.mrb[0].mxu0
    %1569 = vmatprep.mubr.f32.mxu0 0.0
    %1570 = vmatmul.mubr.f32.gmra.mrb[0].mxu0 %v1244
    %v1571 = vpop.f32.mrb[0].mxu0
    %v1572 = vadd.f32 0.0, %v1571
    %v1573 = vpop.f32.mrb[0].mxu0
    %1574 = vmatprep.mubr.f32.mxu0 0.0
    %1575 = vmatmul.mubr.f32.gmra.mrb[0].mxu0 %v1245
    %v1576 = vpop.f32.mrb[0].mxu0
    %v1577 = vadd.f32 0.0, %v1576
    %v1578 = vpop.f32.mrb[0].mxu0
    %1579 = vmatprep.mubr.f32.mxu0 0.0
    %1580 = vmatmul.mubr.f32.gmra.mrb[0].mxu0 %v1246
    %v1581 = vpop.f32.mrb[0].mxu0
    %v1582 = vadd.f32 0.0, %v1581
    %v1583 = vpop.f32.mrb[0].mxu0
    %1584 = vmatprep.mubr.f32.mxu0 0.0
    %1585 = vmatmul.mubr.f32.gmra.mrb[0].mxu0 %v1247
    %v1586 = vpop.f32.mrb[0].mxu0
    %v1587 = vadd.f32 0.0, %v1586
    %v1588 = vpop.f32.mrb[0].mxu0
    %1589 = vmatprep.mubr.f32.mxu0 0.0
    %1590 = vmatmul.mubr.f32.gmra.mrb[0].mxu0 %v1248
    %v1591 = vpop.f32.mrb[0].mxu0
    %v1592 = vadd.f32 0.0, %v1591
    %v1593 = vpop.f32.mrb[0].mxu0
    %1594 = vmatprep.mubr.f32.mxu0 0.0
    %1595 = vmatmul.mubr.f32.gmra.mrb[0].mxu0 %v1249
    %v1596 = vpop.f32.mrb[0].mxu0
    %v1597 = vadd.f32 0.0, %v1596
    %v1598 = vpop.f32.mrb[0].mxu0
    %1599 = vmatprep.mubr.f32.mxu0 0.0
    %1600 = vmatmul.mubr.f32.gmra.mrb[0].mxu0 %v1250
    %v1601 = vpop.f32.mrb[0].mxu0
    %v1602 = vadd.f32 0.0, %v1601
    %v1603 = vpop.f32.mrb[0].mxu0
    %1604 = vmatprep.mubr.f32.mxu0 0.0
    %1605 = vmatmul.mubr.f32.gmra.mrb[0].mxu0 %v1251
    %v1606 = vpop.f32.mrb[0].mxu0
    %v1607 = vadd.f32 0.0, %v1606
    %v1608 = vpop.f32.mrb[0].mxu0
    %1609 = vmatprep.mubr.f32.mxu0 0.0
    %1610 = vmatmul.mubr.f32.gmra.mrb[0].mxu0 %v1252
    %v1611 = vpop.f32.mrb[0].mxu0
    %v1612 = vadd.f32 0.0, %v1611
    %v1613 = vpop.f32.mrb[0].mxu0
    %1614 = vmatprep.mubr.f32.mxu0 0.0
    %1615 = vmatmul.mubr.f32.gmra.mrb[0].mxu0 %v1253
    %v1616 = vpop.f32.mrb[0].mxu0
    %v1617 = vadd.f32 0.0, %v1616
    %v1618 = vpop.f32.mrb[0].mxu0
    %1619 = vmatprep.mubr.f32.mxu0 0.0
    %1620 = vmatmul.mubr.f32.gmra.mrb[0].mxu0 %v1254
    %v1621 = vpop.f32.mrb[0].mxu0
    %v1622 = vadd.f32 0.0, %v1621
    %v1623 = vpop.f32.mrb[0].mxu0
    %1624 = vmatprep.mubr.f32.mxu0 0.0
    %1625 = vmatmul.mubr.f32.gmra.mrb[0].mxu0 %v1255
    %v1626 = vpop.f32.mrb[0].mxu0
    %v1627 = vadd.f32 0.0, %v1626
    %v1628 = vpop.f32.mrb[0].mxu0
    %1629 = vmatprep.mubr.f32.mxu0 0.0
    %1630 = vmatmul.mubr.f32.gmra.mrb[0].mxu0 %v1256
    %v1631 = vpop.f32.mrb[0].mxu0
    %v1632 = vadd.f32 0.0, %v1631
    %v1633 = vpop.f32.mrb[0].mxu0
    %1634 = vmatprep.mubr.f32.mxu0 0.0
    %1635 = vmatmul.mubr.f32.gmra.mrb[0].mxu0 %v1257
    %v1636 = vpop.f32.mrb[0].mxu0
    %v1637 = vadd.f32 0.0, %v1636
    %v1638 = vpop.f32.mrb[0].mxu0
    %1639 = vmatprep.mubr.f32.mxu0 0.0
    %1640 = vmatmul.mubr.f32.gmra.mrb[0].mxu0 %v1258
    %v1641 = vpop.f32.mrb[0].mxu0
    %v1642 = vadd.f32 0.0, %v1641
    %v1643 = vpop.f32.mrb[0].mxu0
    %1644 = vdwg.mxu0
    %v1645 = vmul.f32 %v1567, %v1468
    %v1646 = vmul.f32 %v1572, %v1469
    %v1647 = vmul.f32 %v1577, %v1470
    %v1648 = vmul.f32 %v1582, %v1471
    %v1649 = vmul.f32 %v1587, %v1472
    %v1650 = vmul.f32 %v1592, %v1473
    %v1651 = vmul.f32 %v1597, %v1474
    %v1652 = vmul.f32 %v1602, %v1475
    %v1653 = vmul.f32 %v1607, %v1476
    %v1654 = vmul.f32 %v1612, %v1477
    %v1655 = vmul.f32 %v1617, %v1478
    %v1656 = vmul.f32 %v1622, %v1479
    %v1657 = vmul.f32 %v1627, %v1480
    %v1658 = vmul.f32 %v1632, %v1481
    %v1659 = vmul.f32 %v1637, %v1482
    %v1660 = vmul.f32 %v1642, %v1483
    %v1662 = vlaneseq
    %v1663 = vshrl.u32 %v1662, 7
    %v1664 = vsub.s32 0, %v1663
    %v1665 = vrot.slane %v488, %v1664
    %v1667 = vadd.f32 %v1645, %v1665
    %v1668 = vadd.f32 %v1646, %v1665
    %v1669 = vadd.f32 %v1647, %v1665
    %v1670 = vadd.f32 %v1648, %v1665
    %v1671 = vadd.f32 %v1649, %v1665
    %v1672 = vadd.f32 %v1650, %v1665
    %v1673 = vadd.f32 %v1651, %v1665
    %v1674 = vadd.f32 %v1652, %v1665
    %v1675 = vadd.f32 %v1653, %v1665
    %v1676 = vadd.f32 %v1654, %v1665
    %v1677 = vadd.f32 %v1655, %v1665
    %v1678 = vadd.f32 %v1656, %v1665
    %v1679 = vadd.f32 %v1657, %v1665
    %v1680 = vadd.f32 %v1658, %v1665
    %v1681 = vadd.f32 %v1659, %v1665
    %v1682 = vadd.f32 %v1660, %v1665
    %v1683 = vmax.f32 %v1667, 0.0
    %v1684 = vmax.f32 %v1668, 0.0
    %v1685 = vmax.f32 %v1669, 0.0
    %v1686 = vmax.f32 %v1670, 0.0
    %v1687 = vmax.f32 %v1671, 0.0
    %v1688 = vmax.f32 %v1672, 0.0
    %v1689 = vmax.f32 %v1673, 0.0
    %v1690 = vmax.f32 %v1674, 0.0
    %v1691 = vmax.f32 %v1675, 0.0
    %v1692 = vmax.f32 %v1676, 0.0
    %v1693 = vmax.f32 %v1677, 0.0
    %v1694 = vmax.f32 %v1678, 0.0
    %v1695 = vmax.f32 %v1679, 0.0
    %v1696 = vmax.f32 %v1680, 0.0
    %v1697 = vmax.f32 %v1681, 0.0
    %v1698 = vmax.f32 %v1682, 0.0
    %v1699 = vmul.f32 %v1683, %v1683
    %v1700 = vmul.f32 %v1684, %v1684
    %v1701 = vmul.f32 %v1685, %v1685
    %v1702 = vmul.f32 %v1686, %v1686
    %v1703 = vmul.f32 %v1687, %v1687
    %v1704 = vmul.f32 %v1688, %v1688
    %v1705 = vmul.f32 %v1689, %v1689
    %v1706 = vmul.f32 %v1690, %v1690
    %v1707 = vmul.f32 %v1691, %v1691
    %v1708 = vmul.f32 %v1692, %v1692
    %v1709 = vmul.f32 %v1693, %v1693
    %v1710 = vmul.f32 %v1694, %v1694
    %v1711 = vmul.f32 %v1695, %v1695
    %v1712 = vmul.f32 %v1696, %v1696
    %v1713 = vmul.f32 %v1697, %v1697
    %v1714 = vmul.f32 %v1698, %v1698
    %1715 = vadd.xlane.f32.xlu0 %v1699
    %v1716 = vpop.xlane.xlu0 %1715
    %1717 = vadd.xlane.f32.xlu0 %v1700
    %v1718 = vpop.xlane.xlu0 %1717
    %1719 = vadd.xlane.f32.xlu0 %v1701
    %v1720 = vpop.xlane.xlu0 %1719
    %1721 = vadd.xlane.f32.xlu0 %v1702
    %v1722 = vpop.xlane.xlu0 %1721
    %1723 = vadd.xlane.f32.xlu0 %v1703
    %v1724 = vpop.xlane.xlu0 %1723
    %1725 = vadd.xlane.f32.xlu0 %v1704
    %v1726 = vpop.xlane.xlu0 %1725
    %1727 = vadd.xlane.f32.xlu0 %v1705
    %v1728 = vpop.xlane.xlu0 %1727
    %1729 = vadd.xlane.f32.xlu0 %v1706
    %v1730 = vpop.xlane.xlu0 %1729
    %1731 = vadd.xlane.f32.xlu0 %v1707
    %v1732 = vpop.xlane.xlu0 %1731
    %1733 = vadd.xlane.f32.xlu0 %v1708
    %v1734 = vpop.xlane.xlu0 %1733
    %1735 = vadd.xlane.f32.xlu0 %v1709
    %v1736 = vpop.xlane.xlu0 %1735
    %1737 = vadd.xlane.f32.xlu0 %v1710
    %v1738 = vpop.xlane.xlu0 %1737
    %1739 = vadd.xlane.f32.xlu0 %v1711
    %v1740 = vpop.xlane.xlu0 %1739
    %1741 = vadd.xlane.f32.xlu0 %v1712
    %v1742 = vpop.xlane.xlu0 %1741
    %1743 = vadd.xlane.f32.xlu0 %v1713
    %v1744 = vpop.xlane.xlu0 %1743
    %1745 = vadd.xlane.f32.xlu0 %v1714
    %v1746 = vpop.xlane.xlu0 %1745
    %v1747 = vrsqrt.pop %v1716
    %v1748 = vmul.f32 %v1716, %v1747
    %vm1749 = vcmp.eq.f32.partialorder %v1716, inf
    %v1750 = vsel %vm1749, %v1716, %v1748
    %vm1751 = vcmp.eq.f32.partialorder %v1716, 0.0
    %v1752 = vand.u32 %v1716, 2147483648
    %v1753 = vsel %vm1751, %v1752, %v1750
    %v1754 = vrsqrt.pop %v1718
    %v1755 = vmul.f32 %v1718, %v1754
    %vm1756 = vcmp.eq.f32.partialorder %v1718, inf
    %v1757 = vsel %vm1756, %v1718, %v1755
    %vm1758 = vcmp.eq.f32.partialorder %v1718, 0.0
    %v1759 = vand.u32 %v1718, 2147483648
    %v1760 = vsel %vm1758, %v1759, %v1757
    %v1761 = vrsqrt.pop %v1720
    %v1762 = vmul.f32 %v1720, %v1761
    %vm1763 = vcmp.eq.f32.partialorder %v1720, inf
    %v1764 = vsel %vm1763, %v1720, %v1762
    %vm1765 = vcmp.eq.f32.partialorder %v1720, 0.0
    %v1766 = vand.u32 %v1720, 2147483648
    %v1767 = vsel %vm1765, %v1766, %v1764
    %v1768 = vrsqrt.pop %v1722
    %v1769 = vmul.f32 %v1722, %v1768
    %vm1770 = vcmp.eq.f32.partialorder %v1722, inf
    %v1771 = vsel %vm1770, %v1722, %v1769
    %vm1772 = vcmp.eq.f32.partialorder %v1722, 0.0
    %v1773 = vand.u32 %v1722, 2147483648
    %v1774 = vsel %vm1772, %v1773, %v1771
    %v1775 = vrsqrt.pop %v1724
    %v1776 = vmul.f32 %v1724, %v1775
    %vm1777 = vcmp.eq.f32.partialorder %v1724, inf
    %v1778 = vsel %vm1777, %v1724, %v1776
    %vm1779 = vcmp.eq.f32.partialorder %v1724, 0.0
    %v1780 = vand.u32 %v1724, 2147483648
    %v1781 = vsel %vm1779, %v1780, %v1778
    %v1782 = vrsqrt.pop %v1726
    %v1783 = vmul.f32 %v1726, %v1782
    %vm1784 = vcmp.eq.f32.partialorder %v1726, inf
    %v1785 = vsel %vm1784, %v1726, %v1783
    %vm1786 = vcmp.eq.f32.partialorder %v1726, 0.0
    %v1787 = vand.u32 %v1726, 2147483648
    %v1788 = vsel %vm1786, %v1787, %v1785
    %v1789 = vrsqrt.pop %v1728
    %v1790 = vmul.f32 %v1728, %v1789
    %vm1791 = vcmp.eq.f32.partialorder %v1728, inf
    %v1792 = vsel %vm1791, %v1728, %v1790
    %vm1793 = vcmp.eq.f32.partialorder %v1728, 0.0
    %v1794 = vand.u32 %v1728, 2147483648
    %v1795 = vsel %vm1793, %v1794, %v1792
    %v1796 = vrsqrt.pop %v1730
    %v1797 = vmul.f32 %v1730, %v1796
    %vm1798 = vcmp.eq.f32.partialorder %v1730, inf
    %v1799 = vsel %vm1798, %v1730, %v1797
    %vm1800 = vcmp.eq.f32.partialorder %v1730, 0.0
    %v1801 = vand.u32 %v1730, 2147483648
    %v1802 = vsel %vm1800, %v1801, %v1799
    %v1803 = vrsqrt.pop %v1732
    %v1804 = vmul.f32 %v1732, %v1803
    %vm1805 = vcmp.eq.f32.partialorder %v1732, inf
    %v1806 = vsel %vm1805, %v1732, %v1804
    %vm1807 = vcmp.eq.f32.partialorder %v1732, 0.0
    %v1808 = vand.u32 %v1732, 2147483648
    %v1809 = vsel %vm1807, %v1808, %v1806
    %v1810 = vrsqrt.pop %v1734
    %v1811 = vmul.f32 %v1734, %v1810
    %vm1812 = vcmp.eq.f32.partialorder %v1734, inf
    %v1813 = vsel %vm1812, %v1734, %v1811
    %vm1814 = vcmp.eq.f32.partialorder %v1734, 0.0
    %v1815 = vand.u32 %v1734, 2147483648
    %v1816 = vsel %vm1814, %v1815, %v1813
    %v1817 = vrsqrt.pop %v1736
    %v1818 = vmul.f32 %v1736, %v1817
    %vm1819 = vcmp.eq.f32.partialorder %v1736, inf
    %v1820 = vsel %vm1819, %v1736, %v1818
    %vm1821 = vcmp.eq.f32.partialorder %v1736, 0.0
    %v1822 = vand.u32 %v1736, 2147483648
    %v1823 = vsel %vm1821, %v1822, %v1820
    %v1824 = vrsqrt.pop %v1738
    %v1825 = vmul.f32 %v1738, %v1824
    %vm1826 = vcmp.eq.f32.partialorder %v1738, inf
    %v1827 = vsel %vm1826, %v1738, %v1825
    %vm1828 = vcmp.eq.f32.partialorder %v1738, 0.0
    %v1829 = vand.u32 %v1738, 2147483648
    %v1830 = vsel %vm1828, %v1829, %v1827
    %v1831 = vrsqrt.pop %v1740
    %v1832 = vmul.f32 %v1740, %v1831
    %vm1833 = vcmp.eq.f32.partialorder %v1740, inf
    %v1834 = vsel %vm1833, %v1740, %v1832
    %vm1835 = vcmp.eq.f32.partialorder %v1740, 0.0
    %v1836 = vand.u32 %v1740, 2147483648
    %v1837 = vsel %vm1835, %v1836, %v1834
    %v1838 = vrsqrt.pop %v1742
    %v1839 = vmul.f32 %v1742, %v1838
    %vm1840 = vcmp.eq.f32.partialorder %v1742, inf
    %v1841 = vsel %vm1840, %v1742, %v1839
    %vm1842 = vcmp.eq.f32.partialorder %v1742, 0.0
    %v1843 = vand.u32 %v1742, 2147483648
    %v1844 = vsel %vm1842, %v1843, %v1841
    %v1845 = vrsqrt.pop %v1744
    %v1846 = vmul.f32 %v1744, %v1845
    %vm1847 = vcmp.eq.f32.partialorder %v1744, inf
    %v1848 = vsel %vm1847, %v1744, %v1846
    %vm1849 = vcmp.eq.f32.partialorder %v1744, 0.0
    %v1850 = vand.u32 %v1744, 2147483648
    %v1851 = vsel %vm1849, %v1850, %v1848
    %v1852 = vrsqrt.pop %v1746
    %v1853 = vmul.f32 %v1746, %v1852
    %vm1854 = vcmp.eq.f32.partialorder %v1746, inf
    %v1855 = vsel %vm1854, %v1746, %v1853
    %vm1856 = vcmp.eq.f32.partialorder %v1746, 0.0
    %v1857 = vand.u32 %v1746, 2147483648
    %v1858 = vsel %vm1856, %v1857, %v1855
    %v1859 = vmax.f32 %v1753, 1e-08
    %v1860 = vmax.f32 %v1760, 1e-08
    %v1861 = vmax.f32 %v1767, 1e-08
    %v1862 = vmax.f32 %v1774, 1e-08
    %v1863 = vmax.f32 %v1781, 1e-08
    %v1864 = vmax.f32 %v1788, 1e-08
    %v1865 = vmax.f32 %v1795, 1e-08
    %v1866 = vmax.f32 %v1802, 1e-08
    %v1867 = vmax.f32 %v1809, 1e-08
    %v1868 = vmax.f32 %v1816, 1e-08
    %v1869 = vmax.f32 %v1823, 1e-08
    %v1870 = vmax.f32 %v1830, 1e-08
    %v1871 = vmax.f32 %v1837, 1e-08
    %v1872 = vmax.f32 %v1844, 1e-08
    %v1873 = vmax.f32 %v1851, 1e-08
    %v1874 = vmax.f32 %v1858, 1e-08
    %v1875 = vrcp.pop %v1859
    %v1876 = vmul.f32 %v1683, %v1875
    %v1877 = vrcp.pop %v1860
    %v1878 = vmul.f32 %v1684, %v1877
    %v1879 = vrcp.pop %v1861
    %v1880 = vmul.f32 %v1685, %v1879
    %v1881 = vrcp.pop %v1862
    %v1882 = vmul.f32 %v1686, %v1881
    %v1883 = vrcp.pop %v1863
    %v1884 = vmul.f32 %v1687, %v1883
    %v1885 = vrcp.pop %v1864
    %v1886 = vmul.f32 %v1688, %v1885
    %v1887 = vrcp.pop %v1865
    %v1888 = vmul.f32 %v1689, %v1887
    %v1889 = vrcp.pop %v1866
    %v1890 = vmul.f32 %v1690, %v1889
    %v1891 = vrcp.pop %v1867
    %v1892 = vmul.f32 %v1691, %v1891
    %v1893 = vrcp.pop %v1868
    %v1894 = vmul.f32 %v1692, %v1893
    %v1895 = vrcp.pop %v1869
    %v1896 = vmul.f32 %v1693, %v1895
    %v1897 = vrcp.pop %v1870
    %v1898 = vmul.f32 %v1694, %v1897
    %v1899 = vrcp.pop %v1871
    %v1900 = vmul.f32 %v1695, %v1899
    %v1901 = vrcp.pop %v1872
    %v1902 = vmul.f32 %v1696, %v1901
    %v1903 = vrcp.pop %v1873
    %v1904 = vmul.f32 %v1697, %v1903
    %v1905 = vrcp.pop %v1874
    %v1906 = vmul.f32 %v1698, %v1905
    %1907 = vmatprep.subr.mxu0 0.0
    %1908 = vmatpush1.xpose.msra.mxu0 %v1876
    %1909 = vmatprep.subr.mxu0 0.0
    %1910 = vmatpush1.xpose.msra.mxu0 %v1878
    %1911 = vmatprep.subr.mxu0 0.0
    %1912 = vmatpush1.xpose.msra.mxu0 %v1880
    %1913 = vmatprep.subr.mxu0 0.0
    %1914 = vmatpush1.xpose.msra.mxu0 %v1882
    %1915 = vmatprep.subr.mxu0 0.0
    %1916 = vmatpush1.xpose.msra.mxu0 %v1884
    %1917 = vmatprep.subr.mxu0 0.0
    %1918 = vmatpush1.xpose.msra.mxu0 %v1886
    %1919 = vmatprep.subr.mxu0 0.0
    %1920 = vmatpush1.xpose.msra.mxu0 %v1888
    %1921 = vmatprep.subr.mxu0 0.0
    %1922 = vmatpush1.xpose.msra.mxu0 %v1890
    %1923 = vmatprep.subr.mxu0 0.0
    %1924 = vmatpush1.xpose.msra.mxu0 %v1892
    %1925 = vmatprep.subr.mxu0 0.0
    %1926 = vmatpush1.xpose.msra.mxu0 %v1894
    %1927 = vmatprep.subr.mxu0 0.0
    %1928 = vmatpush1.xpose.msra.mxu0 %v1896
    %1929 = vmatprep.subr.mxu0 0.0
    %1930 = vmatpush1.xpose.msra.mxu0 %v1898
    %1931 = vmatprep.subr.mxu0 0.0
    %1932 = vmatpush1.xpose.msra.mxu0 %v1900
    %1933 = vmatprep.subr.mxu0 0.0
    %1934 = vmatpush1.xpose.msra.mxu0 %v1902
    %1935 = vmatprep.subr.mxu0 0.0
    %1936 = vmatpush1.xpose.msra.mxu0 %v1904
    %1937 = vmatprep.subr.mxu0 0.0
    %1938 = vmatpush1.xpose.msra.mxu0 %v1906
    %1939 = vmatprep.subr.mxu0 0.0
    %1940 = vmatpush1.xpose.msra.mxu0 0.0
    %1941 = vmatprep.subr.mxu0 0.0
    %1942 = vmatpush1.xpose.msra.mxu0 0.0
    %1943 = vmatprep.subr.mxu0 0.0
    %1944 = vmatpush1.xpose.msra.mxu0 0.0
    %1945 = vmatprep.subr.mxu0 0.0
    %1946 = vmatpush1.xpose.msra.mxu0 0.0
    %1947 = vmatprep.subr.mxu0 0.0
    %1948 = vmatpush1.xpose.msra.mxu0 0.0
    %1949 = vmatprep.subr.mxu0 0.0
    %1950 = vmatpush1.xpose.msra.mxu0 0.0
    %1951 = vmatprep.subr.mxu0 0.0
    %1952 = vmatpush1.xpose.msra.mxu0 0.0
    %1953 = vmatprep.subr.mxu0 0.0
    %1954 = vmatpush1.xpose.msra.mxu0 0.0
    %1955 = vmatprep.subr.mxu0 0.0
    %1956 = vmatpush1.xpose.msra.mxu0 0.0
    %1957 = vmatprep.subr.mxu0 0.0
    %1958 = vmatpush1.xpose.msra.mxu0 0.0
    %1959 = vmatprep.subr.mxu0 0.0
    %1960 = vmatpush1.xpose.msra.mxu0 0.0
    %1961 = vmatprep.subr.mxu0 0.0
    %1962 = vmatpush1.xpose.msra.mxu0 0.0
    %1963 = vmatprep.subr.mxu0 0.0
    %1964 = vmatpush1.xpose.msra.mxu0 0.0
    %1965 = vmatprep.subr.mxu0 0.0
    %1966 = vmatpush1.xpose.msra.mxu0 0.0
    %1967 = vmatprep.subr.mxu0 0.0
    %1968 = vmatpush1.xpose.msra.mxu0 0.0
    %1969 = vmatprep.subr.mxu0 0.0
    %1970 = vmatpush1.xpose.msra.mxu0 0.0
    %1971 = vmatprep.mubr.f32.mxu0 0.0
    %1972 = vmatmul.mubr.f32.gmra.mrb[0].mxu0 %v1876
    %v1973 = vpop.f32.mrb[0].mxu0
    %v1974 = vadd.f32 0.0, %v1973
    %v1975 = vpop.f32.mrb[0].mxu0
    %1976 = vmatprep.mubr.f32.mxu0 0.0
    %1977 = vmatmul.mubr.f32.gmra.mrb[0].mxu0 %v1878
    %v1978 = vpop.f32.mrb[0].mxu0
    %v1979 = vadd.f32 0.0, %v1978
    %v1980 = vpop.f32.mrb[0].mxu0
    %1981 = vmatprep.mubr.f32.mxu0 0.0
    %1982 = vmatmul.mubr.f32.gmra.mrb[0].mxu0 %v1880
    %v1983 = vpop.f32.mrb[0].mxu0
    %v1984 = vadd.f32 0.0, %v1983
    %v1985 = vpop.f32.mrb[0].mxu0
    %1986 = vmatprep.mubr.f32.mxu0 0.0
    %1987 = vmatmul.mubr.f32.gmra.mrb[0].mxu0 %v1882
    %v1988 = vpop.f32.mrb[0].mxu0
    %v1989 = vadd.f32 0.0, %v1988
    %v1990 = vpop.f32.mrb[0].mxu0
    %1991 = vmatprep.mubr.f32.mxu0 0.0
    %1992 = vmatmul.mubr.f32.gmra.mrb[0].mxu0 %v1884
    %v1993 = vpop.f32.mrb[0].mxu0
    %v1994 = vadd.f32 0.0, %v1993
    %v1995 = vpop.f32.mrb[0].mxu0
    %1996 = vmatprep.mubr.f32.mxu0 0.0
    %1997 = vmatmul.mubr.f32.gmra.mrb[0].mxu0 %v1886
    %v1998 = vpop.f32.mrb[0].mxu0
    %v1999 = vadd.f32 0.0, %v1998
    %v2000 = vpop.f32.mrb[0].mxu0
    %2001 = vmatprep.mubr.f32.mxu0 0.0
    %2002 = vmatmul.mubr.f32.gmra.mrb[0].mxu0 %v1888
    %v2003 = vpop.f32.mrb[0].mxu0
    %v2004 = vadd.f32 0.0, %v2003
    %v2005 = vpop.f32.mrb[0].mxu0
    %2006 = vmatprep.mubr.f32.mxu0 0.0
    %2007 = vmatmul.mubr.f32.gmra.mrb[0].mxu0 %v1890
    %v2008 = vpop.f32.mrb[0].mxu0
    %v2009 = vadd.f32 0.0, %v2008
    %v2010 = vpop.f32.mrb[0].mxu0
    %2011 = vmatprep.mubr.f32.mxu0 0.0
    %2012 = vmatmul.mubr.f32.gmra.mrb[0].mxu0 %v1892
    %v2013 = vpop.f32.mrb[0].mxu0
    %v2014 = vadd.f32 0.0, %v2013
    %v2015 = vpop.f32.mrb[0].mxu0
    %2016 = vmatprep.mubr.f32.mxu0 0.0
    %2017 = vmatmul.mubr.f32.gmra.mrb[0].mxu0 %v1894
    %v2018 = vpop.f32.mrb[0].mxu0
    %v2019 = vadd.f32 0.0, %v2018
    %v2020 = vpop.f32.mrb[0].mxu0
    %2021 = vmatprep.mubr.f32.mxu0 0.0
    %2022 = vmatmul.mubr.f32.gmra.mrb[0].mxu0 %v1896
    %v2023 = vpop.f32.mrb[0].mxu0
    %v2024 = vadd.f32 0.0, %v2023
    %v2025 = vpop.f32.mrb[0].mxu0
    %2026 = vmatprep.mubr.f32.mxu0 0.0
    %2027 = vmatmul.mubr.f32.gmra.mrb[0].mxu0 %v1898
    %v2028 = vpop.f32.mrb[0].mxu0
    %v2029 = vadd.f32 0.0, %v2028
    %v2030 = vpop.f32.mrb[0].mxu0
    %2031 = vmatprep.mubr.f32.mxu0 0.0
    %2032 = vmatmul.mubr.f32.gmra.mrb[0].mxu0 %v1900
    %v2033 = vpop.f32.mrb[0].mxu0
    %v2034 = vadd.f32 0.0, %v2033
    %v2035 = vpop.f32.mrb[0].mxu0
    %2036 = vmatprep.mubr.f32.mxu0 0.0
    %2037 = vmatmul.mubr.f32.gmra.mrb[0].mxu0 %v1902
    %v2038 = vpop.f32.mrb[0].mxu0
    %v2039 = vadd.f32 0.0, %v2038
    %v2040 = vpop.f32.mrb[0].mxu0
    %2041 = vmatprep.mubr.f32.mxu0 0.0
    %2042 = vmatmul.mubr.f32.gmra.mrb[0].mxu0 %v1904
    %v2043 = vpop.f32.mrb[0].mxu0
    %v2044 = vadd.f32 0.0, %v2043
    %v2045 = vpop.f32.mrb[0].mxu0
    %2046 = vmatprep.mubr.f32.mxu0 0.0
    %2047 = vmatmul.mubr.f32.gmra.mrb[0].mxu0 %v1906
    %v2048 = vpop.f32.mrb[0].mxu0
    %v2049 = vadd.f32 0.0, %v2048
    %v2050 = vpop.f32.mrb[0].mxu0
    %2051 = vdwg.mxu0
    %vm2052 = vcmp.gt.f32.partialorder %v1243, 0.0
    %vm2053 = vcmp.gt.f32.partialorder %v1244, 0.0
    %vm2054 = vcmp.gt.f32.partialorder %v1245, 0.0
    %vm2055 = vcmp.gt.f32.partialorder %v1246, 0.0
    %vm2056 = vcmp.gt.f32.partialorder %v1247, 0.0
    %vm2057 = vcmp.gt.f32.partialorder %v1248, 0.0
    %vm2058 = vcmp.gt.f32.partialorder %v1249, 0.0
    %vm2059 = vcmp.gt.f32.partialorder %v1250, 0.0
    %vm2060 = vcmp.gt.f32.partialorder %v1251, 0.0
    %vm2061 = vcmp.gt.f32.partialorder %v1252, 0.0
    %vm2062 = vcmp.gt.f32.partialorder %v1253, 0.0
    %vm2063 = vcmp.gt.f32.partialorder %v1254, 0.0
    %vm2064 = vcmp.gt.f32.partialorder %v1255, 0.0
    %vm2065 = vcmp.gt.f32.partialorder %v1256, 0.0
    %vm2066 = vcmp.gt.f32.partialorder %v1257, 0.0
    %vm2067 = vcmp.gt.f32.partialorder %v1258, 0.0
    %vm2068 = vcmp.ge.f32.partialorder %v1974, 0.1
    %vm2069 = vcmp.ge.f32.partialorder %v1979, 0.1
    %vm2070 = vcmp.ge.f32.partialorder %v1984, 0.1
    %vm2071 = vcmp.ge.f32.partialorder %v1989, 0.1
    %vm2072 = vcmp.ge.f32.partialorder %v1994, 0.1
    %vm2073 = vcmp.ge.f32.partialorder %v1999, 0.1
    %vm2074 = vcmp.ge.f32.partialorder %v2004, 0.1
    %vm2075 = vcmp.ge.f32.partialorder %v2009, 0.1
    %vm2076 = vcmp.ge.f32.partialorder %v2014, 0.1
    %vm2077 = vcmp.ge.f32.partialorder %v2019, 0.1
    %vm2078 = vcmp.ge.f32.partialorder %v2024, 0.1
    %vm2079 = vcmp.ge.f32.partialorder %v2029, 0.1
    %vm2080 = vcmp.ge.f32.partialorder %v2034, 0.1
    %vm2081 = vcmp.ge.f32.partialorder %v2039, 0.1
    %vm2082 = vcmp.ge.f32.partialorder %v2044, 0.1
    %vm2083 = vcmp.ge.f32.partialorder %v2049, 0.1
    %vm2084 = vmor %vm104, %vm2068
    %vm2085 = vmor %vm105, %vm2069
    %vm2086 = vmor %vm106, %vm2070
    %vm2087 = vmor %vm107, %vm2071
    %vm2088 = vmor %vm108, %vm2072
    %vm2089 = vmor %vm109, %vm2073
    %vm2090 = vmor %vm110, %vm2074
    %vm2091 = vmor %vm111, %vm2075
    %vm2092 = vmor %vm112, %vm2076
    %vm2093 = vmor %vm113, %vm2077
    %vm2094 = vmor %vm114, %vm2078
    %vm2095 = vmor %vm115, %vm2079
    %vm2096 = vmor %vm116, %vm2080
    %vm2097 = vmor %vm117, %vm2081
    %vm2098 = vmor %vm118, %vm2082
    %vm2099 = vmor %vm119, %vm2083
    %vm2100 = vmand %vm2052, %vm2084
    %vm2101 = vmand %vm2053, %vm2085
    %vm2102 = vmand %vm2054, %vm2086
    %vm2103 = vmand %vm2055, %vm2087
    %vm2104 = vmand %vm2056, %vm2088
    %vm2105 = vmand %vm2057, %vm2089
    %vm2106 = vmand %vm2058, %vm2090
    %vm2107 = vmand %vm2059, %vm2091
    %vm2108 = vmand %vm2060, %vm2092
    %vm2109 = vmand %vm2061, %vm2093
    %vm2110 = vmand %vm2062, %vm2094
    %vm2111 = vmand %vm2063, %vm2095
    %vm2112 = vmand %vm2064, %vm2096
    %vm2113 = vmand %vm2065, %vm2097
    %vm2114 = vmand %vm2066, %vm2098
    %vm2115 = vmand %vm2067, %vm2099
    %vm2116 = vmand %vm2100, %vm939
    %vm2117 = vmand %vm2101, %vm940
    %vm2118 = vmand %vm2102, %vm941
    %vm2119 = vmand %vm2103, %vm942
    %vm2120 = vmand %vm2104, %vm943
    %vm2121 = vmand %vm2105, %vm944
    %vm2122 = vmand %vm2106, %vm945
    %vm2123 = vmand %vm2107, %vm946
    %vm2124 = vmand %vm2108, %vm947
    %vm2125 = vmand %vm2109, %vm948
    %vm2126 = vmand %vm2110, %vm949
    %vm2127 = vmand %vm2111, %vm950
    %vm2128 = vmand %vm2112, %vm951
    %vm2129 = vmand %vm2113, %vm952
    %vm2130 = vmand %vm2114, %vm953
    %vm2131 = vmand %vm2115, %vm954
    %v2132 = vsel %vm2116, %v1974, 0.0
    %v2133 = vsel %vm2117, %v1979, 0.0
    %v2134 = vsel %vm2118, %v1984, 0.0
    %v2135 = vsel %vm2119, %v1989, 0.0
    %v2136 = vsel %vm2120, %v1994, 0.0
    %v2137 = vsel %vm2121, %v1999, 0.0
    %v2138 = vsel %vm2122, %v2004, 0.0
    %v2139 = vsel %vm2123, %v2009, 0.0
    %v2140 = vsel %vm2124, %v2014, 0.0
    %v2141 = vsel %vm2125, %v2019, 0.0
    %v2142 = vsel %vm2126, %v2024, 0.0
    %v2143 = vsel %vm2127, %v2029, 0.0
    %v2144 = vsel %vm2128, %v2034, 0.0
    %v2145 = vsel %vm2129, %v2039, 0.0
    %v2146 = vsel %vm2130, %v2044, 0.0
    %v2147 = vsel %vm2131, %v2049, 0.0
    %2148 = vadd.xlane.f32.xlu0 %v2132
    %v2149 = vpop.xlane.xlu0 %2148
    %2150 = vadd.xlane.f32.xlu0 %v2133
    %v2151 = vpop.xlane.xlu0 %2150
    %2152 = vadd.xlane.f32.xlu0 %v2134
    %v2153 = vpop.xlane.xlu0 %2152
    %2154 = vadd.xlane.f32.xlu0 %v2135
    %v2155 = vpop.xlane.xlu0 %2154
    %2156 = vadd.xlane.f32.xlu0 %v2136
    %v2157 = vpop.xlane.xlu0 %2156
    %2158 = vadd.xlane.f32.xlu0 %v2137
    %v2159 = vpop.xlane.xlu0 %2158
    %2160 = vadd.xlane.f32.xlu0 %v2138
    %v2161 = vpop.xlane.xlu0 %2160
    %2162 = vadd.xlane.f32.xlu0 %v2139
    %v2163 = vpop.xlane.xlu0 %2162
    %2164 = vadd.xlane.f32.xlu0 %v2140
    %v2165 = vpop.xlane.xlu0 %2164
    %2166 = vadd.xlane.f32.xlu0 %v2141
    %v2167 = vpop.xlane.xlu0 %2166
    %2168 = vadd.xlane.f32.xlu0 %v2142
    %v2169 = vpop.xlane.xlu0 %2168
    %2170 = vadd.xlane.f32.xlu0 %v2143
    %v2171 = vpop.xlane.xlu0 %2170
    %2172 = vadd.xlane.f32.xlu0 %v2144
    %v2173 = vpop.xlane.xlu0 %2172
    %2174 = vadd.xlane.f32.xlu0 %v2145
    %v2175 = vpop.xlane.xlu0 %2174
    %2176 = vadd.xlane.f32.xlu0 %v2146
    %v2177 = vpop.xlane.xlu0 %2176
    %2178 = vadd.xlane.f32.xlu0 %v2147
    %v2179 = vpop.xlane.xlu0 %2178
    %vm2180 = vcmp.gt.f32.partialorder %v2149, 0.0
    %vm2181 = vcmp.gt.f32.partialorder %v2151, 0.0
    %vm2182 = vcmp.gt.f32.partialorder %v2153, 0.0
    %vm2183 = vcmp.gt.f32.partialorder %v2155, 0.0
    %vm2184 = vcmp.gt.f32.partialorder %v2157, 0.0
    %vm2185 = vcmp.gt.f32.partialorder %v2159, 0.0
    %vm2186 = vcmp.gt.f32.partialorder %v2161, 0.0
    %vm2187 = vcmp.gt.f32.partialorder %v2163, 0.0
    %vm2188 = vcmp.gt.f32.partialorder %v2165, 0.0
    %vm2189 = vcmp.gt.f32.partialorder %v2167, 0.0
    %vm2190 = vcmp.gt.f32.partialorder %v2169, 0.0
    %vm2191 = vcmp.gt.f32.partialorder %v2171, 0.0
    %vm2192 = vcmp.gt.f32.partialorder %v2173, 0.0
    %vm2193 = vcmp.gt.f32.partialorder %v2175, 0.0
    %vm2194 = vcmp.gt.f32.partialorder %v2177, 0.0
    %vm2195 = vcmp.gt.f32.partialorder %v2179, 0.0
    %v2196 = vrsqrt.pop %v2149
    %v2197 = vrsqrt.pop %v2151
    %v2198 = vrsqrt.pop %v2153
    %v2199 = vrsqrt.pop %v2155
    %v2200 = vrsqrt.pop %v2157
    %v2201 = vrsqrt.pop %v2159
    %v2202 = vrsqrt.pop %v2161
    %v2203 = vrsqrt.pop %v2163
    %v2204 = vrsqrt.pop %v2165
    %v2205 = vrsqrt.pop %v2167
    %v2206 = vrsqrt.pop %v2169
    %v2207 = vrsqrt.pop %v2171
    %v2208 = vrsqrt.pop %v2173
    %v2209 = vrsqrt.pop %v2175
    %v2210 = vrsqrt.pop %v2177
    %v2211 = vrsqrt.pop %v2179
    %v2212 = vsel %vm2180, %v2196, 0.0
    %v2213 = vsel %vm2181, %v2197, 0.0
    %v2214 = vsel %vm2182, %v2198, 0.0
    %v2215 = vsel %vm2183, %v2199, 0.0
    %v2216 = vsel %vm2184, %v2200, 0.0
    %v2217 = vsel %vm2185, %v2201, 0.0
    %v2218 = vsel %vm2186, %v2202, 0.0
    %v2219 = vsel %vm2187, %v2203, 0.0
    %v2220 = vsel %vm2188, %v2204, 0.0
    %v2221 = vsel %vm2189, %v2205, 0.0
    %v2222 = vsel %vm2190, %v2206, 0.0
    %v2223 = vsel %vm2191, %v2207, 0.0
    %v2224 = vsel %vm2192, %v2208, 0.0
    %v2225 = vsel %vm2193, %v2209, 0.0
    %v2226 = vsel %vm2194, %v2210, 0.0
    %v2227 = vsel %vm2195, %v2211, 0.0
    %v2228 = vadd.f32 %v2132, %v2133
    %v2229 = vadd.f32 %v2228, %v2134
    %v2230 = vadd.f32 %v2229, %v2135
    %v2231 = vadd.f32 %v2230, %v2136
    %v2232 = vadd.f32 %v2231, %v2137
    %v2233 = vadd.f32 %v2232, %v2138
    %v2234 = vadd.f32 %v2233, %v2139
    %v2235 = vadd.f32 %v2234, %v2140
    %v2236 = vadd.f32 %v2235, %v2141
    %v2237 = vadd.f32 %v2236, %v2142
    %v2238 = vadd.f32 %v2237, %v2143
    %v2239 = vadd.f32 %v2238, %v2144
    %v2240 = vadd.f32 %v2239, %v2145
    %v2241 = vadd.f32 %v2240, %v2146
    %v2242 = vadd.f32 %v2241, %v2147
    %v2243 = vrot.slane %v2242, 4
    %v2244 = vadd.f32 %v2242, %v2243
    %v2245 = vrot.slane %v2244, 2
    %v2246 = vadd.f32 %v2244, %v2245
    %v2247 = vrot.slane %v2246, 1
    %v2248 = vadd.f32 %v2246, %v2247
    %vm2249 = vcmp.gt.f32.partialorder %v2248, 0.0
    %v2250 = vrsqrt.pop %v2248
    %v2251 = vsel %vm2249, %v2250, 0.0
    %v2252 = vmul.f32 %v2212, %v2132
    %v2253 = vmul.f32 %v2213, %v2133
    %v2254 = vmul.f32 %v2214, %v2134
    %v2255 = vmul.f32 %v2215, %v2135
    %v2256 = vmul.f32 %v2216, %v2136
    %v2257 = vmul.f32 %v2217, %v2137
    %v2258 = vmul.f32 %v2218, %v2138
    %v2259 = vmul.f32 %v2219, %v2139
    %v2260 = vmul.f32 %v2220, %v2140
    %v2261 = vmul.f32 %v2221, %v2141
    %v2262 = vmul.f32 %v2222, %v2142
    %v2263 = vmul.f32 %v2223, %v2143
    %v2264 = vmul.f32 %v2224, %v2144
    %v2265 = vmul.f32 %v2225, %v2145
    %v2266 = vmul.f32 %v2226, %v2146
    %v2267 = vmul.f32 %v2227, %v2147
    %v2268 = vmul.f32 %v2252, %v2251
    %v2269 = vmul.f32 %v2253, %v2251
    %v2270 = vmul.f32 %v2254, %v2251
    %v2271 = vmul.f32 %v2255, %v2251
    %v2272 = vmul.f32 %v2256, %v2251
    %v2273 = vmul.f32 %v2257, %v2251
    %v2274 = vmul.f32 %v2258, %v2251
    %v2275 = vmul.f32 %v2259, %v2251
    %v2276 = vmul.f32 %v2260, %v2251
    %v2277 = vmul.f32 %v2261, %v2251
    %v2278 = vmul.f32 %v2262, %v2251
    %v2279 = vmul.f32 %v2263, %v2251
    %v2280 = vmul.f32 %v2264, %v2251
    %v2281 = vmul.f32 %v2265, %v2251
    %v2282 = vmul.f32 %v2266, %v2251
    %v2283 = vmul.f32 %v2267, %v2251
    %v2284 = vsel %vm2100, 1, 0
    %v2285 = vsel %vm2101, 1, 0
    %v2286 = vsel %vm2102, 1, 0
    %v2287 = vsel %vm2103, 1, 0
    %v2288 = vsel %vm2104, 1, 0
    %v2289 = vsel %vm2105, 1, 0
    %v2290 = vsel %vm2106, 1, 0
    %v2291 = vsel %vm2107, 1, 0
    %v2292 = vsel %vm2108, 1, 0
    %v2293 = vsel %vm2109, 1, 0
    %v2294 = vsel %vm2110, 1, 0
    %v2295 = vsel %vm2111, 1, 0
    %v2296 = vsel %vm2112, 1, 0
    %v2297 = vsel %vm2113, 1, 0
    %v2298 = vsel %vm2114, 1, 0
    %v2299 = vsel %vm2115, 1, 0
    %v2300 = vcvt.s32.f32 %v2284
    %v2301 = vcvt.s32.f32 %v2285
    %v2302 = vcvt.s32.f32 %v2286
    %v2303 = vcvt.s32.f32 %v2287
    %v2304 = vcvt.s32.f32 %v2288
    %v2305 = vcvt.s32.f32 %v2289
    %v2306 = vcvt.s32.f32 %v2290
    %v2307 = vcvt.s32.f32 %v2291
    %v2308 = vcvt.s32.f32 %v2292
    %v2309 = vcvt.s32.f32 %v2293
    %v2310 = vcvt.s32.f32 %v2294
    %v2311 = vcvt.s32.f32 %v2295
    %v2312 = vcvt.s32.f32 %v2296
    %v2313 = vcvt.s32.f32 %v2297
    %v2314 = vcvt.s32.f32 %v2298
    %v2315 = vcvt.s32.f32 %v2299
    %v2316 = vadd.f32 %v2300, %v2301
    %v2317 = vadd.f32 %v2316, %v2302
    %v2318 = vadd.f32 %v2317, %v2303
    %v2319 = vadd.f32 %v2318, %v2304
    %v2320 = vadd.f32 %v2319, %v2305
    %v2321 = vadd.f32 %v2320, %v2306
    %v2322 = vadd.f32 %v2321, %v2307
    %v2323 = vadd.f32 %v2322, %v2308
    %v2324 = vadd.f32 %v2323, %v2309
    %v2325 = vadd.f32 %v2324, %v2310
    %v2326 = vadd.f32 %v2325, %v2311
    %v2327 = vadd.f32 %v2326, %v2312
    %v2328 = vadd.f32 %v2327, %v2313
    %v2329 = vadd.f32 %v2328, %v2314
    %v2330 = vadd.f32 %v2329, %v2315
    %v2331 = vrot.slane %v2330, 4
    %v2332 = vadd.f32 %v2330, %v2331
    %v2333 = vrot.slane %v2332, 2
    %v2334 = vadd.f32 %v2332, %v2333
    %v2335 = vrot.slane %v2334, 1
    %v2336 = vadd.f32 %v2334, %v2335
    %v2337 = vadd.f32 %v2336, 1.0
    %v2338 = vrcp.pop %v2337
    %v2339 = vmul.f32 1.0, %v2338
    %v2340 = vsel %vm136, %v2339, %v2268
    %v2341 = vsel %vm137, %v2339, %v2269
    %v2342 = vsel %vm138, %v2339, %v2270
    %v2343 = vsel %vm139, %v2339, %v2271
    %v2344 = vsel %vm140, %v2339, %v2272
    %v2345 = vsel %vm141, %v2339, %v2273
    %v2346 = vsel %vm142, %v2339, %v2274
    %v2347 = vsel %vm143, %v2339, %v2275
    %v2348 = vsel %vm144, %v2339, %v2276
    %v2349 = vsel %vm145, %v2339, %v2277
    %v2350 = vsel %vm146, %v2339, %v2278
    %v2351 = vsel %vm147, %v2339, %v2279
    %v2352 = vsel %vm148, %v2339, %v2280
    %v2353 = vsel %vm149, %v2339, %v2281
    %v2354 = vsel %vm150, %v2339, %v2282
    %v2355 = vsel %vm151, %v2339, %v2283
    %v2356 = vmul.f32 %v2340, 1.442695
    %v2357 = vpow.pop %v2356
    %v2358 = vmul.f32 %v2341, 1.442695
    %v2359 = vpow.pop %v2358
    %v2360 = vmul.f32 %v2342, 1.442695
    %v2361 = vpow.pop %v2360
    %v2362 = vmul.f32 %v2343, 1.442695
    %v2363 = vpow.pop %v2362
    %v2364 = vmul.f32 %v2344, 1.442695
    %v2365 = vpow.pop %v2364
    %v2366 = vmul.f32 %v2345, 1.442695
    %v2367 = vpow.pop %v2366
    %v2368 = vmul.f32 %v2346, 1.442695
    %v2369 = vpow.pop %v2368
    %v2370 = vmul.f32 %v2347, 1.442695
    %v2371 = vpow.pop %v2370
    %v2372 = vmul.f32 %v2348, 1.442695
    %v2373 = vpow.pop %v2372
    %v2374 = vmul.f32 %v2349, 1.442695
    %v2375 = vpow.pop %v2374
    %v2376 = vmul.f32 %v2350, 1.442695
    %v2377 = vpow.pop %v2376
    %v2378 = vmul.f32 %v2351, 1.442695
    %v2379 = vpow.pop %v2378
    %v2380 = vmul.f32 %v2352, 1.442695
    %v2381 = vpow.pop %v2380
    %v2382 = vmul.f32 %v2353, 1.442695
    %v2383 = vpow.pop %v2382
    %v2384 = vmul.f32 %v2354, 1.442695
    %v2385 = vpow.pop %v2384
    %v2386 = vmul.f32 %v2355, 1.442695
    %v2387 = vpow.pop %v2386
    %vm2388 = vmor %vm2116, %vm136
    %vm2389 = vmor %vm2117, %vm137
    %vm2390 = vmor %vm2118, %vm138
    %vm2391 = vmor %vm2119, %vm139
    %vm2392 = vmor %vm2120, %vm140
    %vm2393 = vmor %vm2121, %vm141
    %vm2394 = vmor %vm2122, %vm142
    %vm2395 = vmor %vm2123, %vm143
    %vm2396 = vmor %vm2124, %vm144
    %vm2397 = vmor %vm2125, %vm145
    %vm2398 = vmor %vm2126, %vm146
    %vm2399 = vmor %vm2127, %vm147
    %vm2400 = vmor %vm2128, %vm148
    %vm2401 = vmor %vm2129, %vm149
    %vm2402 = vmor %vm2130, %vm150
    %vm2403 = vmor %vm2131, %vm151
    %v2404 = vsel %vm2388, %v2357, 0.0
    %v2405 = vsel %vm2389, %v2359, 0.0
    %v2406 = vsel %vm2390, %v2361, 0.0
    %v2407 = vsel %vm2391, %v2363, 0.0
    %v2408 = vsel %vm2392, %v2365, 0.0
    %v2409 = vsel %vm2393, %v2367, 0.0
    %v2410 = vsel %vm2394, %v2369, 0.0
    %v2411 = vsel %vm2395, %v2371, 0.0
    %v2412 = vsel %vm2396, %v2373, 0.0
    %v2413 = vsel %vm2397, %v2375, 0.0
    %v2414 = vsel %vm2398, %v2377, 0.0
    %v2415 = vsel %vm2399, %v2379, 0.0
    %v2416 = vsel %vm2400, %v2381, 0.0
    %v2417 = vsel %vm2401, %v2383, 0.0
    %v2418 = vsel %vm2402, %v2385, 0.0
    %v2419 = vsel %vm2403, %v2387, 0.0
    %2420 = vmatprep.subr.mxu0 0.0
    %2421 = vmatpush1.msra.mxu0 %v489
    %2422 = vmatprep.subr.mxu0 0.0
    %2423 = vmatpush1.msra.mxu0 %v490
    %2424 = vmatprep.subr.mxu0 0.0
    %2425 = vmatpush1.msra.mxu0 %v491
    %2426 = vmatprep.subr.mxu0 0.0
    %2427 = vmatpush1.msra.mxu0 %v492
    %2428 = vmatprep.subr.mxu0 0.0
    %2429 = vmatpush1.msra.mxu0 %v493
    %2430 = vmatprep.subr.mxu0 0.0
    %2431 = vmatpush1.msra.mxu0 %v494
    %2432 = vmatprep.subr.mxu0 0.0
    %2433 = vmatpush1.msra.mxu0 %v495
    %2434 = vmatprep.subr.mxu0 0.0
    %2435 = vmatpush1.msra.mxu0 %v496
    %2436 = vmatprep.subr.mxu0 0.0
    %2437 = vmatpush1.msra.mxu0 %v497
    %2438 = vmatprep.subr.mxu0 0.0
    %2439 = vmatpush1.msra.mxu0 %v498
    %2440 = vmatprep.subr.mxu0 0.0
    %2441 = vmatpush1.msra.mxu0 %v499
    %2442 = vmatprep.subr.mxu0 0.0
    %2443 = vmatpush1.msra.mxu0 %v500
    %2444 = vmatprep.subr.mxu0 0.0
    %2445 = vmatpush1.msra.mxu0 %v501
    %2446 = vmatprep.subr.mxu0 0.0
    %2447 = vmatpush1.msra.mxu0 %v502
    %2448 = vmatprep.subr.mxu0 0.0
    %2449 = vmatpush1.msra.mxu0 %v503
    %2450 = vmatprep.subr.mxu0 0.0
    %2451 = vmatpush1.msra.mxu0 %v504
    %2452 = vmatprep.subr.mxu0 0.0
    %2453 = vmatpush1.msra.mxu0 0.0
    %2454 = vmatprep.subr.mxu0 0.0
    %2455 = vmatpush1.msra.mxu0 0.0
    %2456 = vmatprep.subr.mxu0 0.0
    %2457 = vmatpush1.msra.mxu0 0.0
    %2458 = vmatprep.subr.mxu0 0.0
    %2459 = vmatpush1.msra.mxu0 0.0
    %2460 = vmatprep.subr.mxu0 0.0
    %2461 = vmatpush1.msra.mxu0 0.0
    %2462 = vmatprep.subr.mxu0 0.0
    %2463 = vmatpush1.msra.mxu0 0.0
    %2464 = vmatprep.subr.mxu0 0.0
    %2465 = vmatpush1.msra.mxu0 0.0
    %2466 = vmatprep.subr.mxu0 0.0
    %2467 = vmatpush1.msra.mxu0 0.0
    %2468 = vmatprep.subr.mxu0 0.0
    %2469 = vmatpush1.msra.mxu0 0.0
    %2470 = vmatprep.subr.mxu0 0.0
    %2471 = vmatpush1.msra.mxu0 0.0
    %2472 = vmatprep.subr.mxu0 0.0
    %2473 = vmatpush1.msra.mxu0 0.0
    %2474 = vmatprep.subr.mxu0 0.0
    %2475 = vmatpush1.msra.mxu0 0.0
    %2476 = vmatprep.subr.mxu0 0.0
    %2477 = vmatpush1.msra.mxu0 0.0
    %2478 = vmatprep.subr.mxu0 0.0
    %2479 = vmatpush1.msra.mxu0 0.0
    %2480 = vmatprep.subr.mxu0 0.0
    %2481 = vmatpush1.msra.mxu0 0.0
    %2482 = vmatprep.subr.mxu0 0.0
    %2483 = vmatpush1.msra.mxu0 0.0
    %2484 = vmatprep.mubr.f32.mxu0 0.0
    %2485 = vmatmul.mubr.f32.gmra.mrb[0].mxu0 %v1683
    %v2486 = vpop.f32.mrb[0].mxu0
    %v2487 = vadd.f32 0.0, %v2486
    %v2488 = vpop.f32.mrb[0].mxu0
    %2489 = vmatprep.mubr.f32.mxu0 0.0
    %2490 = vmatmul.mubr.f32.gmra.mrb[0].mxu0 %v1684
    %v2491 = vpop.f32.mrb[0].mxu0
    %v2492 = vadd.f32 0.0, %v2491
    %v2493 = vpop.f32.mrb[0].mxu0
    %2494 = vmatprep.mubr.f32.mxu0 0.0
    %2495 = vmatmul.mubr.f32.gmra.mrb[0].mxu0 %v1685
    %v2496 = vpop.f32.mrb[0].mxu0
    %v2497 = vadd.f32 0.0, %v2496
    %v2498 = vpop.f32.mrb[0].mxu0
    %2499 = vmatprep.mubr.f32.mxu0 0.0
    %2500 = vmatmul.mubr.f32.gmra.mrb[0].mxu0 %v1686
    %v2501 = vpop.f32.mrb[0].mxu0
    %v2502 = vadd.f32 0.0, %v2501
    %v2503 = vpop.f32.mrb[0].mxu0
    %2504 = vmatprep.mubr.f32.mxu0 0.0
    %2505 = vmatmul.mubr.f32.gmra.mrb[0].mxu0 %v1687
    %v2506 = vpop.f32.mrb[0].mxu0
    %v2507 = vadd.f32 0.0, %v2506
    %v2508 = vpop.f32.mrb[0].mxu0
    %2509 = vmatprep.mubr.f32.mxu0 0.0
    %2510 = vmatmul.mubr.f32.gmra.mrb[0].mxu0 %v1688
    %v2511 = vpop.f32.mrb[0].mxu0
    %v2512 = vadd.f32 0.0, %v2511
    %v2513 = vpop.f32.mrb[0].mxu0
    %2514 = vmatprep.mubr.f32.mxu0 0.0
    %2515 = vmatmul.mubr.f32.gmra.mrb[0].mxu0 %v1689
    %v2516 = vpop.f32.mrb[0].mxu0
    %v2517 = vadd.f32 0.0, %v2516
    %v2518 = vpop.f32.mrb[0].mxu0
    %2519 = vmatprep.mubr.f32.mxu0 0.0
    %2520 = vmatmul.mubr.f32.gmra.mrb[0].mxu0 %v1690
    %v2521 = vpop.f32.mrb[0].mxu0
    %v2522 = vadd.f32 0.0, %v2521
    %v2523 = vpop.f32.mrb[0].mxu0
    %2524 = vmatprep.mubr.f32.mxu0 0.0
    %2525 = vmatmul.mubr.f32.gmra.mrb[0].mxu0 %v1691
    %v2526 = vpop.f32.mrb[0].mxu0
    %v2527 = vadd.f32 0.0, %v2526
    %v2528 = vpop.f32.mrb[0].mxu0
    %2529 = vmatprep.mubr.f32.mxu0 0.0
    %2530 = vmatmul.mubr.f32.gmra.mrb[0].mxu0 %v1692
    %v2531 = vpop.f32.mrb[0].mxu0
    %v2532 = vadd.f32 0.0, %v2531
    %v2533 = vpop.f32.mrb[0].mxu0
    %2534 = vmatprep.mubr.f32.mxu0 0.0
    %2535 = vmatmul.mubr.f32.gmra.mrb[0].mxu0 %v1693
    %v2536 = vpop.f32.mrb[0].mxu0
    %v2537 = vadd.f32 0.0, %v2536
    %v2538 = vpop.f32.mrb[0].mxu0
    %2539 = vmatprep.mubr.f32.mxu0 0.0
    %2540 = vmatmul.mubr.f32.gmra.mrb[0].mxu0 %v1694
    %v2541 = vpop.f32.mrb[0].mxu0
    %v2542 = vadd.f32 0.0, %v2541
    %v2543 = vpop.f32.mrb[0].mxu0
    %2544 = vmatprep.mubr.f32.mxu0 0.0
    %2545 = vmatmul.mubr.f32.gmra.mrb[0].mxu0 %v1695
    %v2546 = vpop.f32.mrb[0].mxu0
    %v2547 = vadd.f32 0.0, %v2546
    %v2548 = vpop.f32.mrb[0].mxu0
    %2549 = vmatprep.mubr.f32.mxu0 0.0
    %2550 = vmatmul.mubr.f32.gmra.mrb[0].mxu0 %v1696
    %v2551 = vpop.f32.mrb[0].mxu0
    %v2552 = vadd.f32 0.0, %v2551
    %v2553 = vpop.f32.mrb[0].mxu0
    %2554 = vmatprep.mubr.f32.mxu0 0.0
    %2555 = vmatmul.mubr.f32.gmra.mrb[0].mxu0 %v1697
    %v2556 = vpop.f32.mrb[0].mxu0
    %v2557 = vadd.f32 0.0, %v2556
    %v2558 = vpop.f32.mrb[0].mxu0
    %2559 = vmatprep.mubr.f32.mxu0 0.0
    %2560 = vmatmul.mubr.f32.gmra.mrb[0].mxu0 %v1698
    %v2561 = vpop.f32.mrb[0].mxu0
    %v2562 = vadd.f32 0.0, %v2561
    %v2563 = vpop.f32.mrb[0].mxu0
    %2564 = vdwg.mxu0
    %2565 = vadd.xlane.f32.xlu0 %v2404
    %v2566 = vpop.xlane.xlu0 %2565
    %2567 = vadd.xlane.f32.xlu0 %v2405
    %v2568 = vpop.xlane.xlu0 %2567
    %2569 = vadd.xlane.f32.xlu0 %v2406
    %v2570 = vpop.xlane.xlu0 %2569
    %2571 = vadd.xlane.f32.xlu0 %v2407
    %v2572 = vpop.xlane.xlu0 %2571
    %2573 = vadd.xlane.f32.xlu0 %v2408
    %v2574 = vpop.xlane.xlu0 %2573
    %2575 = vadd.xlane.f32.xlu0 %v2409
    %v2576 = vpop.xlane.xlu0 %2575
    %2577 = vadd.xlane.f32.xlu0 %v2410
    %v2578 = vpop.xlane.xlu0 %2577
    %2579 = vadd.xlane.f32.xlu0 %v2411
    %v2580 = vpop.xlane.xlu0 %2579
    %2581 = vadd.xlane.f32.xlu0 %v2412
    %v2582 = vpop.xlane.xlu0 %2581
    %2583 = vadd.xlane.f32.xlu0 %v2413
    %v2584 = vpop.xlane.xlu0 %2583
    %2585 = vadd.xlane.f32.xlu0 %v2414
    %v2586 = vpop.xlane.xlu0 %2585
    %2587 = vadd.xlane.f32.xlu0 %v2415
    %v2588 = vpop.xlane.xlu0 %2587
    %2589 = vadd.xlane.f32.xlu0 %v2416
    %v2590 = vpop.xlane.xlu0 %2589
    %2591 = vadd.xlane.f32.xlu0 %v2417
    %v2592 = vpop.xlane.xlu0 %2591
    %2593 = vadd.xlane.f32.xlu0 %v2418
    %v2594 = vpop.xlane.xlu0 %2593
    %2595 = vadd.xlane.f32.xlu0 %v2419
    %v2596 = vpop.xlane.xlu0 %2595
    %vm2597 = vcmp.gt.f32.partialorder %v2566, 0.0
    %vm2598 = vcmp.gt.f32.partialorder %v2568, 0.0
    %vm2599 = vcmp.gt.f32.partialorder %v2570, 0.0
    %vm2600 = vcmp.gt.f32.partialorder %v2572, 0.0
    %vm2601 = vcmp.gt.f32.partialorder %v2574, 0.0
    %vm2602 = vcmp.gt.f32.partialorder %v2576, 0.0
    %vm2603 = vcmp.gt.f32.partialorder %v2578, 0.0
    %vm2604 = vcmp.gt.f32.partialorder %v2580, 0.0
    %vm2605 = vcmp.gt.f32.partialorder %v2582, 0.0
    %vm2606 = vcmp.gt.f32.partialorder %v2584, 0.0
    %vm2607 = vcmp.gt.f32.partialorder %v2586, 0.0
    %vm2608 = vcmp.gt.f32.partialorder %v2588, 0.0
    %vm2609 = vcmp.gt.f32.partialorder %v2590, 0.0
    %vm2610 = vcmp.gt.f32.partialorder %v2592, 0.0
    %vm2611 = vcmp.gt.f32.partialorder %v2594, 0.0
    %vm2612 = vcmp.gt.f32.partialorder %v2596, 0.0
    %v2613 = vrsqrt.pop %v2566
    %v2614 = vrsqrt.pop %v2568
    %v2615 = vrsqrt.pop %v2570
    %v2616 = vrsqrt.pop %v2572
    %v2617 = vrsqrt.pop %v2574
    %v2618 = vrsqrt.pop %v2576
    %v2619 = vrsqrt.pop %v2578
    %v2620 = vrsqrt.pop %v2580
    %v2621 = vrsqrt.pop %v2582
    %v2622 = vrsqrt.pop %v2584
    %v2623 = vrsqrt.pop %v2586
    %v2624 = vrsqrt.pop %v2588
    %v2625 = vrsqrt.pop %v2590
    %v2626 = vrsqrt.pop %v2592
    %v2627 = vrsqrt.pop %v2594
    %v2628 = vrsqrt.pop %v2596
    %v2629 = vsel %vm2597, %v2613, 0.0
    %v2630 = vsel %vm2598, %v2614, 0.0
    %v2631 = vsel %vm2599, %v2615, 0.0
    %v2632 = vsel %vm2600, %v2616, 0.0
    %v2633 = vsel %vm2601, %v2617, 0.0
    %v2634 = vsel %vm2602, %v2618, 0.0
    %v2635 = vsel %vm2603, %v2619, 0.0
    %v2636 = vsel %vm2604, %v2620, 0.0
    %v2637 = vsel %vm2605, %v2621, 0.0
    %v2638 = vsel %vm2606, %v2622, 0.0
    %v2639 = vsel %vm2607, %v2623, 0.0
    %v2640 = vsel %vm2608, %v2624, 0.0
    %v2641 = vsel %vm2609, %v2625, 0.0
    %v2642 = vsel %vm2610, %v2626, 0.0
    %v2643 = vsel %vm2611, %v2627, 0.0
    %v2644 = vsel %vm2612, %v2628, 0.0
    %v2645 = vmul.f32 %v2487, %v2629
    %v2646 = vmul.f32 %v2492, %v2630
    %v2647 = vmul.f32 %v2497, %v2631
    %v2648 = vmul.f32 %v2502, %v2632
    %v2649 = vmul.f32 %v2507, %v2633
    %v2650 = vmul.f32 %v2512, %v2634
    %v2651 = vmul.f32 %v2517, %v2635
    %v2652 = vmul.f32 %v2522, %v2636
    %v2653 = vmul.f32 %v2527, %v2637
    %v2654 = vmul.f32 %v2532, %v2638
    %v2655 = vmul.f32 %v2537, %v2639
    %v2656 = vmul.f32 %v2542, %v2640
    %v2657 = vmul.f32 %v2547, %v2641
    %v2658 = vmul.f32 %v2552, %v2642
    %v2659 = vmul.f32 %v2557, %v2643
    %v2660 = vmul.f32 %v2562, %v2644
    %2661 = vmatprep.subr.mxu0 0.0
    %2662 = vmatpush1.msra.mxu0 %v2645
    %2663 = vmatprep.subr.mxu0 0.0
    %2664 = vmatpush1.msra.mxu0 %v2646
    %2665 = vmatprep.subr.mxu0 0.0
    %2666 = vmatpush1.msra.mxu0 %v2647
    %2667 = vmatprep.subr.mxu0 0.0
    %2668 = vmatpush1.msra.mxu0 %v2648
    %2669 = vmatprep.subr.mxu0 0.0
    %2670 = vmatpush1.msra.mxu0 %v2649
    %2671 = vmatprep.subr.mxu0 0.0
    %2672 = vmatpush1.msra.mxu0 %v2650
    %2673 = vmatprep.subr.mxu0 0.0
    %2674 = vmatpush1.msra.mxu0 %v2651
    %2675 = vmatprep.subr.mxu0 0.0
    %2676 = vmatpush1.msra.mxu0 %v2652
    %2677 = vmatprep.subr.mxu0 0.0
    %2678 = vmatpush1.msra.mxu0 %v2653
    %2679 = vmatprep.subr.mxu0 0.0
    %2680 = vmatpush1.msra.mxu0 %v2654
    %2681 = vmatprep.subr.mxu0 0.0
    %2682 = vmatpush1.msra.mxu0 %v2655
    %2683 = vmatprep.subr.mxu0 0.0
    %2684 = vmatpush1.msra.mxu0 %v2656
    %2685 = vmatprep.subr.mxu0 0.0
    %2686 = vmatpush1.msra.mxu0 %v2657
    %2687 = vmatprep.subr.mxu0 0.0
    %2688 = vmatpush1.msra.mxu0 %v2658
    %2689 = vmatprep.subr.mxu0 0.0
    %2690 = vmatpush1.msra.mxu0 %v2659
    %2691 = vmatprep.subr.mxu0 0.0
    %2692 = vmatpush1.msra.mxu0 %v2660
    %2693 = vmatprep.subr.mxu0 0.0
    %2694 = vmatpush1.msra.mxu0 0.0
    %2695 = vmatprep.subr.mxu0 0.0
    %2696 = vmatpush1.msra.mxu0 0.0
    %2697 = vmatprep.subr.mxu0 0.0
    %2698 = vmatpush1.msra.mxu0 0.0
    %2699 = vmatprep.subr.mxu0 0.0
    %2700 = vmatpush1.msra.mxu0 0.0
    %2701 = vmatprep.subr.mxu0 0.0
    %2702 = vmatpush1.msra.mxu0 0.0
    %2703 = vmatprep.subr.mxu0 0.0
    %2704 = vmatpush1.msra.mxu0 0.0
    %2705 = vmatprep.subr.mxu0 0.0
    %2706 = vmatpush1.msra.mxu0 0.0
    %2707 = vmatprep.subr.mxu0 0.0
    %2708 = vmatpush1.msra.mxu0 0.0
    %2709 = vmatprep.subr.mxu0 0.0
    %2710 = vmatpush1.msra.mxu0 0.0
    %2711 = vmatprep.subr.mxu0 0.0
    %2712 = vmatpush1.msra.mxu0 0.0
    %2713 = vmatprep.subr.mxu0 0.0
    %2714 = vmatpush1.msra.mxu0 0.0
    %2715 = vmatprep.subr.mxu0 0.0
    %2716 = vmatpush1.msra.mxu0 0.0
    %2717 = vmatprep.subr.mxu0 0.0
    %2718 = vmatpush1.msra.mxu0 0.0
    %2719 = vmatprep.subr.mxu0 0.0
    %2720 = vmatpush1.msra.mxu0 0.0
    %2721 = vmatprep.subr.mxu0 0.0
    %2722 = vmatpush1.msra.mxu0 0.0
    %2723 = vmatprep.subr.mxu0 0.0
    %2724 = vmatpush1.msra.mxu0 0.0
    %2725 = vmatprep.mubr.f32.mxu0 0.0
    %2726 = vmatmul.mubr.f32.gmra.mrb[0].mxu0 %v2404
    %v2727 = vpop.f32.mrb[0].mxu0
    %v2728 = vadd.f32 0.0, %v2727
    %v2729 = vpop.f32.mrb[0].mxu0
    %2730 = vmatprep.mubr.f32.mxu0 0.0
    %2731 = vmatmul.mubr.f32.gmra.mrb[0].mxu0 %v2405
    %v2732 = vpop.f32.mrb[0].mxu0
    %v2733 = vadd.f32 0.0, %v2732
    %v2734 = vpop.f32.mrb[0].mxu0
    %2735 = vmatprep.mubr.f32.mxu0 0.0
    %2736 = vmatmul.mubr.f32.gmra.mrb[0].mxu0 %v2406
    %v2737 = vpop.f32.mrb[0].mxu0
    %v2738 = vadd.f32 0.0, %v2737
    %v2739 = vpop.f32.mrb[0].mxu0
    %2740 = vmatprep.mubr.f32.mxu0 0.0
    %2741 = vmatmul.mubr.f32.gmra.mrb[0].mxu0 %v2407
    %v2742 = vpop.f32.mrb[0].mxu0
    %v2743 = vadd.f32 0.0, %v2742
    %v2744 = vpop.f32.mrb[0].mxu0
    %2745 = vmatprep.mubr.f32.mxu0 0.0
    %2746 = vmatmul.mubr.f32.gmra.mrb[0].mxu0 %v2408
    %v2747 = vpop.f32.mrb[0].mxu0
    %v2748 = vadd.f32 0.0, %v2747
    %v2749 = vpop.f32.mrb[0].mxu0
    %2750 = vmatprep.mubr.f32.mxu0 0.0
    %2751 = vmatmul.mubr.f32.gmra.mrb[0].mxu0 %v2409
    %v2752 = vpop.f32.mrb[0].mxu0
    %v2753 = vadd.f32 0.0, %v2752
    %v2754 = vpop.f32.mrb[0].mxu0
    %2755 = vmatprep.mubr.f32.mxu0 0.0
    %2756 = vmatmul.mubr.f32.gmra.mrb[0].mxu0 %v2410
    %v2757 = vpop.f32.mrb[0].mxu0
    %v2758 = vadd.f32 0.0, %v2757
    %v2759 = vpop.f32.mrb[0].mxu0
    %2760 = vmatprep.mubr.f32.mxu0 0.0
    %2761 = vmatmul.mubr.f32.gmra.mrb[0].mxu0 %v2411
    %v2762 = vpop.f32.mrb[0].mxu0
    %v2763 = vadd.f32 0.0, %v2762
    %v2764 = vpop.f32.mrb[0].mxu0
    %2765 = vmatprep.mubr.f32.mxu0 0.0
    %2766 = vmatmul.mubr.f32.gmra.mrb[0].mxu0 %v2412
    %v2767 = vpop.f32.mrb[0].mxu0
    %v2768 = vadd.f32 0.0, %v2767
    %v2769 = vpop.f32.mrb[0].mxu0
    %2770 = vmatprep.mubr.f32.mxu0 0.0
    %2771 = vmatmul.mubr.f32.gmra.mrb[0].mxu0 %v2413
    %v2772 = vpop.f32.mrb[0].mxu0
    %v2773 = vadd.f32 0.0, %v2772
    %v2774 = vpop.f32.mrb[0].mxu0
    %2775 = vmatprep.mubr.f32.mxu0 0.0
    %2776 = vmatmul.mubr.f32.gmra.mrb[0].mxu0 %v2414
    %v2777 = vpop.f32.mrb[0].mxu0
    %v2778 = vadd.f32 0.0, %v2777
    %v2779 = vpop.f32.mrb[0].mxu0
    %2780 = vmatprep.mubr.f32.mxu0 0.0
    %2781 = vmatmul.mubr.f32.gmra.mrb[0].mxu0 %v2415
    %v2782 = vpop.f32.mrb[0].mxu0
    %v2783 = vadd.f32 0.0, %v2782
    %v2784 = vpop.f32.mrb[0].mxu0
    %2785 = vmatprep.mubr.f32.mxu0 0.0
    %2786 = vmatmul.mubr.f32.gmra.mrb[0].mxu0 %v2416
    %v2787 = vpop.f32.mrb[0].mxu0
    %v2788 = vadd.f32 0.0, %v2787
    %v2789 = vpop.f32.mrb[0].mxu0
    %2790 = vmatprep.mubr.f32.mxu0 0.0
    %2791 = vmatmul.mubr.f32.gmra.mrb[0].mxu0 %v2417
    %v2792 = vpop.f32.mrb[0].mxu0
    %v2793 = vadd.f32 0.0, %v2792
    %v2794 = vpop.f32.mrb[0].mxu0
    %2795 = vmatprep.mubr.f32.mxu0 0.0
    %2796 = vmatmul.mubr.f32.gmra.mrb[0].mxu0 %v2418
    %v2797 = vpop.f32.mrb[0].mxu0
    %v2798 = vadd.f32 0.0, %v2797
    %v2799 = vpop.f32.mrb[0].mxu0
    %2800 = vmatprep.mubr.f32.mxu0 0.0
    %2801 = vmatmul.mubr.f32.gmra.mrb[0].mxu0 %v2419
    %v2802 = vpop.f32.mrb[0].mxu0
    %v2803 = vadd.f32 0.0, %v2802
    %v2804 = vpop.f32.mrb[0].mxu0
    %2805 = vdwg.mxu0
    %v2806 = vmul.f32 %v2728, %v2629
    %v2807 = vmul.f32 %v2733, %v2630
    %v2808 = vmul.f32 %v2738, %v2631
    %v2809 = vmul.f32 %v2743, %v2632
    %v2810 = vmul.f32 %v2748, %v2633
    %v2811 = vmul.f32 %v2753, %v2634
    %v2812 = vmul.f32 %v2758, %v2635
    %v2813 = vmul.f32 %v2763, %v2636
    %v2814 = vmul.f32 %v2768, %v2637
    %v2815 = vmul.f32 %v2773, %v2638
    %v2816 = vmul.f32 %v2778, %v2639
    %v2817 = vmul.f32 %v2783, %v2640
    %v2818 = vmul.f32 %v2788, %v2641
    %v2819 = vmul.f32 %v2793, %v2642
    %v2820 = vmul.f32 %v2798, %v2643
    %v2821 = vmul.f32 %v2803, %v2644
    %v2823 = vlaneseq
    %v2824 = vshrl.u32 %v2823, 7
    %v2825 = vsub.s32 0, %v2824
    %v2826 = vrot.slane %v505, %v2825
    %v2828 = vadd.f32 %v2806, %v2826
    %v2829 = vadd.f32 %v2807, %v2826
    %v2830 = vadd.f32 %v2808, %v2826
    %v2831 = vadd.f32 %v2809, %v2826
    %v2832 = vadd.f32 %v2810, %v2826
    %v2833 = vadd.f32 %v2811, %v2826
    %v2834 = vadd.f32 %v2812, %v2826
    %v2835 = vadd.f32 %v2813, %v2826
    %v2836 = vadd.f32 %v2814, %v2826
    %v2837 = vadd.f32 %v2815, %v2826
    %v2838 = vadd.f32 %v2816, %v2826
    %v2839 = vadd.f32 %v2817, %v2826
    %v2840 = vadd.f32 %v2818, %v2826
    %v2841 = vadd.f32 %v2819, %v2826
    %v2842 = vadd.f32 %v2820, %v2826
    %v2843 = vadd.f32 %v2821, %v2826
    %v2844 = vmax.f32 %v2828, 0.0
    %v2845 = vmax.f32 %v2829, 0.0
    %v2846 = vmax.f32 %v2830, 0.0
    %v2847 = vmax.f32 %v2831, 0.0
    %v2848 = vmax.f32 %v2832, 0.0
    %v2849 = vmax.f32 %v2833, 0.0
    %v2850 = vmax.f32 %v2834, 0.0
    %v2851 = vmax.f32 %v2835, 0.0
    %v2852 = vmax.f32 %v2836, 0.0
    %v2853 = vmax.f32 %v2837, 0.0
    %v2854 = vmax.f32 %v2838, 0.0
    %v2855 = vmax.f32 %v2839, 0.0
    %v2856 = vmax.f32 %v2840, 0.0
    %v2857 = vmax.f32 %v2841, 0.0
    %v2858 = vmax.f32 %v2842, 0.0
    %v2859 = vmax.f32 %v2843, 0.0
    %v2860 = vmul.f32 %v2844, %v2844
    %v2861 = vmul.f32 %v2845, %v2845
    %v2862 = vmul.f32 %v2846, %v2846
    %v2863 = vmul.f32 %v2847, %v2847
    %v2864 = vmul.f32 %v2848, %v2848
    %v2865 = vmul.f32 %v2849, %v2849
    %v2866 = vmul.f32 %v2850, %v2850
    %v2867 = vmul.f32 %v2851, %v2851
    %v2868 = vmul.f32 %v2852, %v2852
    %v2869 = vmul.f32 %v2853, %v2853
    %v2870 = vmul.f32 %v2854, %v2854
    %v2871 = vmul.f32 %v2855, %v2855
    %v2872 = vmul.f32 %v2856, %v2856
    %v2873 = vmul.f32 %v2857, %v2857
    %v2874 = vmul.f32 %v2858, %v2858
    %v2875 = vmul.f32 %v2859, %v2859
    %2876 = vadd.xlane.f32.xlu0 %v2860
    %v2877 = vpop.xlane.xlu0 %2876
    %2878 = vadd.xlane.f32.xlu0 %v2861
    %v2879 = vpop.xlane.xlu0 %2878
    %2880 = vadd.xlane.f32.xlu0 %v2862
    %v2881 = vpop.xlane.xlu0 %2880
    %2882 = vadd.xlane.f32.xlu0 %v2863
    %v2883 = vpop.xlane.xlu0 %2882
    %2884 = vadd.xlane.f32.xlu0 %v2864
    %v2885 = vpop.xlane.xlu0 %2884
    %2886 = vadd.xlane.f32.xlu0 %v2865
    %v2887 = vpop.xlane.xlu0 %2886
    %2888 = vadd.xlane.f32.xlu0 %v2866
    %v2889 = vpop.xlane.xlu0 %2888
    %2890 = vadd.xlane.f32.xlu0 %v2867
    %v2891 = vpop.xlane.xlu0 %2890
    %2892 = vadd.xlane.f32.xlu0 %v2868
    %v2893 = vpop.xlane.xlu0 %2892
    %2894 = vadd.xlane.f32.xlu0 %v2869
    %v2895 = vpop.xlane.xlu0 %2894
    %2896 = vadd.xlane.f32.xlu0 %v2870
    %v2897 = vpop.xlane.xlu0 %2896
    %2898 = vadd.xlane.f32.xlu0 %v2871
    %v2899 = vpop.xlane.xlu0 %2898
    %2900 = vadd.xlane.f32.xlu0 %v2872
    %v2901 = vpop.xlane.xlu0 %2900
    %2902 = vadd.xlane.f32.xlu0 %v2873
    %v2903 = vpop.xlane.xlu0 %2902
    %2904 = vadd.xlane.f32.xlu0 %v2874
    %v2905 = vpop.xlane.xlu0 %2904
    %2906 = vadd.xlane.f32.xlu0 %v2875
    %v2907 = vpop.xlane.xlu0 %2906
    %v2908 = vrsqrt.pop %v2877
    %v2909 = vmul.f32 %v2877, %v2908
    %vm2910 = vcmp.eq.f32.partialorder %v2877, inf
    %v2911 = vsel %vm2910, %v2877, %v2909
    %vm2912 = vcmp.eq.f32.partialorder %v2877, 0.0
    %v2913 = vand.u32 %v2877, 2147483648
    %v2914 = vsel %vm2912, %v2913, %v2911
    %v2915 = vrsqrt.pop %v2879
    %v2916 = vmul.f32 %v2879, %v2915
    %vm2917 = vcmp.eq.f32.partialorder %v2879, inf
    %v2918 = vsel %vm2917, %v2879, %v2916
    %vm2919 = vcmp.eq.f32.partialorder %v2879, 0.0
    %v2920 = vand.u32 %v2879, 2147483648
    %v2921 = vsel %vm2919, %v2920, %v2918
    %v2922 = vrsqrt.pop %v2881
    %v2923 = vmul.f32 %v2881, %v2922
    %vm2924 = vcmp.eq.f32.partialorder %v2881, inf
    %v2925 = vsel %vm2924, %v2881, %v2923
    %vm2926 = vcmp.eq.f32.partialorder %v2881, 0.0
    %v2927 = vand.u32 %v2881, 2147483648
    %v2928 = vsel %vm2926, %v2927, %v2925
    %v2929 = vrsqrt.pop %v2883
    %v2930 = vmul.f32 %v2883, %v2929
    %vm2931 = vcmp.eq.f32.partialorder %v2883, inf
    %v2932 = vsel %vm2931, %v2883, %v2930
    %vm2933 = vcmp.eq.f32.partialorder %v2883, 0.0
    %v2934 = vand.u32 %v2883, 2147483648
    %v2935 = vsel %vm2933, %v2934, %v2932
    %v2936 = vrsqrt.pop %v2885
    %v2937 = vmul.f32 %v2885, %v2936
    %vm2938 = vcmp.eq.f32.partialorder %v2885, inf
    %v2939 = vsel %vm2938, %v2885, %v2937
    %vm2940 = vcmp.eq.f32.partialorder %v2885, 0.0
    %v2941 = vand.u32 %v2885, 2147483648
    %v2942 = vsel %vm2940, %v2941, %v2939
    %v2943 = vrsqrt.pop %v2887
    %v2944 = vmul.f32 %v2887, %v2943
    %vm2945 = vcmp.eq.f32.partialorder %v2887, inf
    %v2946 = vsel %vm2945, %v2887, %v2944
    %vm2947 = vcmp.eq.f32.partialorder %v2887, 0.0
    %v2948 = vand.u32 %v2887, 2147483648
    %v2949 = vsel %vm2947, %v2948, %v2946
    %v2950 = vrsqrt.pop %v2889
    %v2951 = vmul.f32 %v2889, %v2950
    %vm2952 = vcmp.eq.f32.partialorder %v2889, inf
    %v2953 = vsel %vm2952, %v2889, %v2951
    %vm2954 = vcmp.eq.f32.partialorder %v2889, 0.0
    %v2955 = vand.u32 %v2889, 2147483648
    %v2956 = vsel %vm2954, %v2955, %v2953
    %v2957 = vrsqrt.pop %v2891
    %v2958 = vmul.f32 %v2891, %v2957
    %vm2959 = vcmp.eq.f32.partialorder %v2891, inf
    %v2960 = vsel %vm2959, %v2891, %v2958
    %vm2961 = vcmp.eq.f32.partialorder %v2891, 0.0
    %v2962 = vand.u32 %v2891, 2147483648
    %v2963 = vsel %vm2961, %v2962, %v2960
    %v2964 = vrsqrt.pop %v2893
    %v2965 = vmul.f32 %v2893, %v2964
    %vm2966 = vcmp.eq.f32.partialorder %v2893, inf
    %v2967 = vsel %vm2966, %v2893, %v2965
    %vm2968 = vcmp.eq.f32.partialorder %v2893, 0.0
    %v2969 = vand.u32 %v2893, 2147483648
    %v2970 = vsel %vm2968, %v2969, %v2967
    %v2971 = vrsqrt.pop %v2895
    %v2972 = vmul.f32 %v2895, %v2971
    %vm2973 = vcmp.eq.f32.partialorder %v2895, inf
    %v2974 = vsel %vm2973, %v2895, %v2972
    %vm2975 = vcmp.eq.f32.partialorder %v2895, 0.0
    %v2976 = vand.u32 %v2895, 2147483648
    %v2977 = vsel %vm2975, %v2976, %v2974
    %v2978 = vrsqrt.pop %v2897
    %v2979 = vmul.f32 %v2897, %v2978
    %vm2980 = vcmp.eq.f32.partialorder %v2897, inf
    %v2981 = vsel %vm2980, %v2897, %v2979
    %vm2982 = vcmp.eq.f32.partialorder %v2897, 0.0
    %v2983 = vand.u32 %v2897, 2147483648
    %v2984 = vsel %vm2982, %v2983, %v2981
    %v2985 = vrsqrt.pop %v2899
    %v2986 = vmul.f32 %v2899, %v2985
    %vm2987 = vcmp.eq.f32.partialorder %v2899, inf
    %v2988 = vsel %vm2987, %v2899, %v2986
    %vm2989 = vcmp.eq.f32.partialorder %v2899, 0.0
    %v2990 = vand.u32 %v2899, 2147483648
    %v2991 = vsel %vm2989, %v2990, %v2988
    %v2992 = vrsqrt.pop %v2901
    %v2993 = vmul.f32 %v2901, %v2992
    %vm2994 = vcmp.eq.f32.partialorder %v2901, inf
    %v2995 = vsel %vm2994, %v2901, %v2993
    %vm2996 = vcmp.eq.f32.partialorder %v2901, 0.0
    %v2997 = vand.u32 %v2901, 2147483648
    %v2998 = vsel %vm2996, %v2997, %v2995
    %v2999 = vrsqrt.pop %v2903
    %v3000 = vmul.f32 %v2903, %v2999
    %vm3001 = vcmp.eq.f32.partialorder %v2903, inf
    %v3002 = vsel %vm3001, %v2903, %v3000
    %vm3003 = vcmp.eq.f32.partialorder %v2903, 0.0
    %v3004 = vand.u32 %v2903, 2147483648
    %v3005 = vsel %vm3003, %v3004, %v3002
    %v3006 = vrsqrt.pop %v2905
    %v3007 = vmul.f32 %v2905, %v3006
    %vm3008 = vcmp.eq.f32.partialorder %v2905, inf
    %v3009 = vsel %vm3008, %v2905, %v3007
    %vm3010 = vcmp.eq.f32.partialorder %v2905, 0.0
    %v3011 = vand.u32 %v2905, 2147483648
    %v3012 = vsel %vm3010, %v3011, %v3009
    %v3013 = vrsqrt.pop %v2907
    %v3014 = vmul.f32 %v2907, %v3013
    %vm3015 = vcmp.eq.f32.partialorder %v2907, inf
    %v3016 = vsel %vm3015, %v2907, %v3014
    %vm3017 = vcmp.eq.f32.partialorder %v2907, 0.0
    %v3018 = vand.u32 %v2907, 2147483648
    %v3019 = vsel %vm3017, %v3018, %v3016
    %v3020 = vmax.f32 %v2914, 1e-08
    %v3021 = vmax.f32 %v2921, 1e-08
    %v3022 = vmax.f32 %v2928, 1e-08
    %v3023 = vmax.f32 %v2935, 1e-08
    %v3024 = vmax.f32 %v2942, 1e-08
    %v3025 = vmax.f32 %v2949, 1e-08
    %v3026 = vmax.f32 %v2956, 1e-08
    %v3027 = vmax.f32 %v2963, 1e-08
    %v3028 = vmax.f32 %v2970, 1e-08
    %v3029 = vmax.f32 %v2977, 1e-08
    %v3030 = vmax.f32 %v2984, 1e-08
    %v3031 = vmax.f32 %v2991, 1e-08
    %v3032 = vmax.f32 %v2998, 1e-08
    %v3033 = vmax.f32 %v3005, 1e-08
    %v3034 = vmax.f32 %v3012, 1e-08
    %v3035 = vmax.f32 %v3019, 1e-08
    %v3036 = vrcp.pop %v3020
    %v3037 = vmul.f32 %v2844, %v3036
    %v3038 = vrcp.pop %v3021
    %v3039 = vmul.f32 %v2845, %v3038
    %v3040 = vrcp.pop %v3022
    %v3041 = vmul.f32 %v2846, %v3040
    %v3042 = vrcp.pop %v3023
    %v3043 = vmul.f32 %v2847, %v3042
    %v3044 = vrcp.pop %v3024
    %v3045 = vmul.f32 %v2848, %v3044
    %v3046 = vrcp.pop %v3025
    %v3047 = vmul.f32 %v2849, %v3046
    %v3048 = vrcp.pop %v3026
    %v3049 = vmul.f32 %v2850, %v3048
    %v3050 = vrcp.pop %v3027
    %v3051 = vmul.f32 %v2851, %v3050
    %v3052 = vrcp.pop %v3028
    %v3053 = vmul.f32 %v2852, %v3052
    %v3054 = vrcp.pop %v3029
    %v3055 = vmul.f32 %v2853, %v3054
    %v3056 = vrcp.pop %v3030
    %v3057 = vmul.f32 %v2854, %v3056
    %v3058 = vrcp.pop %v3031
    %v3059 = vmul.f32 %v2855, %v3058
    %v3060 = vrcp.pop %v3032
    %v3061 = vmul.f32 %v2856, %v3060
    %v3062 = vrcp.pop %v3033
    %v3063 = vmul.f32 %v2857, %v3062
    %v3064 = vrcp.pop %v3034
    %v3065 = vmul.f32 %v2858, %v3064
    %v3066 = vrcp.pop %v3035
    %v3067 = vmul.f32 %v2859, %v3066
    %3068 = vmatprep.subr.mxu0 0.0
    %3069 = vmatpush1.xpose.msra.mxu0 %v3037
    %3070 = vmatprep.subr.mxu0 0.0
    %3071 = vmatpush1.xpose.msra.mxu0 %v3039
    %3072 = vmatprep.subr.mxu0 0.0
    %3073 = vmatpush1.xpose.msra.mxu0 %v3041
    %3074 = vmatprep.subr.mxu0 0.0
    %3075 = vmatpush1.xpose.msra.mxu0 %v3043
    %3076 = vmatprep.subr.mxu0 0.0
    %3077 = vmatpush1.xpose.msra.mxu0 %v3045
    %3078 = vmatprep.subr.mxu0 0.0
    %3079 = vmatpush1.xpose.msra.mxu0 %v3047
    %3080 = vmatprep.subr.mxu0 0.0
    %3081 = vmatpush1.xpose.msra.mxu0 %v3049
    %3082 = vmatprep.subr.mxu0 0.0
    %3083 = vmatpush1.xpose.msra.mxu0 %v3051
    %3084 = vmatprep.subr.mxu0 0.0
    %3085 = vmatpush1.xpose.msra.mxu0 %v3053
    %3086 = vmatprep.subr.mxu0 0.0
    %3087 = vmatpush1.xpose.msra.mxu0 %v3055
    %3088 = vmatprep.subr.mxu0 0.0
    %3089 = vmatpush1.xpose.msra.mxu0 %v3057
    %3090 = vmatprep.subr.mxu0 0.0
    %3091 = vmatpush1.xpose.msra.mxu0 %v3059
    %3092 = vmatprep.subr.mxu0 0.0
    %3093 = vmatpush1.xpose.msra.mxu0 %v3061
    %3094 = vmatprep.subr.mxu0 0.0
    %3095 = vmatpush1.xpose.msra.mxu0 %v3063
    %3096 = vmatprep.subr.mxu0 0.0
    %3097 = vmatpush1.xpose.msra.mxu0 %v3065
    %3098 = vmatprep.subr.mxu0 0.0
    %3099 = vmatpush1.xpose.msra.mxu0 %v3067
    %3100 = vmatprep.subr.mxu0 0.0
    %3101 = vmatpush1.xpose.msra.mxu0 0.0
    %3102 = vmatprep.subr.mxu0 0.0
    %3103 = vmatpush1.xpose.msra.mxu0 0.0
    %3104 = vmatprep.subr.mxu0 0.0
    %3105 = vmatpush1.xpose.msra.mxu0 0.0
    %3106 = vmatprep.subr.mxu0 0.0
    %3107 = vmatpush1.xpose.msra.mxu0 0.0
    %3108 = vmatprep.subr.mxu0 0.0
    %3109 = vmatpush1.xpose.msra.mxu0 0.0
    %3110 = vmatprep.subr.mxu0 0.0
    %3111 = vmatpush1.xpose.msra.mxu0 0.0
    %3112 = vmatprep.subr.mxu0 0.0
    %3113 = vmatpush1.xpose.msra.mxu0 0.0
    %3114 = vmatprep.subr.mxu0 0.0
    %3115 = vmatpush1.xpose.msra.mxu0 0.0
    %3116 = vmatprep.subr.mxu0 0.0
    %3117 = vmatpush1.xpose.msra.mxu0 0.0
    %3118 = vmatprep.subr.mxu0 0.0
    %3119 = vmatpush1.xpose.msra.mxu0 0.0
    %3120 = vmatprep.subr.mxu0 0.0
    %3121 = vmatpush1.xpose.msra.mxu0 0.0
    %3122 = vmatprep.subr.mxu0 0.0
    %3123 = vmatpush1.xpose.msra.mxu0 0.0
    %3124 = vmatprep.subr.mxu0 0.0
    %3125 = vmatpush1.xpose.msra.mxu0 0.0
    %3126 = vmatprep.subr.mxu0 0.0
    %3127 = vmatpush1.xpose.msra.mxu0 0.0
    %3128 = vmatprep.subr.mxu0 0.0
    %3129 = vmatpush1.xpose.msra.mxu0 0.0
    %3130 = vmatprep.subr.mxu0 0.0
    %3131 = vmatpush1.xpose.msra.mxu0 0.0
    %3132 = vmatprep.mubr.f32.mxu0 0.0
    %3133 = vmatmul.mubr.f32.gmra.mrb[0].mxu0 %v3037
    %v3134 = vpop.f32.mrb[0].mxu0
    %v3135 = vadd.f32 0.0, %v3134
    %v3136 = vpop.f32.mrb[0].mxu0
    %3137 = vmatprep.mubr.f32.mxu0 0.0
    %3138 = vmatmul.mubr.f32.gmra.mrb[0].mxu0 %v3039
    %v3139 = vpop.f32.mrb[0].mxu0
    %v3140 = vadd.f32 0.0, %v3139
    %v3141 = vpop.f32.mrb[0].mxu0
    %3142 = vmatprep.mubr.f32.mxu0 0.0
    %3143 = vmatmul.mubr.f32.gmra.mrb[0].mxu0 %v3041
    %v3144 = vpop.f32.mrb[0].mxu0
    %v3145 = vadd.f32 0.0, %v3144
    %v3146 = vpop.f32.mrb[0].mxu0
    %3147 = vmatprep.mubr.f32.mxu0 0.0
    %3148 = vmatmul.mubr.f32.gmra.mrb[0].mxu0 %v3043
    %v3149 = vpop.f32.mrb[0].mxu0
    %v3150 = vadd.f32 0.0, %v3149
    %v3151 = vpop.f32.mrb[0].mxu0
    %3152 = vmatprep.mubr.f32.mxu0 0.0
    %3153 = vmatmul.mubr.f32.gmra.mrb[0].mxu0 %v3045
    %v3154 = vpop.f32.mrb[0].mxu0
    %v3155 = vadd.f32 0.0, %v3154
    %v3156 = vpop.f32.mrb[0].mxu0
    %3157 = vmatprep.mubr.f32.mxu0 0.0
    %3158 = vmatmul.mubr.f32.gmra.mrb[0].mxu0 %v3047
    %v3159 = vpop.f32.mrb[0].mxu0
    %v3160 = vadd.f32 0.0, %v3159
    %v3161 = vpop.f32.mrb[0].mxu0
    %3162 = vmatprep.mubr.f32.mxu0 0.0
    %3163 = vmatmul.mubr.f32.gmra.mrb[0].mxu0 %v3049
    %v3164 = vpop.f32.mrb[0].mxu0
    %v3165 = vadd.f32 0.0, %v3164
    %v3166 = vpop.f32.mrb[0].mxu0
    %3167 = vmatprep.mubr.f32.mxu0 0.0
    %3168 = vmatmul.mubr.f32.gmra.mrb[0].mxu0 %v3051
    %v3169 = vpop.f32.mrb[0].mxu0
    %v3170 = vadd.f32 0.0, %v3169
    %v3171 = vpop.f32.mrb[0].mxu0
    %3172 = vmatprep.mubr.f32.mxu0 0.0
    %3173 = vmatmul.mubr.f32.gmra.mrb[0].mxu0 %v3053
    %v3174 = vpop.f32.mrb[0].mxu0
    %v3175 = vadd.f32 0.0, %v3174
    %v3176 = vpop.f32.mrb[0].mxu0
    %3177 = vmatprep.mubr.f32.mxu0 0.0
    %3178 = vmatmul.mubr.f32.gmra.mrb[0].mxu0 %v3055
    %v3179 = vpop.f32.mrb[0].mxu0
    %v3180 = vadd.f32 0.0, %v3179
    %v3181 = vpop.f32.mrb[0].mxu0
    %3182 = vmatprep.mubr.f32.mxu0 0.0
    %3183 = vmatmul.mubr.f32.gmra.mrb[0].mxu0 %v3057
    %v3184 = vpop.f32.mrb[0].mxu0
    %v3185 = vadd.f32 0.0, %v3184
    %v3186 = vpop.f32.mrb[0].mxu0
    %3187 = vmatprep.mubr.f32.mxu0 0.0
    %3188 = vmatmul.mubr.f32.gmra.mrb[0].mxu0 %v3059
    %v3189 = vpop.f32.mrb[0].mxu0
    %v3190 = vadd.f32 0.0, %v3189
    %v3191 = vpop.f32.mrb[0].mxu0
    %3192 = vmatprep.mubr.f32.mxu0 0.0
    %3193 = vmatmul.mubr.f32.gmra.mrb[0].mxu0 %v3061
    %v3194 = vpop.f32.mrb[0].mxu0
    %v3195 = vadd.f32 0.0, %v3194
    %v3196 = vpop.f32.mrb[0].mxu0
    %3197 = vmatprep.mubr.f32.mxu0 0.0
    %3198 = vmatmul.mubr.f32.gmra.mrb[0].mxu0 %v3063
    %v3199 = vpop.f32.mrb[0].mxu0
    %v3200 = vadd.f32 0.0, %v3199
    %v3201 = vpop.f32.mrb[0].mxu0
    %3202 = vmatprep.mubr.f32.mxu0 0.0
    %3203 = vmatmul.mubr.f32.gmra.mrb[0].mxu0 %v3065
    %v3204 = vpop.f32.mrb[0].mxu0
    %v3205 = vadd.f32 0.0, %v3204
    %v3206 = vpop.f32.mrb[0].mxu0
    %3207 = vmatprep.mubr.f32.mxu0 0.0
    %3208 = vmatmul.mubr.f32.gmra.mrb[0].mxu0 %v3067
    %v3209 = vpop.f32.mrb[0].mxu0
    %v3210 = vadd.f32 0.0, %v3209
    %v3211 = vpop.f32.mrb[0].mxu0
    %3212 = vdwg.mxu0
    %vm3213 = vcmp.gt.f32.partialorder %v2404, 0.0
    %vm3214 = vcmp.gt.f32.partialorder %v2405, 0.0
    %vm3215 = vcmp.gt.f32.partialorder %v2406, 0.0
    %vm3216 = vcmp.gt.f32.partialorder %v2407, 0.0
    %vm3217 = vcmp.gt.f32.partialorder %v2408, 0.0
    %vm3218 = vcmp.gt.f32.partialorder %v2409, 0.0
    %vm3219 = vcmp.gt.f32.partialorder %v2410, 0.0
    %vm3220 = vcmp.gt.f32.partialorder %v2411, 0.0
    %vm3221 = vcmp.gt.f32.partialorder %v2412, 0.0
    %vm3222 = vcmp.gt.f32.partialorder %v2413, 0.0
    %vm3223 = vcmp.gt.f32.partialorder %v2414, 0.0
    %vm3224 = vcmp.gt.f32.partialorder %v2415, 0.0
    %vm3225 = vcmp.gt.f32.partialorder %v2416, 0.0
    %vm3226 = vcmp.gt.f32.partialorder %v2417, 0.0
    %vm3227 = vcmp.gt.f32.partialorder %v2418, 0.0
    %vm3228 = vcmp.gt.f32.partialorder %v2419, 0.0
    %vm3229 = vcmp.ge.f32.partialorder %v3135, 0.1
    %vm3230 = vcmp.ge.f32.partialorder %v3140, 0.1
    %vm3231 = vcmp.ge.f32.partialorder %v3145, 0.1
    %vm3232 = vcmp.ge.f32.partialorder %v3150, 0.1
    %vm3233 = vcmp.ge.f32.partialorder %v3155, 0.1
    %vm3234 = vcmp.ge.f32.partialorder %v3160, 0.1
    %vm3235 = vcmp.ge.f32.partialorder %v3165, 0.1
    %vm3236 = vcmp.ge.f32.partialorder %v3170, 0.1
    %vm3237 = vcmp.ge.f32.partialorder %v3175, 0.1
    %vm3238 = vcmp.ge.f32.partialorder %v3180, 0.1
    %vm3239 = vcmp.ge.f32.partialorder %v3185, 0.1
    %vm3240 = vcmp.ge.f32.partialorder %v3190, 0.1
    %vm3241 = vcmp.ge.f32.partialorder %v3195, 0.1
    %vm3242 = vcmp.ge.f32.partialorder %v3200, 0.1
    %vm3243 = vcmp.ge.f32.partialorder %v3205, 0.1
    %vm3244 = vcmp.ge.f32.partialorder %v3210, 0.1
    %vm3245 = vmor %vm104, %vm3229
    %vm3246 = vmor %vm105, %vm3230
    %vm3247 = vmor %vm106, %vm3231
    %vm3248 = vmor %vm107, %vm3232
    %vm3249 = vmor %vm108, %vm3233
    %vm3250 = vmor %vm109, %vm3234
    %vm3251 = vmor %vm110, %vm3235
    %vm3252 = vmor %vm111, %vm3236
    %vm3253 = vmor %vm112, %vm3237
    %vm3254 = vmor %vm113, %vm3238
    %vm3255 = vmor %vm114, %vm3239
    %vm3256 = vmor %vm115, %vm3240
    %vm3257 = vmor %vm116, %vm3241
    %vm3258 = vmor %vm117, %vm3242
    %vm3259 = vmor %vm118, %vm3243
    %vm3260 = vmor %vm119, %vm3244
    %vm3261 = vmand %vm3213, %vm3245
    %vm3262 = vmand %vm3214, %vm3246
    %vm3263 = vmand %vm3215, %vm3247
    %vm3264 = vmand %vm3216, %vm3248
    %vm3265 = vmand %vm3217, %vm3249
    %vm3266 = vmand %vm3218, %vm3250
    %vm3267 = vmand %vm3219, %vm3251
    %vm3268 = vmand %vm3220, %vm3252
    %vm3269 = vmand %vm3221, %vm3253
    %vm3270 = vmand %vm3222, %vm3254
    %vm3271 = vmand %vm3223, %vm3255
    %vm3272 = vmand %vm3224, %vm3256
    %vm3273 = vmand %vm3225, %vm3257
    %vm3274 = vmand %vm3226, %vm3258
    %vm3275 = vmand %vm3227, %vm3259
    %vm3276 = vmand %vm3228, %vm3260
    %vm3277 = vmand %vm3261, %vm939
    %vm3278 = vmand %vm3262, %vm940
    %vm3279 = vmand %vm3263, %vm941
    %vm3280 = vmand %vm3264, %vm942
    %vm3281 = vmand %vm3265, %vm943
    %vm3282 = vmand %vm3266, %vm944
    %vm3283 = vmand %vm3267, %vm945
    %vm3284 = vmand %vm3268, %vm946
    %vm3285 = vmand %vm3269, %vm947
    %vm3286 = vmand %vm3270, %vm948
    %vm3287 = vmand %vm3271, %vm949
    %vm3288 = vmand %vm3272, %vm950
    %vm3289 = vmand %vm3273, %vm951
    %vm3290 = vmand %vm3274, %vm952
    %vm3291 = vmand %vm3275, %vm953
    %vm3292 = vmand %vm3276, %vm954
    %v3293 = vsel %vm3277, %v3135, 0.0
    %v3294 = vsel %vm3278, %v3140, 0.0
    %v3295 = vsel %vm3279, %v3145, 0.0
    %v3296 = vsel %vm3280, %v3150, 0.0
    %v3297 = vsel %vm3281, %v3155, 0.0
    %v3298 = vsel %vm3282, %v3160, 0.0
    %v3299 = vsel %vm3283, %v3165, 0.0
    %v3300 = vsel %vm3284, %v3170, 0.0
    %v3301 = vsel %vm3285, %v3175, 0.0
    %v3302 = vsel %vm3286, %v3180, 0.0
    %v3303 = vsel %vm3287, %v3185, 0.0
    %v3304 = vsel %vm3288, %v3190, 0.0
    %v3305 = vsel %vm3289, %v3195, 0.0
    %v3306 = vsel %vm3290, %v3200, 0.0
    %v3307 = vsel %vm3291, %v3205, 0.0
    %v3308 = vsel %vm3292, %v3210, 0.0
    %3309 = vadd.xlane.f32.xlu0 %v3293
    %v3310 = vpop.xlane.xlu0 %3309
    %3311 = vadd.xlane.f32.xlu0 %v3294
    %v3312 = vpop.xlane.xlu0 %3311
    %3313 = vadd.xlane.f32.xlu0 %v3295
    %v3314 = vpop.xlane.xlu0 %3313
    %3315 = vadd.xlane.f32.xlu0 %v3296
    %v3316 = vpop.xlane.xlu0 %3315
    %3317 = vadd.xlane.f32.xlu0 %v3297
    %v3318 = vpop.xlane.xlu0 %3317
    %3319 = vadd.xlane.f32.xlu0 %v3298
    %v3320 = vpop.xlane.xlu0 %3319
    %3321 = vadd.xlane.f32.xlu0 %v3299
    %v3322 = vpop.xlane.xlu0 %3321
    %3323 = vadd.xlane.f32.xlu0 %v3300
    %v3324 = vpop.xlane.xlu0 %3323
    %3325 = vadd.xlane.f32.xlu0 %v3301
    %v3326 = vpop.xlane.xlu0 %3325
    %3327 = vadd.xlane.f32.xlu0 %v3302
    %v3328 = vpop.xlane.xlu0 %3327
    %3329 = vadd.xlane.f32.xlu0 %v3303
    %v3330 = vpop.xlane.xlu0 %3329
    %3331 = vadd.xlane.f32.xlu0 %v3304
    %v3332 = vpop.xlane.xlu0 %3331
    %3333 = vadd.xlane.f32.xlu0 %v3305
    %v3334 = vpop.xlane.xlu0 %3333
    %3335 = vadd.xlane.f32.xlu0 %v3306
    %v3336 = vpop.xlane.xlu0 %3335
    %3337 = vadd.xlane.f32.xlu0 %v3307
    %v3338 = vpop.xlane.xlu0 %3337
    %3339 = vadd.xlane.f32.xlu0 %v3308
    %v3340 = vpop.xlane.xlu0 %3339
    %vm3341 = vcmp.gt.f32.partialorder %v3310, 0.0
    %vm3342 = vcmp.gt.f32.partialorder %v3312, 0.0
    %vm3343 = vcmp.gt.f32.partialorder %v3314, 0.0
    %vm3344 = vcmp.gt.f32.partialorder %v3316, 0.0
    %vm3345 = vcmp.gt.f32.partialorder %v3318, 0.0
    %vm3346 = vcmp.gt.f32.partialorder %v3320, 0.0
    %vm3347 = vcmp.gt.f32.partialorder %v3322, 0.0
    %vm3348 = vcmp.gt.f32.partialorder %v3324, 0.0
    %vm3349 = vcmp.gt.f32.partialorder %v3326, 0.0
    %vm3350 = vcmp.gt.f32.partialorder %v3328, 0.0
    %vm3351 = vcmp.gt.f32.partialorder %v3330, 0.0
    %vm3352 = vcmp.gt.f32.partialorder %v3332, 0.0
    %vm3353 = vcmp.gt.f32.partialorder %v3334, 0.0
    %vm3354 = vcmp.gt.f32.partialorder %v3336, 0.0
    %vm3355 = vcmp.gt.f32.partialorder %v3338, 0.0
    %vm3356 = vcmp.gt.f32.partialorder %v3340, 0.0
    %v3357 = vrsqrt.pop %v3310
    %v3358 = vrsqrt.pop %v3312
    %v3359 = vrsqrt.pop %v3314
    %v3360 = vrsqrt.pop %v3316
    %v3361 = vrsqrt.pop %v3318
    %v3362 = vrsqrt.pop %v3320
    %v3363 = vrsqrt.pop %v3322
    %v3364 = vrsqrt.pop %v3324
    %v3365 = vrsqrt.pop %v3326
    %v3366 = vrsqrt.pop %v3328
    %v3367 = vrsqrt.pop %v3330
    %v3368 = vrsqrt.pop %v3332
    %v3369 = vrsqrt.pop %v3334
    %v3370 = vrsqrt.pop %v3336
    %v3371 = vrsqrt.pop %v3338
    %v3372 = vrsqrt.pop %v3340
    %v3373 = vsel %vm3341, %v3357, 0.0
    %v3374 = vsel %vm3342, %v3358, 0.0
    %v3375 = vsel %vm3343, %v3359, 0.0
    %v3376 = vsel %vm3344, %v3360, 0.0
    %v3377 = vsel %vm3345, %v3361, 0.0
    %v3378 = vsel %vm3346, %v3362, 0.0
    %v3379 = vsel %vm3347, %v3363, 0.0
    %v3380 = vsel %vm3348, %v3364, 0.0
    %v3381 = vsel %vm3349, %v3365, 0.0
    %v3382 = vsel %vm3350, %v3366, 0.0
    %v3383 = vsel %vm3351, %v3367, 0.0
    %v3384 = vsel %vm3352, %v3368, 0.0
    %v3385 = vsel %vm3353, %v3369, 0.0
    %v3386 = vsel %vm3354, %v3370, 0.0
    %v3387 = vsel %vm3355, %v3371, 0.0
    %v3388 = vsel %vm3356, %v3372, 0.0
    %v3389 = vadd.f32 %v3293, %v3294
    %v3390 = vadd.f32 %v3389, %v3295
    %v3391 = vadd.f32 %v3390, %v3296
    %v3392 = vadd.f32 %v3391, %v3297
    %v3393 = vadd.f32 %v3392, %v3298
    %v3394 = vadd.f32 %v3393, %v3299
    %v3395 = vadd.f32 %v3394, %v3300
    %v3396 = vadd.f32 %v3395, %v3301
    %v3397 = vadd.f32 %v3396, %v3302
    %v3398 = vadd.f32 %v3397, %v3303
    %v3399 = vadd.f32 %v3398, %v3304
    %v3400 = vadd.f32 %v3399, %v3305
    %v3401 = vadd.f32 %v3400, %v3306
    %v3402 = vadd.f32 %v3401, %v3307
    %v3403 = vadd.f32 %v3402, %v3308
    %v3404 = vrot.slane %v3403, 4
    %v3405 = vadd.f32 %v3403, %v3404
    %v3406 = vrot.slane %v3405, 2
    %v3407 = vadd.f32 %v3405, %v3406
    %v3408 = vrot.slane %v3407, 1
    %v3409 = vadd.f32 %v3407, %v3408
    %vm3410 = vcmp.gt.f32.partialorder %v3409, 0.0
    %v3411 = vrsqrt.pop %v3409
    %v3412 = vsel %vm3410, %v3411, 0.0
    %v3413 = vmul.f32 %v3373, %v3293
    %v3414 = vmul.f32 %v3374, %v3294
    %v3415 = vmul.f32 %v3375, %v3295
    %v3416 = vmul.f32 %v3376, %v3296
    %v3417 = vmul.f32 %v3377, %v3297
    %v3418 = vmul.f32 %v3378, %v3298
    %v3419 = vmul.f32 %v3379, %v3299
    %v3420 = vmul.f32 %v3380, %v3300
    %v3421 = vmul.f32 %v3381, %v3301
    %v3422 = vmul.f32 %v3382, %v3302
    %v3423 = vmul.f32 %v3383, %v3303
    %v3424 = vmul.f32 %v3384, %v3304
    %v3425 = vmul.f32 %v3385, %v3305
    %v3426 = vmul.f32 %v3386, %v3306
    %v3427 = vmul.f32 %v3387, %v3307
    %v3428 = vmul.f32 %v3388, %v3308
    %v3429 = vmul.f32 %v3413, %v3412
    %v3430 = vmul.f32 %v3414, %v3412
    %v3431 = vmul.f32 %v3415, %v3412
    %v3432 = vmul.f32 %v3416, %v3412
    %v3433 = vmul.f32 %v3417, %v3412
    %v3434 = vmul.f32 %v3418, %v3412
    %v3435 = vmul.f32 %v3419, %v3412
    %v3436 = vmul.f32 %v3420, %v3412
    %v3437 = vmul.f32 %v3421, %v3412
    %v3438 = vmul.f32 %v3422, %v3412
    %v3439 = vmul.f32 %v3423, %v3412
    %v3440 = vmul.f32 %v3424, %v3412
    %v3441 = vmul.f32 %v3425, %v3412
    %v3442 = vmul.f32 %v3426, %v3412
    %v3443 = vmul.f32 %v3427, %v3412
    %v3444 = vmul.f32 %v3428, %v3412
    %v3445 = vsel %vm3261, 1, 0
    %v3446 = vsel %vm3262, 1, 0
    %v3447 = vsel %vm3263, 1, 0
    %v3448 = vsel %vm3264, 1, 0
    %v3449 = vsel %vm3265, 1, 0
    %v3450 = vsel %vm3266, 1, 0
    %v3451 = vsel %vm3267, 1, 0
    %v3452 = vsel %vm3268, 1, 0
    %v3453 = vsel %vm3269, 1, 0
    %v3454 = vsel %vm3270, 1, 0
    %v3455 = vsel %vm3271, 1, 0
    %v3456 = vsel %vm3272, 1, 0
    %v3457 = vsel %vm3273, 1, 0
    %v3458 = vsel %vm3274, 1, 0
    %v3459 = vsel %vm3275, 1, 0
    %v3460 = vsel %vm3276, 1, 0
    %v3461 = vcvt.s32.f32 %v3445
    %v3462 = vcvt.s32.f32 %v3446
    %v3463 = vcvt.s32.f32 %v3447
    %v3464 = vcvt.s32.f32 %v3448
    %v3465 = vcvt.s32.f32 %v3449
    %v3466 = vcvt.s32.f32 %v3450
    %v3467 = vcvt.s32.f32 %v3451
    %v3468 = vcvt.s32.f32 %v3452
    %v3469 = vcvt.s32.f32 %v3453
    %v3470 = vcvt.s32.f32 %v3454
    %v3471 = vcvt.s32.f32 %v3455
    %v3472 = vcvt.s32.f32 %v3456
    %v3473 = vcvt.s32.f32 %v3457
    %v3474 = vcvt.s32.f32 %v3458
    %v3475 = vcvt.s32.f32 %v3459
    %v3476 = vcvt.s32.f32 %v3460
    %v3477 = vadd.f32 %v3461, %v3462
    %v3478 = vadd.f32 %v3477, %v3463
    %v3479 = vadd.f32 %v3478, %v3464
    %v3480 = vadd.f32 %v3479, %v3465
    %v3481 = vadd.f32 %v3480, %v3466
    %v3482 = vadd.f32 %v3481, %v3467
    %v3483 = vadd.f32 %v3482, %v3468
    %v3484 = vadd.f32 %v3483, %v3469
    %v3485 = vadd.f32 %v3484, %v3470
    %v3486 = vadd.f32 %v3485, %v3471
    %v3487 = vadd.f32 %v3486, %v3472
    %v3488 = vadd.f32 %v3487, %v3473
    %v3489 = vadd.f32 %v3488, %v3474
    %v3490 = vadd.f32 %v3489, %v3475
    %v3491 = vadd.f32 %v3490, %v3476
    %v3492 = vrot.slane %v3491, 4
    %v3493 = vadd.f32 %v3491, %v3492
    %v3494 = vrot.slane %v3493, 2
    %v3495 = vadd.f32 %v3493, %v3494
    %v3496 = vrot.slane %v3495, 1
    %v3497 = vadd.f32 %v3495, %v3496
    %v3498 = vadd.f32 %v3497, 1.0
    %v3499 = vrcp.pop %v3498
    %v3500 = vmul.f32 1.0, %v3499
    %v3501 = vsel %vm136, %v3500, %v3429
    %v3502 = vsel %vm137, %v3500, %v3430
    %v3503 = vsel %vm138, %v3500, %v3431
    %v3504 = vsel %vm139, %v3500, %v3432
    %v3505 = vsel %vm140, %v3500, %v3433
    %v3506 = vsel %vm141, %v3500, %v3434
    %v3507 = vsel %vm142, %v3500, %v3435
    %v3508 = vsel %vm143, %v3500, %v3436
    %v3509 = vsel %vm144, %v3500, %v3437
    %v3510 = vsel %vm145, %v3500, %v3438
    %v3511 = vsel %vm146, %v3500, %v3439
    %v3512 = vsel %vm147, %v3500, %v3440
    %v3513 = vsel %vm148, %v3500, %v3441
    %v3514 = vsel %vm149, %v3500, %v3442
    %v3515 = vsel %vm150, %v3500, %v3443
    %v3516 = vsel %vm151, %v3500, %v3444
    %v3517 = vmul.f32 %v3501, 1.442695
    %v3518 = vpow.pop %v3517
    %v3519 = vmul.f32 %v3502, 1.442695
    %v3520 = vpow.pop %v3519
    %v3521 = vmul.f32 %v3503, 1.442695
    %v3522 = vpow.pop %v3521
    %v3523 = vmul.f32 %v3504, 1.442695
    %v3524 = vpow.pop %v3523
    %v3525 = vmul.f32 %v3505, 1.442695
    %v3526 = vpow.pop %v3525
    %v3527 = vmul.f32 %v3506, 1.442695
    %v3528 = vpow.pop %v3527
    %v3529 = vmul.f32 %v3507, 1.442695
    %v3530 = vpow.pop %v3529
    %v3531 = vmul.f32 %v3508, 1.442695
    %v3532 = vpow.pop %v3531
    %v3533 = vmul.f32 %v3509, 1.442695
    %v3534 = vpow.pop %v3533
    %v3535 = vmul.f32 %v3510, 1.442695
    %v3536 = vpow.pop %v3535
    %v3537 = vmul.f32 %v3511, 1.442695
    %v3538 = vpow.pop %v3537
    %v3539 = vmul.f32 %v3512, 1.442695
    %v3540 = vpow.pop %v3539
    %v3541 = vmul.f32 %v3513, 1.442695
    %v3542 = vpow.pop %v3541
    %v3543 = vmul.f32 %v3514, 1.442695
    %v3544 = vpow.pop %v3543
    %v3545 = vmul.f32 %v3515, 1.442695
    %v3546 = vpow.pop %v3545
    %v3547 = vmul.f32 %v3516, 1.442695
    %v3548 = vpow.pop %v3547
    %vm3549 = vmor %vm3277, %vm136
    %vm3550 = vmor %vm3278, %vm137
    %vm3551 = vmor %vm3279, %vm138
    %vm3552 = vmor %vm3280, %vm139
    %vm3553 = vmor %vm3281, %vm140
    %vm3554 = vmor %vm3282, %vm141
    %vm3555 = vmor %vm3283, %vm142
    %vm3556 = vmor %vm3284, %vm143
    %vm3557 = vmor %vm3285, %vm144
    %vm3558 = vmor %vm3286, %vm145
    %vm3559 = vmor %vm3287, %vm146
    %vm3560 = vmor %vm3288, %vm147
    %vm3561 = vmor %vm3289, %vm148
    %vm3562 = vmor %vm3290, %vm149
    %vm3563 = vmor %vm3291, %vm150
    %vm3564 = vmor %vm3292, %vm151
    %v3565 = vsel %vm3549, %v3518, 0.0
    %v3566 = vsel %vm3550, %v3520, 0.0
    %v3567 = vsel %vm3551, %v3522, 0.0
    %v3568 = vsel %vm3552, %v3524, 0.0
    %v3569 = vsel %vm3553, %v3526, 0.0
    %v3570 = vsel %vm3554, %v3528, 0.0
    %v3571 = vsel %vm3555, %v3530, 0.0
    %v3572 = vsel %vm3556, %v3532, 0.0
    %v3573 = vsel %vm3557, %v3534, 0.0
    %v3574 = vsel %vm3558, %v3536, 0.0
    %v3575 = vsel %vm3559, %v3538, 0.0
    %v3576 = vsel %vm3560, %v3540, 0.0
    %v3577 = vsel %vm3561, %v3542, 0.0
    %v3578 = vsel %vm3562, %v3544, 0.0
    %v3579 = vsel %vm3563, %v3546, 0.0
    %v3580 = vsel %vm3564, %v3548, 0.0
    %3581 = vmatprep.subr.mxu0 0.0
    %3582 = vmatpush1.msra.mxu0 %v489
    %3583 = vmatprep.subr.mxu0 0.0
    %3584 = vmatpush1.msra.mxu0 %v490
    %3585 = vmatprep.subr.mxu0 0.0
    %3586 = vmatpush1.msra.mxu0 %v491
    %3587 = vmatprep.subr.mxu0 0.0
    %3588 = vmatpush1.msra.mxu0 %v492
    %3589 = vmatprep.subr.mxu0 0.0
    %3590 = vmatpush1.msra.mxu0 %v493
    %3591 = vmatprep.subr.mxu0 0.0
    %3592 = vmatpush1.msra.mxu0 %v494
    %3593 = vmatprep.subr.mxu0 0.0
    %3594 = vmatpush1.msra.mxu0 %v495
    %3595 = vmatprep.subr.mxu0 0.0
    %3596 = vmatpush1.msra.mxu0 %v496
    %3597 = vmatprep.subr.mxu0 0.0
    %3598 = vmatpush1.msra.mxu0 %v497
    %3599 = vmatprep.subr.mxu0 0.0
    %3600 = vmatpush1.msra.mxu0 %v498
    %3601 = vmatprep.subr.mxu0 0.0
    %3602 = vmatpush1.msra.mxu0 %v499
    %3603 = vmatprep.subr.mxu0 0.0
    %3604 = vmatpush1.msra.mxu0 %v500
    %3605 = vmatprep.subr.mxu0 0.0
    %3606 = vmatpush1.msra.mxu0 %v501
    %3607 = vmatprep.subr.mxu0 0.0
    %3608 = vmatpush1.msra.mxu0 %v502
    %3609 = vmatprep.subr.mxu0 0.0
    %3610 = vmatpush1.msra.mxu0 %v503
    %3611 = vmatprep.subr.mxu0 0.0
    %3612 = vmatpush1.msra.mxu0 %v504
    %3613 = vmatprep.subr.mxu0 0.0
    %3614 = vmatpush1.msra.mxu0 0.0
    %3615 = vmatprep.subr.mxu0 0.0
    %3616 = vmatpush1.msra.mxu0 0.0
    %3617 = vmatprep.subr.mxu0 0.0
    %3618 = vmatpush1.msra.mxu0 0.0
    %3619 = vmatprep.subr.mxu0 0.0
    %3620 = vmatpush1.msra.mxu0 0.0
    %3621 = vmatprep.subr.mxu0 0.0
    %3622 = vmatpush1.msra.mxu0 0.0
    %3623 = vmatprep.subr.mxu0 0.0
    %3624 = vmatpush1.msra.mxu0 0.0
    %3625 = vmatprep.subr.mxu0 0.0
    %3626 = vmatpush1.msra.mxu0 0.0
    %3627 = vmatprep.subr.mxu0 0.0
    %3628 = vmatpush1.msra.mxu0 0.0
    %3629 = vmatprep.subr.mxu0 0.0
    %3630 = vmatpush1.msra.mxu0 0.0
    %3631 = vmatprep.subr.mxu0 0.0
    %3632 = vmatpush1.msra.mxu0 0.0
    %3633 = vmatprep.subr.mxu0 0.0
    %3634 = vmatpush1.msra.mxu0 0.0
    %3635 = vmatprep.subr.mxu0 0.0
    %3636 = vmatpush1.msra.mxu0 0.0
    %3637 = vmatprep.subr.mxu0 0.0
    %3638 = vmatpush1.msra.mxu0 0.0
    %3639 = vmatprep.subr.mxu0 0.0
    %3640 = vmatpush1.msra.mxu0 0.0
    %3641 = vmatprep.subr.mxu0 0.0
    %3642 = vmatpush1.msra.mxu0 0.0
    %3643 = vmatprep.subr.mxu0 0.0
    %3644 = vmatpush1.msra.mxu0 0.0
    %3645 = vmatprep.mubr.f32.mxu0 0.0
    %3646 = vmatmul.mubr.f32.gmra.mrb[0].mxu0 %v2844
    %v3647 = vpop.f32.mrb[0].mxu0
    %v3648 = vadd.f32 0.0, %v3647
    %v3649 = vpop.f32.mrb[0].mxu0
    %3650 = vmatprep.mubr.f32.mxu0 0.0
    %3651 = vmatmul.mubr.f32.gmra.mrb[0].mxu0 %v2845
    %v3652 = vpop.f32.mrb[0].mxu0
    %v3653 = vadd.f32 0.0, %v3652
    %v3654 = vpop.f32.mrb[0].mxu0
    %3655 = vmatprep.mubr.f32.mxu0 0.0
    %3656 = vmatmul.mubr.f32.gmra.mrb[0].mxu0 %v2846
    %v3657 = vpop.f32.mrb[0].mxu0
    %v3658 = vadd.f32 0.0, %v3657
    %v3659 = vpop.f32.mrb[0].mxu0
    %3660 = vmatprep.mubr.f32.mxu0 0.0
    %3661 = vmatmul.mubr.f32.gmra.mrb[0].mxu0 %v2847
    %v3662 = vpop.f32.mrb[0].mxu0
    %v3663 = vadd.f32 0.0, %v3662
    %v3664 = vpop.f32.mrb[0].mxu0
    %3665 = vmatprep.mubr.f32.mxu0 0.0
    %3666 = vmatmul.mubr.f32.gmra.mrb[0].mxu0 %v2848
    %v3667 = vpop.f32.mrb[0].mxu0
    %v3668 = vadd.f32 0.0, %v3667
    %v3669 = vpop.f32.mrb[0].mxu0
    %3670 = vmatprep.mubr.f32.mxu0 0.0
    %3671 = vmatmul.mubr.f32.gmra.mrb[0].mxu0 %v2849
    %v3672 = vpop.f32.mrb[0].mxu0
    %v3673 = vadd.f32 0.0, %v3672
    %v3674 = vpop.f32.mrb[0].mxu0
    %3675 = vmatprep.mubr.f32.mxu0 0.0
    %3676 = vmatmul.mubr.f32.gmra.mrb[0].mxu0 %v2850
    %v3677 = vpop.f32.mrb[0].mxu0
    %v3678 = vadd.f32 0.0, %v3677
    %v3679 = vpop.f32.mrb[0].mxu0
    %3680 = vmatprep.mubr.f32.mxu0 0.0
    %3681 = vmatmul.mubr.f32.gmra.mrb[0].mxu0 %v2851
    %v3682 = vpop.f32.mrb[0].mxu0
    %v3683 = vadd.f32 0.0, %v3682
    %v3684 = vpop.f32.mrb[0].mxu0
    %3685 = vmatprep.mubr.f32.mxu0 0.0
    %3686 = vmatmul.mubr.f32.gmra.mrb[0].mxu0 %v2852
    %v3687 = vpop.f32.mrb[0].mxu0
    %v3688 = vadd.f32 0.0, %v3687
    %v3689 = vpop.f32.mrb[0].mxu0
    %3690 = vmatprep.mubr.f32.mxu0 0.0
    %3691 = vmatmul.mubr.f32.gmra.mrb[0].mxu0 %v2853
    %v3692 = vpop.f32.mrb[0].mxu0
    %v3693 = vadd.f32 0.0, %v3692
    %v3694 = vpop.f32.mrb[0].mxu0
    %3695 = vmatprep.mubr.f32.mxu0 0.0
    %3696 = vmatmul.mubr.f32.gmra.mrb[0].mxu0 %v2854
    %v3697 = vpop.f32.mrb[0].mxu0
    %v3698 = vadd.f32 0.0, %v3697
    %v3699 = vpop.f32.mrb[0].mxu0
    %3700 = vmatprep.mubr.f32.mxu0 0.0
    %3701 = vmatmul.mubr.f32.gmra.mrb[0].mxu0 %v2855
    %v3702 = vpop.f32.mrb[0].mxu0
    %v3703 = vadd.f32 0.0, %v3702
    %v3704 = vpop.f32.mrb[0].mxu0
    %3705 = vmatprep.mubr.f32.mxu0 0.0
    %3706 = vmatmul.mubr.f32.gmra.mrb[0].mxu0 %v2856
    %v3707 = vpop.f32.mrb[0].mxu0
    %v3708 = vadd.f32 0.0, %v3707
    %v3709 = vpop.f32.mrb[0].mxu0
    %3710 = vmatprep.mubr.f32.mxu0 0.0
    %3711 = vmatmul.mubr.f32.gmra.mrb[0].mxu0 %v2857
    %v3712 = vpop.f32.mrb[0].mxu0
    %v3713 = vadd.f32 0.0, %v3712
    %v3714 = vpop.f32.mrb[0].mxu0
    %3715 = vmatprep.mubr.f32.mxu0 0.0
    %3716 = vmatmul.mubr.f32.gmra.mrb[0].mxu0 %v2858
    %v3717 = vpop.f32.mrb[0].mxu0
    %v3718 = vadd.f32 0.0, %v3717
    %v3719 = vpop.f32.mrb[0].mxu0
    %3720 = vmatprep.mubr.f32.mxu0 0.0
    %3721 = vmatmul.mubr.f32.gmra.mrb[0].mxu0 %v2859
    %v3722 = vpop.f32.mrb[0].mxu0
    %v3723 = vadd.f32 0.0, %v3722
    %v3724 = vpop.f32.mrb[0].mxu0
    %3725 = vdwg.mxu0
    %3726 = vadd.xlane.f32.xlu0 %v3565
    %v3727 = vpop.xlane.xlu0 %3726
    %3728 = vadd.xlane.f32.xlu0 %v3566
    %v3729 = vpop.xlane.xlu0 %3728
    %3730 = vadd.xlane.f32.xlu0 %v3567
    %v3731 = vpop.xlane.xlu0 %3730
    %3732 = vadd.xlane.f32.xlu0 %v3568
    %v3733 = vpop.xlane.xlu0 %3732
    %3734 = vadd.xlane.f32.xlu0 %v3569
    %v3735 = vpop.xlane.xlu0 %3734
    %3736 = vadd.xlane.f32.xlu0 %v3570
    %v3737 = vpop.xlane.xlu0 %3736
    %3738 = vadd.xlane.f32.xlu0 %v3571
    %v3739 = vpop.xlane.xlu0 %3738
    %3740 = vadd.xlane.f32.xlu0 %v3572
    %v3741 = vpop.xlane.xlu0 %3740
    %3742 = vadd.xlane.f32.xlu0 %v3573
    %v3743 = vpop.xlane.xlu0 %3742
    %3744 = vadd.xlane.f32.xlu0 %v3574
    %v3745 = vpop.xlane.xlu0 %3744
    %3746 = vadd.xlane.f32.xlu0 %v3575
    %v3747 = vpop.xlane.xlu0 %3746
    %3748 = vadd.xlane.f32.xlu0 %v3576
    %v3749 = vpop.xlane.xlu0 %3748
    %3750 = vadd.xlane.f32.xlu0 %v3577
    %v3751 = vpop.xlane.xlu0 %3750
    %3752 = vadd.xlane.f32.xlu0 %v3578
    %v3753 = vpop.xlane.xlu0 %3752
    %3754 = vadd.xlane.f32.xlu0 %v3579
    %v3755 = vpop.xlane.xlu0 %3754
    %3756 = vadd.xlane.f32.xlu0 %v3580
    %v3757 = vpop.xlane.xlu0 %3756
    %vm3758 = vcmp.gt.f32.partialorder %v3727, 0.0
    %vm3759 = vcmp.gt.f32.partialorder %v3729, 0.0
    %vm3760 = vcmp.gt.f32.partialorder %v3731, 0.0
    %vm3761 = vcmp.gt.f32.partialorder %v3733, 0.0
    %vm3762 = vcmp.gt.f32.partialorder %v3735, 0.0
    %vm3763 = vcmp.gt.f32.partialorder %v3737, 0.0
    %vm3764 = vcmp.gt.f32.partialorder %v3739, 0.0
    %vm3765 = vcmp.gt.f32.partialorder %v3741, 0.0
    %vm3766 = vcmp.gt.f32.partialorder %v3743, 0.0
    %vm3767 = vcmp.gt.f32.partialorder %v3745, 0.0
    %vm3768 = vcmp.gt.f32.partialorder %v3747, 0.0
    %vm3769 = vcmp.gt.f32.partialorder %v3749, 0.0
    %vm3770 = vcmp.gt.f32.partialorder %v3751, 0.0
    %vm3771 = vcmp.gt.f32.partialorder %v3753, 0.0
    %vm3772 = vcmp.gt.f32.partialorder %v3755, 0.0
    %vm3773 = vcmp.gt.f32.partialorder %v3757, 0.0
    %v3774 = vrsqrt.pop %v3727
    %v3775 = vrsqrt.pop %v3729
    %v3776 = vrsqrt.pop %v3731
    %v3777 = vrsqrt.pop %v3733
    %v3778 = vrsqrt.pop %v3735
    %v3779 = vrsqrt.pop %v3737
    %v3780 = vrsqrt.pop %v3739
    %v3781 = vrsqrt.pop %v3741
    %v3782 = vrsqrt.pop %v3743
    %v3783 = vrsqrt.pop %v3745
    %v3784 = vrsqrt.pop %v3747
    %v3785 = vrsqrt.pop %v3749
    %v3786 = vrsqrt.pop %v3751
    %v3787 = vrsqrt.pop %v3753
    %v3788 = vrsqrt.pop %v3755
    %v3789 = vrsqrt.pop %v3757
    %v3790 = vsel %vm3758, %v3774, 0.0
    %v3791 = vsel %vm3759, %v3775, 0.0
    %v3792 = vsel %vm3760, %v3776, 0.0
    %v3793 = vsel %vm3761, %v3777, 0.0
    %v3794 = vsel %vm3762, %v3778, 0.0
    %v3795 = vsel %vm3763, %v3779, 0.0
    %v3796 = vsel %vm3764, %v3780, 0.0
    %v3797 = vsel %vm3765, %v3781, 0.0
    %v3798 = vsel %vm3766, %v3782, 0.0
    %v3799 = vsel %vm3767, %v3783, 0.0
    %v3800 = vsel %vm3768, %v3784, 0.0
    %v3801 = vsel %vm3769, %v3785, 0.0
    %v3802 = vsel %vm3770, %v3786, 0.0
    %v3803 = vsel %vm3771, %v3787, 0.0
    %v3804 = vsel %vm3772, %v3788, 0.0
    %v3805 = vsel %vm3773, %v3789, 0.0
    %v3806 = vmul.f32 %v3648, %v3790
    %v3807 = vmul.f32 %v3653, %v3791
    %v3808 = vmul.f32 %v3658, %v3792
    %v3809 = vmul.f32 %v3663, %v3793
    %v3810 = vmul.f32 %v3668, %v3794
    %v3811 = vmul.f32 %v3673, %v3795
    %v3812 = vmul.f32 %v3678, %v3796
    %v3813 = vmul.f32 %v3683, %v3797
    %v3814 = vmul.f32 %v3688, %v3798
    %v3815 = vmul.f32 %v3693, %v3799
    %v3816 = vmul.f32 %v3698, %v3800
    %v3817 = vmul.f32 %v3703, %v3801
    %v3818 = vmul.f32 %v3708, %v3802
    %v3819 = vmul.f32 %v3713, %v3803
    %v3820 = vmul.f32 %v3718, %v3804
    %v3821 = vmul.f32 %v3723, %v3805
    %3822 = vmatprep.subr.mxu0 0.0
    %3823 = vmatpush1.msra.mxu0 %v3806
    %3824 = vmatprep.subr.mxu0 0.0
    %3825 = vmatpush1.msra.mxu0 %v3807
    %3826 = vmatprep.subr.mxu0 0.0
    %3827 = vmatpush1.msra.mxu0 %v3808
    %3828 = vmatprep.subr.mxu0 0.0
    %3829 = vmatpush1.msra.mxu0 %v3809
    %3830 = vmatprep.subr.mxu0 0.0
    %3831 = vmatpush1.msra.mxu0 %v3810
    %3832 = vmatprep.subr.mxu0 0.0
    %3833 = vmatpush1.msra.mxu0 %v3811
    %3834 = vmatprep.subr.mxu0 0.0
    %3835 = vmatpush1.msra.mxu0 %v3812
    %3836 = vmatprep.subr.mxu0 0.0
    %3837 = vmatpush1.msra.mxu0 %v3813
    %3838 = vmatprep.subr.mxu0 0.0
    %3839 = vmatpush1.msra.mxu0 %v3814
    %3840 = vmatprep.subr.mxu0 0.0
    %3841 = vmatpush1.msra.mxu0 %v3815
    %3842 = vmatprep.subr.mxu0 0.0
    %3843 = vmatpush1.msra.mxu0 %v3816
    %3844 = vmatprep.subr.mxu0 0.0
    %3845 = vmatpush1.msra.mxu0 %v3817
    %3846 = vmatprep.subr.mxu0 0.0
    %3847 = vmatpush1.msra.mxu0 %v3818
    %3848 = vmatprep.subr.mxu0 0.0
    %3849 = vmatpush1.msra.mxu0 %v3819
    %3850 = vmatprep.subr.mxu0 0.0
    %3851 = vmatpush1.msra.mxu0 %v3820
    %3852 = vmatprep.subr.mxu0 0.0
    %3853 = vmatpush1.msra.mxu0 %v3821
    %3854 = vmatprep.subr.mxu0 0.0
    %3855 = vmatpush1.msra.mxu0 0.0
    %3856 = vmatprep.subr.mxu0 0.0
    %3857 = vmatpush1.msra.mxu0 0.0
    %3858 = vmatprep.subr.mxu0 0.0
    %3859 = vmatpush1.msra.mxu0 0.0
    %3860 = vmatprep.subr.mxu0 0.0
    %3861 = vmatpush1.msra.mxu0 0.0
    %3862 = vmatprep.subr.mxu0 0.0
    %3863 = vmatpush1.msra.mxu0 0.0
    %3864 = vmatprep.subr.mxu0 0.0
    %3865 = vmatpush1.msra.mxu0 0.0
    %3866 = vmatprep.subr.mxu0 0.0
    %3867 = vmatpush1.msra.mxu0 0.0
    %3868 = vmatprep.subr.mxu0 0.0
    %3869 = vmatpush1.msra.mxu0 0.0
    %3870 = vmatprep.subr.mxu0 0.0
    %3871 = vmatpush1.msra.mxu0 0.0
    %3872 = vmatprep.subr.mxu0 0.0
    %3873 = vmatpush1.msra.mxu0 0.0
    %3874 = vmatprep.subr.mxu0 0.0
    %3875 = vmatpush1.msra.mxu0 0.0
    %3876 = vmatprep.subr.mxu0 0.0
    %3877 = vmatpush1.msra.mxu0 0.0
    %3878 = vmatprep.subr.mxu0 0.0
    %3879 = vmatpush1.msra.mxu0 0.0
    %3880 = vmatprep.subr.mxu0 0.0
    %3881 = vmatpush1.msra.mxu0 0.0
    %3882 = vmatprep.subr.mxu0 0.0
    %3883 = vmatpush1.msra.mxu0 0.0
    %3884 = vmatprep.subr.mxu0 0.0
    %3885 = vmatpush1.msra.mxu0 0.0
    %3886 = vmatprep.mubr.f32.mxu0 0.0
    %3887 = vmatmul.mubr.f32.gmra.mrb[0].mxu0 %v3565
    %v3888 = vpop.f32.mrb[0].mxu0
    %v3889 = vadd.f32 0.0, %v3888
    %v3890 = vpop.f32.mrb[0].mxu0
    %3891 = vmatprep.mubr.f32.mxu0 0.0
    %3892 = vmatmul.mubr.f32.gmra.mrb[0].mxu0 %v3566
    %v3893 = vpop.f32.mrb[0].mxu0
    %v3894 = vadd.f32 0.0, %v3893
    %v3895 = vpop.f32.mrb[0].mxu0
    %3896 = vmatprep.mubr.f32.mxu0 0.0
    %3897 = vmatmul.mubr.f32.gmra.mrb[0].mxu0 %v3567
    %v3898 = vpop.f32.mrb[0].mxu0
    %v3899 = vadd.f32 0.0, %v3898
    %v3900 = vpop.f32.mrb[0].mxu0
    %3901 = vmatprep.mubr.f32.mxu0 0.0
    %3902 = vmatmul.mubr.f32.gmra.mrb[0].mxu0 %v3568
    %v3903 = vpop.f32.mrb[0].mxu0
    %v3904 = vadd.f32 0.0, %v3903
    %v3905 = vpop.f32.mrb[0].mxu0
    %3906 = vmatprep.mubr.f32.mxu0 0.0
    %3907 = vmatmul.mubr.f32.gmra.mrb[0].mxu0 %v3569
    %v3908 = vpop.f32.mrb[0].mxu0
    %v3909 = vadd.f32 0.0, %v3908
    %v3910 = vpop.f32.mrb[0].mxu0
    %3911 = vmatprep.mubr.f32.mxu0 0.0
    %3912 = vmatmul.mubr.f32.gmra.mrb[0].mxu0 %v3570
    %v3913 = vpop.f32.mrb[0].mxu0
    %v3914 = vadd.f32 0.0, %v3913
    %v3915 = vpop.f32.mrb[0].mxu0
    %3916 = vmatprep.mubr.f32.mxu0 0.0
    %3917 = vmatmul.mubr.f32.gmra.mrb[0].mxu0 %v3571
    %v3918 = vpop.f32.mrb[0].mxu0
    %v3919 = vadd.f32 0.0, %v3918
    %v3920 = vpop.f32.mrb[0].mxu0
    %3921 = vmatprep.mubr.f32.mxu0 0.0
    %3922 = vmatmul.mubr.f32.gmra.mrb[0].mxu0 %v3572
    %v3923 = vpop.f32.mrb[0].mxu0
    %v3924 = vadd.f32 0.0, %v3923
    %v3925 = vpop.f32.mrb[0].mxu0
    %3926 = vmatprep.mubr.f32.mxu0 0.0
    %3927 = vmatmul.mubr.f32.gmra.mrb[0].mxu0 %v3573
    %v3928 = vpop.f32.mrb[0].mxu0
    %v3929 = vadd.f32 0.0, %v3928
    %v3930 = vpop.f32.mrb[0].mxu0
    %3931 = vmatprep.mubr.f32.mxu0 0.0
    %3932 = vmatmul.mubr.f32.gmra.mrb[0].mxu0 %v3574
    %v3933 = vpop.f32.mrb[0].mxu0
    %v3934 = vadd.f32 0.0, %v3933
    %v3935 = vpop.f32.mrb[0].mxu0
    %3936 = vmatprep.mubr.f32.mxu0 0.0
    %3937 = vmatmul.mubr.f32.gmra.mrb[0].mxu0 %v3575
    %v3938 = vpop.f32.mrb[0].mxu0
    %v3939 = vadd.f32 0.0, %v3938
    %v3940 = vpop.f32.mrb[0].mxu0
    %3941 = vmatprep.mubr.f32.mxu0 0.0
    %3942 = vmatmul.mubr.f32.gmra.mrb[0].mxu0 %v3576
    %v3943 = vpop.f32.mrb[0].mxu0
    %v3944 = vadd.f32 0.0, %v3943
    %v3945 = vpop.f32.mrb[0].mxu0
    %3946 = vmatprep.mubr.f32.mxu0 0.0
    %3947 = vmatmul.mubr.f32.gmra.mrb[0].mxu0 %v3577
    %v3948 = vpop.f32.mrb[0].mxu0
    %v3949 = vadd.f32 0.0, %v3948
    %v3950 = vpop.f32.mrb[0].mxu0
    %3951 = vmatprep.mubr.f32.mxu0 0.0
    %3952 = vmatmul.mubr.f32.gmra.mrb[0].mxu0 %v3578
    %v3953 = vpop.f32.mrb[0].mxu0
    %v3954 = vadd.f32 0.0, %v3953
    %v3955 = vpop.f32.mrb[0].mxu0
    %3956 = vmatprep.mubr.f32.mxu0 0.0
    %3957 = vmatmul.mubr.f32.gmra.mrb[0].mxu0 %v3579
    %v3958 = vpop.f32.mrb[0].mxu0
    %v3959 = vadd.f32 0.0, %v3958
    %v3960 = vpop.f32.mrb[0].mxu0
    %3961 = vmatprep.mubr.f32.mxu0 0.0
    %3962 = vmatmul.mubr.f32.gmra.mrb[0].mxu0 %v3580
    %v3963 = vpop.f32.mrb[0].mxu0
    %v3964 = vadd.f32 0.0, %v3963
    %v3965 = vpop.f32.mrb[0].mxu0
    %3966 = vdwg.mxu0
    %v3967 = vmul.f32 %v3889, %v3790
    %v3968 = vmul.f32 %v3894, %v3791
    %v3969 = vmul.f32 %v3899, %v3792
    %v3970 = vmul.f32 %v3904, %v3793
    %v3971 = vmul.f32 %v3909, %v3794
    %v3972 = vmul.f32 %v3914, %v3795
    %v3973 = vmul.f32 %v3919, %v3796
    %v3974 = vmul.f32 %v3924, %v3797
    %v3975 = vmul.f32 %v3929, %v3798
    %v3976 = vmul.f32 %v3934, %v3799
    %v3977 = vmul.f32 %v3939, %v3800
    %v3978 = vmul.f32 %v3944, %v3801
    %v3979 = vmul.f32 %v3949, %v3802
    %v3980 = vmul.f32 %v3954, %v3803
    %v3981 = vmul.f32 %v3959, %v3804
    %v3982 = vmul.f32 %v3964, %v3805
    %v3983 = vadd.f32 %v3967, %v2826
    %v3984 = vadd.f32 %v3968, %v2826
    %v3985 = vadd.f32 %v3969, %v2826
    %v3986 = vadd.f32 %v3970, %v2826
    %v3987 = vadd.f32 %v3971, %v2826
    %v3988 = vadd.f32 %v3972, %v2826
    %v3989 = vadd.f32 %v3973, %v2826
    %v3990 = vadd.f32 %v3974, %v2826
    %v3991 = vadd.f32 %v3975, %v2826
    %v3992 = vadd.f32 %v3976, %v2826
    %v3993 = vadd.f32 %v3977, %v2826
    %v3994 = vadd.f32 %v3978, %v2826
    %v3995 = vadd.f32 %v3979, %v2826
    %v3996 = vadd.f32 %v3980, %v2826
    %v3997 = vadd.f32 %v3981, %v2826
    %v3998 = vadd.f32 %v3982, %v2826
    %v3999 = vsel %vm168, %v3983, -inf
    %v4000 = vsel %vm168, %v3984, -inf
    %v4001 = vsel %vm168, %v3985, -inf
    %v4002 = vsel %vm168, %v3986, -inf
    %v4003 = vsel %vm168, %v3987, -inf
    %v4004 = vsel %vm168, %v3988, -inf
    %v4005 = vsel %vm168, %v3989, -inf
    %v4006 = vsel %vm168, %v3990, -inf
    %v4007 = vsel %vm168, %v3991, -inf
    %v4008 = vsel %vm168, %v3992, -inf
    %v4009 = vsel %vm168, %v3993, -inf
    %v4010 = vsel %vm168, %v3994, -inf
    %v4011 = vsel %vm168, %v3995, -inf
    %v4012 = vsel %vm168, %v3996, -inf
    %v4013 = vsel %vm168, %v3997, -inf
    %v4014 = vsel %vm168, %v3998, -inf
    %4015 = vmax.xlane.f32.xlu0 %v3999
    %v4016 = vpop.xlane.xlu0 %4015
    %4017 = vmax.xlane.f32.xlu0 %v4000
    %v4018 = vpop.xlane.xlu0 %4017
    %4019 = vmax.xlane.f32.xlu0 %v4001
    %v4020 = vpop.xlane.xlu0 %4019
    %4021 = vmax.xlane.f32.xlu0 %v4002
    %v4022 = vpop.xlane.xlu0 %4021
    %4023 = vmax.xlane.f32.xlu0 %v4003
    %v4024 = vpop.xlane.xlu0 %4023
    %4025 = vmax.xlane.f32.xlu0 %v4004
    %v4026 = vpop.xlane.xlu0 %4025
    %4027 = vmax.xlane.f32.xlu0 %v4005
    %v4028 = vpop.xlane.xlu0 %4027
    %4029 = vmax.xlane.f32.xlu0 %v4006
    %v4030 = vpop.xlane.xlu0 %4029
    %4031 = vmax.xlane.f32.xlu0 %v4007
    %v4032 = vpop.xlane.xlu0 %4031
    %4033 = vmax.xlane.f32.xlu0 %v4008
    %v4034 = vpop.xlane.xlu0 %4033
    %4035 = vmax.xlane.f32.xlu0 %v4009
    %v4036 = vpop.xlane.xlu0 %4035
    %4037 = vmax.xlane.f32.xlu0 %v4010
    %v4038 = vpop.xlane.xlu0 %4037
    %4039 = vmax.xlane.f32.xlu0 %v4011
    %v4040 = vpop.xlane.xlu0 %4039
    %4041 = vmax.xlane.f32.xlu0 %v4012
    %v4042 = vpop.xlane.xlu0 %4041
    %4043 = vmax.xlane.f32.xlu0 %v4013
    %v4044 = vpop.xlane.xlu0 %4043
    %4045 = vmax.xlane.f32.xlu0 %v4014
    %v4046 = vpop.xlane.xlu0 %4045
    %v4047 = vsub.f32 %v3983, %v4016
    %v4048 = vsub.f32 %v3984, %v4018
    %v4049 = vsub.f32 %v3985, %v4020
    %v4050 = vsub.f32 %v3986, %v4022
    %v4051 = vsub.f32 %v3987, %v4024
    %v4052 = vsub.f32 %v3988, %v4026
    %v4053 = vsub.f32 %v3989, %v4028
    %v4054 = vsub.f32 %v3990, %v4030
    %v4055 = vsub.f32 %v3991, %v4032
    %v4056 = vsub.f32 %v3992, %v4034
    %v4057 = vsub.f32 %v3993, %v4036
    %v4058 = vsub.f32 %v3994, %v4038
    %v4059 = vsub.f32 %v3995, %v4040
    %v4060 = vsub.f32 %v3996, %v4042
    %v4061 = vsub.f32 %v3997, %v4044
    %v4062 = vsub.f32 %v3998, %v4046
    %v4063 = vmul.f32 %v4047, 1.442695
    %v4064 = vpow.pop %v4063
    %v4065 = vmul.f32 %v4048, 1.442695
    %v4066 = vpow.pop %v4065
    %v4067 = vmul.f32 %v4049, 1.442695
    %v4068 = vpow.pop %v4067
    %v4069 = vmul.f32 %v4050, 1.442695
    %v4070 = vpow.pop %v4069
    %v4071 = vmul.f32 %v4051, 1.442695
    %v4072 = vpow.pop %v4071
    %v4073 = vmul.f32 %v4052, 1.442695
    %v4074 = vpow.pop %v4073
    %v4075 = vmul.f32 %v4053, 1.442695
    %v4076 = vpow.pop %v4075
    %v4077 = vmul.f32 %v4054, 1.442695
    %v4078 = vpow.pop %v4077
    %v4079 = vmul.f32 %v4055, 1.442695
    %v4080 = vpow.pop %v4079
    %v4081 = vmul.f32 %v4056, 1.442695
    %v4082 = vpow.pop %v4081
    %v4083 = vmul.f32 %v4057, 1.442695
    %v4084 = vpow.pop %v4083
    %v4085 = vmul.f32 %v4058, 1.442695
    %v4086 = vpow.pop %v4085
    %v4087 = vmul.f32 %v4059, 1.442695
    %v4088 = vpow.pop %v4087
    %v4089 = vmul.f32 %v4060, 1.442695
    %v4090 = vpow.pop %v4089
    %v4091 = vmul.f32 %v4061, 1.442695
    %v4092 = vpow.pop %v4091
    %v4093 = vmul.f32 %v4062, 1.442695
    %v4094 = vpow.pop %v4093
    %v4095 = vsel %vm168, %v4064, 0.0
    %v4096 = vsel %vm168, %v4066, 0.0
    %v4097 = vsel %vm168, %v4068, 0.0
    %v4098 = vsel %vm168, %v4070, 0.0
    %v4099 = vsel %vm168, %v4072, 0.0
    %v4100 = vsel %vm168, %v4074, 0.0
    %v4101 = vsel %vm168, %v4076, 0.0
    %v4102 = vsel %vm168, %v4078, 0.0
    %v4103 = vsel %vm168, %v4080, 0.0
    %v4104 = vsel %vm168, %v4082, 0.0
    %v4105 = vsel %vm168, %v4084, 0.0
    %v4106 = vsel %vm168, %v4086, 0.0
    %v4107 = vsel %vm168, %v4088, 0.0
    %v4108 = vsel %vm168, %v4090, 0.0
    %v4109 = vsel %vm168, %v4092, 0.0
    %v4110 = vsel %vm168, %v4094, 0.0
    %4111 = vadd.xlane.f32.xlu0 %v4095
    %v4112 = vpop.xlane.xlu0 %4111
    %4113 = vadd.xlane.f32.xlu0 %v4096
    %v4114 = vpop.xlane.xlu0 %4113
    %4115 = vadd.xlane.f32.xlu0 %v4097
    %v4116 = vpop.xlane.xlu0 %4115
    %4117 = vadd.xlane.f32.xlu0 %v4098
    %v4118 = vpop.xlane.xlu0 %4117
    %4119 = vadd.xlane.f32.xlu0 %v4099
    %v4120 = vpop.xlane.xlu0 %4119
    %4121 = vadd.xlane.f32.xlu0 %v4100
    %v4122 = vpop.xlane.xlu0 %4121
    %4123 = vadd.xlane.f32.xlu0 %v4101
    %v4124 = vpop.xlane.xlu0 %4123
    %4125 = vadd.xlane.f32.xlu0 %v4102
    %v4126 = vpop.xlane.xlu0 %4125
    %4127 = vadd.xlane.f32.xlu0 %v4103
    %v4128 = vpop.xlane.xlu0 %4127
    %4129 = vadd.xlane.f32.xlu0 %v4104
    %v4130 = vpop.xlane.xlu0 %4129
    %4131 = vadd.xlane.f32.xlu0 %v4105
    %v4132 = vpop.xlane.xlu0 %4131
    %4133 = vadd.xlane.f32.xlu0 %v4106
    %v4134 = vpop.xlane.xlu0 %4133
    %4135 = vadd.xlane.f32.xlu0 %v4107
    %v4136 = vpop.xlane.xlu0 %4135
    %4137 = vadd.xlane.f32.xlu0 %v4108
    %v4138 = vpop.xlane.xlu0 %4137
    %4139 = vadd.xlane.f32.xlu0 %v4109
    %v4140 = vpop.xlane.xlu0 %4139
    %4141 = vadd.xlane.f32.xlu0 %v4110
    %v4142 = vpop.xlane.xlu0 %4141
    %v4143 = vlog2.pop %v4112
    %v4144 = vmul.f32 %v4143, 0.6931472
    %v4145 = vlog2.pop %v4114
    %v4146 = vmul.f32 %v4145, 0.6931472
    %v4147 = vlog2.pop %v4116
    %v4148 = vmul.f32 %v4147, 0.6931472
    %v4149 = vlog2.pop %v4118
    %v4150 = vmul.f32 %v4149, 0.6931472
    %v4151 = vlog2.pop %v4120
    %v4152 = vmul.f32 %v4151, 0.6931472
    %v4153 = vlog2.pop %v4122
    %v4154 = vmul.f32 %v4153, 0.6931472
    %v4155 = vlog2.pop %v4124
    %v4156 = vmul.f32 %v4155, 0.6931472
    %v4157 = vlog2.pop %v4126
    %v4158 = vmul.f32 %v4157, 0.6931472
    %v4159 = vlog2.pop %v4128
    %v4160 = vmul.f32 %v4159, 0.6931472
    %v4161 = vlog2.pop %v4130
    %v4162 = vmul.f32 %v4161, 0.6931472
    %v4163 = vlog2.pop %v4132
    %v4164 = vmul.f32 %v4163, 0.6931472
    %v4165 = vlog2.pop %v4134
    %v4166 = vmul.f32 %v4165, 0.6931472
    %v4167 = vlog2.pop %v4136
    %v4168 = vmul.f32 %v4167, 0.6931472
    %v4169 = vlog2.pop %v4138
    %v4170 = vmul.f32 %v4169, 0.6931472
    %v4171 = vlog2.pop %v4140
    %v4172 = vmul.f32 %v4171, 0.6931472
    %v4173 = vlog2.pop %v4142
    %v4174 = vmul.f32 %v4173, 0.6931472
    %v4175 = vsub.f32 %v4047, %v4144
    %v4176 = vsub.f32 %v4048, %v4146
    %v4177 = vsub.f32 %v4049, %v4148
    %v4178 = vsub.f32 %v4050, %v4150
    %v4179 = vsub.f32 %v4051, %v4152
    %v4180 = vsub.f32 %v4052, %v4154
    %v4181 = vsub.f32 %v4053, %v4156
    %v4182 = vsub.f32 %v4054, %v4158
    %v4183 = vsub.f32 %v4055, %v4160
    %v4184 = vsub.f32 %v4056, %v4162
    %v4185 = vsub.f32 %v4057, %v4164
    %v4186 = vsub.f32 %v4058, %v4166
    %v4187 = vsub.f32 %v4059, %v4168
    %v4188 = vsub.f32 %v4060, %v4170
    %v4189 = vsub.f32 %v4061, %v4172
    %v4190 = vsub.f32 %v4062, %v4174
    %v4191 = vsel %vm168, %v4175, 0.0
    %v4192 = vsel %vm168, %v4176, 0.0
    %v4193 = vsel %vm168, %v4177, 0.0
    %v4194 = vsel %vm168, %v4178, 0.0
    %v4195 = vsel %vm168, %v4179, 0.0
    %v4196 = vsel %vm168, %v4180, 0.0
    %v4197 = vsel %vm168, %v4181, 0.0
    %v4198 = vsel %vm168, %v4182, 0.0
    %v4199 = vsel %vm168, %v4183, 0.0
    %v4200 = vsel %vm168, %v4184, 0.0
    %v4201 = vsel %vm168, %v4185, 0.0
    %v4202 = vsel %vm168, %v4186, 0.0
    %v4203 = vsel %vm168, %v4187, 0.0
    %v4204 = vsel %vm168, %v4188, 0.0
    %v4205 = vsel %vm168, %v4189, 0.0
    %v4206 = vsel %vm168, %v4190, 0.0
    %4207 = vst [vmem:[#allocation10] sm:$0xff] %v4191
    %4208 = vst [vmem:[#allocation10 + $0x8] sm:$0xff] %v4192
    %4209 = vst [vmem:[#allocation10 + $0x10] sm:$0xff] %v4193
    %4210 = vst [vmem:[#allocation10 + $0x18] sm:$0xff] %v4194
    %4211 = vst [vmem:[#allocation10 + $0x20] sm:$0xff] %v4195
    %4212 = vst [vmem:[#allocation10 + $0x28] sm:$0xff] %v4196
    %4213 = vst [vmem:[#allocation10 + $0x30] sm:$0xff] %v4197
    %4214 = vst [vmem:[#allocation10 + $0x38] sm:$0xff] %v4198
    %4215 = vst [vmem:[#allocation10 + $0x40] sm:$0xff] %v4199
    %4216 = vst [vmem:[#allocation10 + $0x48] sm:$0xff] %v4200
    %4217 = vst [vmem:[#allocation10 + $0x50] sm:$0xff] %v4201
    %4218 = vst [vmem:[#allocation10 + $0x58] sm:$0xff] %v4202
    %4219 = vst [vmem:[#allocation10 + $0x60] sm:$0xff] %v4203
    %4220 = vst [vmem:[#allocation10 + $0x68] sm:$0xff] %v4204
    %4221 = vst [vmem:[#allocation10 + $0x70] sm:$0xff] %v4205
    %4222 = vst [vmem:[#allocation10 + $0x78] sm:$0xff] %v4206
    // Predicated region
    $region50: #{tpu_custom_call.1} parent=1 // pred_check
      _
    $region51: #{tpu_custom_call.1} parent=1 // pred_check_branch
      %4224 = sbr.rel (0) target = $region53
    $region52: #{tpu_custom_call.1} parent=1 // pred_region
      %s4226 = ssub.s32 2048, 2048
      %4227 = vsyncadd [#allocation4], %s4226
      %s4228 = sshll.u32 [#allocation10], 4
      %s4229 = int_to_ptr.vmem [resolvable:$true] %s4228
      %4234 = dma.vmem_to_hbm [thread:$0]  %s4229, 2048, %s8, [#allocation4], 128, 128, 8
    $region53: #{tpu_custom_call.1} parent=1 // pred_fallthru
      _
    // Predicated region
    $region54: #{tpu_custom_call.1} parent=1 // pred_check
      _
    $region55: #{tpu_custom_call.1} parent=1 // pred_check_branch
      %4236 = sbr.rel (0) target = $region57
    $region56: #{tpu_custom_call.1} parent=1 // pred_region
      %4237 = dma.done [#allocation4], 2048
    $region57: #{tpu_custom_call.1} parent=1 // pred_fallthru
      _
    %4238 = vsyncpa [#allocation3], 1
    %4239 = vsyncpa [#allocation6], 1
    %4240 = vsyncpa [#allocation9], 1
    %4241 = vsyncpa [#allocation4], 1

</llo_original>
